<compile_context>
chip_gen: v6e
topology: v6e:2x2x1
jax: 0.10.0
libtpu: 0.0.40
codegen_flags: <defaults>
</compile_context>

<pallas_src>
import jax
import jax.numpy as jnp
from jax.experimental import pallas as pl
from jax.experimental.pallas import tpu as pltpu

IN_FEATURES = 3 * 64 * 64   # 12288
OUT_FEATURES = 64


def _linear_kernel(x_ref, wt_ref, b_ref, o_ref):
    # x_ref : (TB, K)   activation tile
    # wt_ref: (K, OUT)  pre-transposed weight -> canonical MXU (M,K) x (K,N)
    # b_ref : (1, OUT)
    acc = jnp.dot(x_ref[...], wt_ref[...], preferred_element_type=jnp.float32)
    o_ref[...] = (acc + b_ref[...]).astype(o_ref.dtype)


def _generation_defaults():
    """Return (batch_tile_cap, vmem_limit_bytes) sized per TPU generation."""
    kind = ""
    try:
        kind = jax.devices()[0].device_kind.lower()
    except Exception:
        pass
    if "v5" in kind or "v6" in kind:
        # 128 MiB physical VMEM: 2x24 MiB x-buffers + 2x3 MiB weight ~= 54 MiB.
        return 512, 80 * 1024 * 1024
    # v7x (64 MiB physical VMEM) or unknown generation: conservative settings
    # that fit every supported chip (2x12 MiB x + 2x3 MiB weight ~= 30 MiB).
    return 256, 40 * 1024 * 1024


def prepare_params(weight, bias):
    """One-time parameter relayout, outside the hot path.

    weight: (OUT, IN) PyTorch Linear layout -> (IN, OUT) so the kernel feeds
    the MXU a canonical (K, N) RHS with no in-kernel transpose/relayout.
    (For small-batch serving, optionally cast w_t to bf16 here.)
    """
    w_t = jnp.transpose(jnp.asarray(weight))           # (IN, OUT)
    b2d = jnp.asarray(bias).reshape(1, OUT_FEATURES)   # (1, OUT)
    return w_t, b2d


def linear_classifier2_forward(x, w_t, b2d):
    """x: (B, 3, 64, 64); w_t: (IN, OUT) pre-transposed weight; b2d: (1, OUT)."""
    B = x.shape[0]
    x_flat = x.reshape(B, IN_FEATURES)   # contiguous NCHW flatten (no real copy)

    tb_cap, vmem_limit = _generation_defaults()
    # Batch tile: multiple of 8 (sublane rule), no bigger than needed for
    # small batches, capped per generation.  Ragged last block is masked.
    TB = min(tb_cap, max(8, ((B + 7) // 8) * 8))
    n_b = pl.cdiv(B, TB)

    cost = pl.CostEstimate(
        flops=2 * B * IN_FEATURES * OUT_FEATURES,
        transcendentals=0,
        bytes_accessed=(B * IN_FEATURES * 4
                        + IN_FEATURES * OUT_FEATURES * 4
                        + B * OUT_FEATURES * 4),
    )

    return pl.pallas_call(
        _linear_kernel,
        out_shape=jax.ShapeDtypeStruct((B, OUT_FEATURES), x.dtype),
        grid_spec=pltpu.PrefetchScalarGridSpec(
            num_scalar_prefetch=0,
            grid=(n_b,),
            in_specs=[
                # Per-tile activations: (TB, full K) -- the streamed operand.
                pl.BlockSpec((TB, IN_FEATURES), lambda b: (b, 0)),
                # Full pre-transposed weight, constant index -> fetched once,
                # stays VMEM resident across the whole batch grid.
                pl.BlockSpec((IN_FEATURES, OUT_FEATURES), lambda b: (0, 0)),
                # Bias row, constant index.
                pl.BlockSpec((1, OUT_FEATURES), lambda b: (0, 0)),
            ],
            out_specs=pl.BlockSpec((TB, OUT_FEATURES), lambda b: (b, 0)),
        ),
        compiler_params=pltpu.CompilerParams(
            # Batch tiles are independent -> shardable across v7x's 2 TCs.
            dimension_semantics=("parallel",),
            vmem_limit_bytes=vmem_limit,
        ),
        cost_estimate=cost,
    )(x_flat, w_t, b2d)


if __name__ == "__main__":
    key = jax.random.PRNGKey(0)
    kx, kw, kb = jax.random.split(key, 3)

    B = 2
    x = jax.random.normal(kx, (B, 3, 64, 64), dtype=jnp.float32)

    # Deterministic synthetic parameters (PyTorch Linear-style uniform init),
    # kept in PyTorch (OUT, IN) layout as the "checkpoint" format.
    bound = 1.0 / jnp.sqrt(jnp.float32(IN_FEATURES))
    weight = jax.random.uniform(
        kw, (OUT_FEATURES, IN_FEATURES), dtype=jnp.float32,
        minval=-bound, maxval=bound,
    )
    bias = jax.random.uniform(
        kb, (OUT_FEATURES,), dtype=jnp.float32, minval=-bound, maxval=bound,
    )

    # One-time relayout at parameter-setup time (not per call).
    w_t, b2d = prepare_params(weight, bias)

    y = linear_classifier2_forward(x, w_t, b2d)
    y = jax.block_until_ready(y)

    # Reference check in plain JAX against the original PyTorch semantics.
    y_ref = x.reshape(B, -1) @ weight.T + bias
    assert y.shape == (B, OUT_FEATURES)
    assert jnp.allclose(y, y_ref, atol=1e-4, rtol=1e-4)

    print("KERNEL_OK")
</pallas_src>

<mosaic_0001>
module attributes {stable_mosaic.version = 11 : i64} {
  func.func @_linear_kernel(%arg0: i32, %arg1: memref<8x12288xf32, #tpu.memory_space<vmem>>, %arg2: memref<12288x64xf32, #tpu.memory_space<vmem>>, %arg3: memref<1x64xf32, #tpu.memory_space<vmem>>, %arg4: memref<8x64xf32, #tpu.memory_space<vmem>>) attributes {dimension_semantics = [#tpu.dimension_semantics<parallel>], iteration_bounds = array<i64: 1>, scalar_prefetch = 0 : i64, scratch_operands = 0 : i64, tpu.core_type = #tpu.core_type<tc>, window_params = [{transform_indices = @transform_0, window_bounds = array<i64: 8, 12288>}, {pipeline_mode = #tpu.pipeline_mode<synchronous>, transform_indices = @transform_1, window_bounds = array<i64: 12288, 64>}, {pipeline_mode = #tpu.pipeline_mode<synchronous>, transform_indices = @transform_2, window_bounds = array<i64: 1, 64>}, {transform_indices = @transform_3, window_bounds = array<i64: 8, 64>}]} {
    %c0 = arith.constant 0 : index
    %c0_0 = arith.constant 0 : index
    %0 = vector.load %arg1[%c0, %c0_0] : memref<8x12288xf32, #tpu.memory_space<vmem>>, vector<8x12288xf32>
    %c0_1 = arith.constant 0 : index
    %c0_2 = arith.constant 0 : index
    %1 = vector.load %arg2[%c0_1, %c0_2] : memref<12288x64xf32, #tpu.memory_space<vmem>>, vector<12288x64xf32>
    %cst = arith.constant dense<0.000000e+00> : vector<8x64xf32>
    %2 = tpu.matmul %0, %1, %cst {dimension_numbers = #tpu.dot_dimension_numbers<[1], [0], [0], [1], [0, 0, 1, 1], [], []>} : vector<8x12288xf32>, vector<12288x64xf32>, vector<8x64xf32> -> vector<8x64xf32>
    %c0_3 = arith.constant 0 : index
    %c0_4 = arith.constant 0 : index
    %3 = vector.load %arg3[%c0_3, %c0_4] : memref<1x64xf32, #tpu.memory_space<vmem>>, vector<1x64xf32>
    %4 = vector.broadcast %3 : vector<1x64xf32> to vector<8x64xf32>
    %5 = arith.addf %2, %4 : vector<8x64xf32>
    %c0_5 = arith.constant 0 : index
    %c0_6 = arith.constant 0 : index
    %6 = vector.load %arg4[%c0_5, %c0_6] : memref<8x64xf32, #tpu.memory_space<vmem>>, vector<8x64xf32>
    tpu.vector_store %arg4[%c0_5, %c0_6], %5 {strides = array<i32>} : memref<8x64xf32, #tpu.memory_space<vmem>>, vector<8x64xf32>,
    return
  }
  func.func @transform_0(%arg0: i32) -> (i32, i32) {
    %c0_i32 = arith.constant 0 : i32
    %c0_i32_0 = arith.constant 0 : i32
    return %arg0, %c0_i32 : i32, i32
  }
  func.func @transform_1(%arg0: i32) -> (i32, i32) {
    %c0_i32 = arith.constant 0 : i32
    %c0_i32_0 = arith.constant 0 : i32
    %c0_i32_1 = arith.constant 0 : i32
    return %c0_i32, %c0_i32_0 : i32, i32
  }
  func.func @transform_2(%arg0: i32) -> (i32, i32) {
    %c0_i32 = arith.constant 0 : i32
    %c0_i32_0 = arith.constant 0 : i32
    %c0_i32_1 = arith.constant 0 : i32
    return %c0_i32, %c0_i32_0 : i32, i32
  }
  func.func @transform_3(%arg0: i32) -> (i32, i32) {
    %c0_i32 = arith.constant 0 : i32
    %c0_i32_0 = arith.constant 0 : i32
    return %arg0, %c0_i32 : i32, i32
  }
}

</mosaic_0001>

<llo_original>
// kernel: tpu_custom_call.1
$region0: #{tpu_custom_call.1}
  #allocation0 [shape = 'u32[]', space=smem, size = 0x4, offset = 0x4, fixed_abs, tag = 'smem constant byte address 0x4 - core index']
  #allocation1 [shape = 'u32[144,128]{1,0:T(1,128)}', space=vmem, size = 0x12000, scoped, tag = 'internal scratch']
  %s0 = inlined_call_operand.vmem [shape: f32[2,12288], index: 0, kind: input, shape index: {}]
  %s1 = inlined_call_operand.vmem [shape: f32[12288,64], index: 1, kind: input, shape index: {}]
  %s2 = inlined_call_operand.vmem [shape: f32[1,64], index: 2, kind: input, shape index: {}]
  %s3 = inlined_call_operand.hbm [shape: f32[2,64], index: 3, kind: output, shape index: {}]
  %s4 = sld [smem:[#allocation0]]
  $region22: #{tpu_custom_call.1} parent=0
    _
  %s6 = ssub.s32 1, %s4
  %s7 = scalar_select 0, %s6, %s4
  $region1: #{tpu_custom_call.1} parent=0
    #allocation2 [shape = 'u8[4096]{0}', space=vmem, size = 0x1000, scoped, tag = 'output window, operand 0, single buffered']
    #allocation3 [shape = 's32[1]{0}', space=sflag, size = 0x4, scoped, tag = 'scoped memory for tpu_custom_call.1']
    %8 = vsyncpa [#allocation3], 0
    // Predicated region
    $region2: #{tpu_custom_call.1} parent=1 // pred_check
      _
    $region3: #{tpu_custom_call.1} parent=1 // pred_check_branch
      %10 = sbr.rel (0) target = $region5
    $region4: #{tpu_custom_call.1} parent=1 // pred_region
      _
    $region5: #{tpu_custom_call.1} parent=1 // pred_fallthru
      _
    // Predicated region
    $region6: #{tpu_custom_call.1} parent=1 // pred_check
      _
    $region7: #{tpu_custom_call.1} parent=1 // pred_check_branch
      %12 = sbr.rel (0) target = $region9
    $region8: #{tpu_custom_call.1} parent=1 // pred_region
      _
    $region9: #{tpu_custom_call.1} parent=1 // pred_fallthru
      _
    // Predicated region
    $region10: #{tpu_custom_call.1} parent=1 // pred_check
      _
    $region11: #{tpu_custom_call.1} parent=1 // pred_check_branch
      %14 = sbr.rel (0) target = $region13
    $region12: #{tpu_custom_call.1} parent=1 // pred_region
      _
    $region13: #{tpu_custom_call.1} parent=1 // pred_fallthru
      _
    %v15 = vld [vmem:[%s0] sm:$0xff]
    %v16 = vld [vmem:[%s0 + $0x8] sm:$0xff]
    %v17 = vld [vmem:[%s0 + $0x10] sm:$0xff]
    %v18 = vld [vmem:[%s0 + $0x18] sm:$0xff]
    %v19 = vld [vmem:[%s0 + $0x20] sm:$0xff]
    %v20 = vld [vmem:[%s0 + $0x28] sm:$0xff]
    %v21 = vld [vmem:[%s0 + $0x30] sm:$0xff]
    %v22 = vld [vmem:[%s0 + $0x38] sm:$0xff]
    %v23 = vld [vmem:[%s0 + $0x40] sm:$0xff]
    %v24 = vld [vmem:[%s0 + $0x48] sm:$0xff]
    %v25 = vld [vmem:[%s0 + $0x50] sm:$0xff]
    %v26 = vld [vmem:[%s0 + $0x58] sm:$0xff]
    %v27 = vld [vmem:[%s0 + $0x60] sm:$0xff]
    %v28 = vld [vmem:[%s0 + $0x68] sm:$0xff]
    %v29 = vld [vmem:[%s0 + $0x70] sm:$0xff]
    %v30 = vld [vmem:[%s0 + $0x78] sm:$0xff]
    %v31 = vld [vmem:[%s0 + $0x80] sm:$0xff]
    %v32 = vld [vmem:[%s0 + $0x88] sm:$0xff]
    %v33 = vld [vmem:[%s0 + $0x90] sm:$0xff]
    %v34 = vld [vmem:[%s0 + $0x98] sm:$0xff]
    %v35 = vld [vmem:[%s0 + $0xa0] sm:$0xff]
    %v36 = vld [vmem:[%s0 + $0xa8] sm:$0xff]
    %v37 = vld [vmem:[%s0 + $0xb0] sm:$0xff]
    %v38 = vld [vmem:[%s0 + $0xb8] sm:$0xff]
    %v39 = vld [vmem:[%s0 + $0xc0] sm:$0xff]
    %v40 = vld [vmem:[%s0 + $0xc8] sm:$0xff]
    %v41 = vld [vmem:[%s0 + $0xd0] sm:$0xff]
    %v42 = vld [vmem:[%s0 + $0xd8] sm:$0xff]
    %v43 = vld [vmem:[%s0 + $0xe0] sm:$0xff]
    %v44 = vld [vmem:[%s0 + $0xe8] sm:$0xff]
    %v45 = vld [vmem:[%s0 + $0xf0] sm:$0xff]
    %v46 = vld [vmem:[%s0 + $0xf8] sm:$0xff]
    %v47 = vld [vmem:[%s0 + $0x100] sm:$0xff]
    %v48 = vld [vmem:[%s0 + $0x108] sm:$0xff]
    %v49 = vld [vmem:[%s0 + $0x110] sm:$0xff]
    %v50 = vld [vmem:[%s0 + $0x118] sm:$0xff]
    %v51 = vld [vmem:[%s0 + $0x120] sm:$0xff]
    %v52 = vld [vmem:[%s0 + $0x128] sm:$0xff]
    %v53 = vld [vmem:[%s0 + $0x130] sm:$0xff]
    %v54 = vld [vmem:[%s0 + $0x138] sm:$0xff]
    %v55 = vld [vmem:[%s0 + $0x140] sm:$0xff]
    %v56 = vld [vmem:[%s0 + $0x148] sm:$0xff]
    %v57 = vld [vmem:[%s0 + $0x150] sm:$0xff]
    %v58 = vld [vmem:[%s0 + $0x158] sm:$0xff]
    %v59 = vld [vmem:[%s0 + $0x160] sm:$0xff]
    %v60 = vld [vmem:[%s0 + $0x168] sm:$0xff]
    %v61 = vld [vmem:[%s0 + $0x170] sm:$0xff]
    %v62 = vld [vmem:[%s0 + $0x178] sm:$0xff]
    %v63 = vld [vmem:[%s0 + $0x180] sm:$0xff]
    %v64 = vld [vmem:[%s0 + $0x188] sm:$0xff]
    %v65 = vld [vmem:[%s0 + $0x190] sm:$0xff]
    %v66 = vld [vmem:[%s0 + $0x198] sm:$0xff]
    %v67 = vld [vmem:[%s0 + $0x1a0] sm:$0xff]
    %v68 = vld [vmem:[%s0 + $0x1a8] sm:$0xff]
    %v69 = vld [vmem:[%s0 + $0x1b0] sm:$0xff]
    %v70 = vld [vmem:[%s0 + $0x1b8] sm:$0xff]
    %v71 = vld [vmem:[%s0 + $0x1c0] sm:$0xff]
    %v72 = vld [vmem:[%s0 + $0x1c8] sm:$0xff]
    %v73 = vld [vmem:[%s0 + $0x1d0] sm:$0xff]
    %v74 = vld [vmem:[%s0 + $0x1d8] sm:$0xff]
    %v75 = vld [vmem:[%s0 + $0x1e0] sm:$0xff]
    %v76 = vld [vmem:[%s0 + $0x1e8] sm:$0xff]
    %v77 = vld [vmem:[%s0 + $0x1f0] sm:$0xff]
    %v78 = vld [vmem:[%s0 + $0x1f8] sm:$0xff]
    %v79 = vld [vmem:[%s0 + $0x200] sm:$0xff]
    %v80 = vld [vmem:[%s0 + $0x208] sm:$0xff]
    %v81 = vld [vmem:[%s0 + $0x210] sm:$0xff]
    %v82 = vld [vmem:[%s0 + $0x218] sm:$0xff]
    %v83 = vld [vmem:[%s0 + $0x220] sm:$0xff]
    %v84 = vld [vmem:[%s0 + $0x228] sm:$0xff]
    %v85 = vld [vmem:[%s0 + $0x230] sm:$0xff]
    %v86 = vld [vmem:[%s0 + $0x238] sm:$0xff]
    %v87 = vld [vmem:[%s0 + $0x240] sm:$0xff]
    %v88 = vld [vmem:[%s0 + $0x248] sm:$0xff]
    %v89 = vld [vmem:[%s0 + $0x250] sm:$0xff]
    %v90 = vld [vmem:[%s0 + $0x258] sm:$0xff]
    %v91 = vld [vmem:[%s0 + $0x260] sm:$0xff]
    %v92 = vld [vmem:[%s0 + $0x268] sm:$0xff]
    %v93 = vld [vmem:[%s0 + $0x270] sm:$0xff]
    %v94 = vld [vmem:[%s0 + $0x278] sm:$0xff]
    %v95 = vld [vmem:[%s0 + $0x280] sm:$0xff]
    %v96 = vld [vmem:[%s0 + $0x288] sm:$0xff]
    %v97 = vld [vmem:[%s0 + $0x290] sm:$0xff]
    %v98 = vld [vmem:[%s0 + $0x298] sm:$0xff]
    %v99 = vld [vmem:[%s0 + $0x2a0] sm:$0xff]
    %v100 = vld [vmem:[%s0 + $0x2a8] sm:$0xff]
    %v101 = vld [vmem:[%s0 + $0x2b0] sm:$0xff]
    %v102 = vld [vmem:[%s0 + $0x2b8] sm:$0xff]
    %v103 = vld [vmem:[%s0 + $0x2c0] sm:$0xff]
    %v104 = vld [vmem:[%s0 + $0x2c8] sm:$0xff]
    %v105 = vld [vmem:[%s0 + $0x2d0] sm:$0xff]
    %v106 = vld [vmem:[%s0 + $0x2d8] sm:$0xff]
    %v107 = vld [vmem:[%s0 + $0x2e0] sm:$0xff]
    %v108 = vld [vmem:[%s0 + $0x2e8] sm:$0xff]
    %v109 = vld [vmem:[%s0 + $0x2f0] sm:$0xff]
    %v110 = vld [vmem:[%s0 + $0x2f8] sm:$0xff]
    %v111 = vld [vmem:[%s1] sm:$0xff]
    %v112 = vld [vmem:[%s1 + $0x8] sm:$0xff]
    %v113 = vld [vmem:[%s1 + $0x10] sm:$0xff]
    %v114 = vld [vmem:[%s1 + $0x18] sm:$0xff]
    %v115 = vld [vmem:[%s1 + $0x20] sm:$0xff]
    %v116 = vld [vmem:[%s1 + $0x28] sm:$0xff]
    %v117 = vld [vmem:[%s1 + $0x30] sm:$0xff]
    %v118 = vld [vmem:[%s1 + $0x38] sm:$0xff]
    %v119 = vld [vmem:[%s1 + $0x40] sm:$0xff]
    %v120 = vld [vmem:[%s1 + $0x48] sm:$0xff]
    %v121 = vld [vmem:[%s1 + $0x50] sm:$0xff]
    %v122 = vld [vmem:[%s1 + $0x58] sm:$0xff]
    %v123 = vld [vmem:[%s1 + $0x60] sm:$0xff]
    %v124 = vld [vmem:[%s1 + $0x68] sm:$0xff]
    %v125 = vld [vmem:[%s1 + $0x70] sm:$0xff]
    %v126 = vld [vmem:[%s1 + $0x78] sm:$0xff]
    %v127 = vld [vmem:[%s1 + $0x80] sm:$0xff]
    %v128 = vld [vmem:[%s1 + $0x88] sm:$0xff]
    %v129 = vld [vmem:[%s1 + $0x90] sm:$0xff]
    %v130 = vld [vmem:[%s1 + $0x98] sm:$0xff]
    %v131 = vld [vmem:[%s1 + $0xa0] sm:$0xff]
    %v132 = vld [vmem:[%s1 + $0xa8] sm:$0xff]
    %v133 = vld [vmem:[%s1 + $0xb0] sm:$0xff]
    %v134 = vld [vmem:[%s1 + $0xb8] sm:$0xff]
    %v135 = vld [vmem:[%s1 + $0xc0] sm:$0xff]
    %v136 = vld [vmem:[%s1 + $0xc8] sm:$0xff]
    %v137 = vld [vmem:[%s1 + $0xd0] sm:$0xff]
    %v138 = vld [vmem:[%s1 + $0xd8] sm:$0xff]
    %v139 = vld [vmem:[%s1 + $0xe0] sm:$0xff]
    %v140 = vld [vmem:[%s1 + $0xe8] sm:$0xff]
    %v141 = vld [vmem:[%s1 + $0xf0] sm:$0xff]
    %v142 = vld [vmem:[%s1 + $0xf8] sm:$0xff]
    %v143 = vld [vmem:[%s1 + $0x100] sm:$0xff]
    %v144 = vld [vmem:[%s1 + $0x108] sm:$0xff]
    %v145 = vld [vmem:[%s1 + $0x110] sm:$0xff]
    %v146 = vld [vmem:[%s1 + $0x118] sm:$0xff]
    %v147 = vld [vmem:[%s1 + $0x120] sm:$0xff]
    %v148 = vld [vmem:[%s1 + $0x128] sm:$0xff]
    %v149 = vld [vmem:[%s1 + $0x130] sm:$0xff]
    %v150 = vld [vmem:[%s1 + $0x138] sm:$0xff]
    %v151 = vld [vmem:[%s1 + $0x140] sm:$0xff]
    %v152 = vld [vmem:[%s1 + $0x148] sm:$0xff]
    %v153 = vld [vmem:[%s1 + $0x150] sm:$0xff]
    %v154 = vld [vmem:[%s1 + $0x158] sm:$0xff]
    %v155 = vld [vmem:[%s1 + $0x160] sm:$0xff]
    %v156 = vld [vmem:[%s1 + $0x168] sm:$0xff]
    %v157 = vld [vmem:[%s1 + $0x170] sm:$0xff]
    %v158 = vld [vmem:[%s1 + $0x178] sm:$0xff]
    %v159 = vld [vmem:[%s1 + $0x180] sm:$0xff]
    %v160 = vld [vmem:[%s1 + $0x188] sm:$0xff]
    %v161 = vld [vmem:[%s1 + $0x190] sm:$0xff]
    %v162 = vld [vmem:[%s1 + $0x198] sm:$0xff]
    %v163 = vld [vmem:[%s1 + $0x1a0] sm:$0xff]
    %v164 = vld [vmem:[%s1 + $0x1a8] sm:$0xff]
    %v165 = vld [vmem:[%s1 + $0x1b0] sm:$0xff]
    %v166 = vld [vmem:[%s1 + $0x1b8] sm:$0xff]
    %v167 = vld [vmem:[%s1 + $0x1c0] sm:$0xff]
    %v168 = vld [vmem:[%s1 + $0x1c8] sm:$0xff]
    %v169 = vld [vmem:[%s1 + $0x1d0] sm:$0xff]
    %v170 = vld [vmem:[%s1 + $0x1d8] sm:$0xff]
    %v171 = vld [vmem:[%s1 + $0x1e0] sm:$0xff]
    %v172 = vld [vmem:[%s1 + $0x1e8] sm:$0xff]
    %v173 = vld [vmem:[%s1 + $0x1f0] sm:$0xff]
    %v174 = vld [vmem:[%s1 + $0x1f8] sm:$0xff]
    %v175 = vld [vmem:[%s1 + $0x200] sm:$0xff]
    %v176 = vld [vmem:[%s1 + $0x208] sm:$0xff]
    %v177 = vld [vmem:[%s1 + $0x210] sm:$0xff]
    %v178 = vld [vmem:[%s1 + $0x218] sm:$0xff]
    %v179 = vld [vmem:[%s1 + $0x220] sm:$0xff]
    %v180 = vld [vmem:[%s1 + $0x228] sm:$0xff]
    %v181 = vld [vmem:[%s1 + $0x230] sm:$0xff]
    %v182 = vld [vmem:[%s1 + $0x238] sm:$0xff]
    %v183 = vld [vmem:[%s1 + $0x240] sm:$0xff]
    %v184 = vld [vmem:[%s1 + $0x248] sm:$0xff]
    %v185 = vld [vmem:[%s1 + $0x250] sm:$0xff]
    %v186 = vld [vmem:[%s1 + $0x258] sm:$0xff]
    %v187 = vld [vmem:[%s1 + $0x260] sm:$0xff]
    %v188 = vld [vmem:[%s1 + $0x268] sm:$0xff]
    %v189 = vld [vmem:[%s1 + $0x270] sm:$0xff]
    %v190 = vld [vmem:[%s1 + $0x278] sm:$0xff]
    %v191 = vld [vmem:[%s1 + $0x280] sm:$0xff]
    %v192 = vld [vmem:[%s1 + $0x288] sm:$0xff]
    %v193 = vld [vmem:[%s1 + $0x290] sm:$0xff]
    %v194 = vld [vmem:[%s1 + $0x298] sm:$0xff]
    %v195 = vld [vmem:[%s1 + $0x2a0] sm:$0xff]
    %v196 = vld [vmem:[%s1 + $0x2a8] sm:$0xff]
    %v197 = vld [vmem:[%s1 + $0x2b0] sm:$0xff]
    %v198 = vld [vmem:[%s1 + $0x2b8] sm:$0xff]
    %v199 = vld [vmem:[%s1 + $0x2c0] sm:$0xff]
    %v200 = vld [vmem:[%s1 + $0x2c8] sm:$0xff]
    %v201 = vld [vmem:[%s1 + $0x2d0] sm:$0xff]
    %v202 = vld [vmem:[%s1 + $0x2d8] sm:$0xff]
    %v203 = vld [vmem:[%s1 + $0x2e0] sm:$0xff]
    %v204 = vld [vmem:[%s1 + $0x2e8] sm:$0xff]
    %v205 = vld [vmem:[%s1 + $0x2f0] sm:$0xff]
    %v206 = vld [vmem:[%s1 + $0x2f8] sm:$0xff]
    %v207 = vld [vmem:[%s1 + $0x300] sm:$0xff]
    %v208 = vld [vmem:[%s1 + $0x308] sm:$0xff]
    %v209 = vld [vmem:[%s1 + $0x310] sm:$0xff]
    %v210 = vld [vmem:[%s1 + $0x318] sm:$0xff]
    %v211 = vld [vmem:[%s1 + $0x320] sm:$0xff]
    %v212 = vld [vmem:[%s1 + $0x328] sm:$0xff]
    %v213 = vld [vmem:[%s1 + $0x330] sm:$0xff]
    %v214 = vld [vmem:[%s1 + $0x338] sm:$0xff]
    %v215 = vld [vmem:[%s1 + $0x340] sm:$0xff]
    %v216 = vld [vmem:[%s1 + $0x348] sm:$0xff]
    %v217 = vld [vmem:[%s1 + $0x350] sm:$0xff]
    %v218 = vld [vmem:[%s1 + $0x358] sm:$0xff]
    %v219 = vld [vmem:[%s1 + $0x360] sm:$0xff]
    %v220 = vld [vmem:[%s1 + $0x368] sm:$0xff]
    %v221 = vld [vmem:[%s1 + $0x370] sm:$0xff]
    %v222 = vld [vmem:[%s1 + $0x378] sm:$0xff]
    %v223 = vld [vmem:[%s1 + $0x380] sm:$0xff]
    %v224 = vld [vmem:[%s1 + $0x388] sm:$0xff]
    %v225 = vld [vmem:[%s1 + $0x390] sm:$0xff]
    %v226 = vld [vmem:[%s1 + $0x398] sm:$0xff]
    %v227 = vld [vmem:[%s1 + $0x3a0] sm:$0xff]
    %v228 = vld [vmem:[%s1 + $0x3a8] sm:$0xff]
    %v229 = vld [vmem:[%s1 + $0x3b0] sm:$0xff]
    %v230 = vld [vmem:[%s1 + $0x3b8] sm:$0xff]
    %v231 = vld [vmem:[%s1 + $0x3c0] sm:$0xff]
    %v232 = vld [vmem:[%s1 + $0x3c8] sm:$0xff]
    %v233 = vld [vmem:[%s1 + $0x3d0] sm:$0xff]
    %v234 = vld [vmem:[%s1 + $0x3d8] sm:$0xff]
    %v235 = vld [vmem:[%s1 + $0x3e0] sm:$0xff]
    %v236 = vld [vmem:[%s1 + $0x3e8] sm:$0xff]
    %v237 = vld [vmem:[%s1 + $0x3f0] sm:$0xff]
    %v238 = vld [vmem:[%s1 + $0x3f8] sm:$0xff]
    %v239 = vld [vmem:[%s1 + $0x400] sm:$0xff]
    %v240 = vld [vmem:[%s1 + $0x408] sm:$0xff]
    %v241 = vld [vmem:[%s1 + $0x410] sm:$0xff]
    %v242 = vld [vmem:[%s1 + $0x418] sm:$0xff]
    %v243 = vld [vmem:[%s1 + $0x420] sm:$0xff]
    %v244 = vld [vmem:[%s1 + $0x428] sm:$0xff]
    %v245 = vld [vmem:[%s1 + $0x430] sm:$0xff]
    %v246 = vld [vmem:[%s1 + $0x438] sm:$0xff]
    %v247 = vld [vmem:[%s1 + $0x440] sm:$0xff]
    %v248 = vld [vmem:[%s1 + $0x448] sm:$0xff]
    %v249 = vld [vmem:[%s1 + $0x450] sm:$0xff]
    %v250 = vld [vmem:[%s1 + $0x458] sm:$0xff]
    %v251 = vld [vmem:[%s1 + $0x460] sm:$0xff]
    %v252 = vld [vmem:[%s1 + $0x468] sm:$0xff]
    %v253 = vld [vmem:[%s1 + $0x470] sm:$0xff]
    %v254 = vld [vmem:[%s1 + $0x478] sm:$0xff]
    %v255 = vld [vmem:[%s1 + $0x480] sm:$0xff]
    %v256 = vld [vmem:[%s1 + $0x488] sm:$0xff]
    %v257 = vld [vmem:[%s1 + $0x490] sm:$0xff]
    %v258 = vld [vmem:[%s1 + $0x498] sm:$0xff]
    %v259 = vld [vmem:[%s1 + $0x4a0] sm:$0xff]
    %v260 = vld [vmem:[%s1 + $0x4a8] sm:$0xff]
    %v261 = vld [vmem:[%s1 + $0x4b0] sm:$0xff]
    %v262 = vld [vmem:[%s1 + $0x4b8] sm:$0xff]
    %v263 = vld [vmem:[%s1 + $0x4c0] sm:$0xff]
    %v264 = vld [vmem:[%s1 + $0x4c8] sm:$0xff]
    %v265 = vld [vmem:[%s1 + $0x4d0] sm:$0xff]
    %v266 = vld [vmem:[%s1 + $0x4d8] sm:$0xff]
    %v267 = vld [vmem:[%s1 + $0x4e0] sm:$0xff]
    %v268 = vld [vmem:[%s1 + $0x4e8] sm:$0xff]
    %v269 = vld [vmem:[%s1 + $0x4f0] sm:$0xff]
    %v270 = vld [vmem:[%s1 + $0x4f8] sm:$0xff]
    %v271 = vld [vmem:[%s1 + $0x500] sm:$0xff]
    %v272 = vld [vmem:[%s1 + $0x508] sm:$0xff]
    %v273 = vld [vmem:[%s1 + $0x510] sm:$0xff]
    %v274 = vld [vmem:[%s1 + $0x518] sm:$0xff]
    %v275 = vld [vmem:[%s1 + $0x520] sm:$0xff]
    %v276 = vld [vmem:[%s1 + $0x528] sm:$0xff]
    %v277 = vld [vmem:[%s1 + $0x530] sm:$0xff]
    %v278 = vld [vmem:[%s1 + $0x538] sm:$0xff]
    %v279 = vld [vmem:[%s1 + $0x540] sm:$0xff]
    %v280 = vld [vmem:[%s1 + $0x548] sm:$0xff]
    %v281 = vld [vmem:[%s1 + $0x550] sm:$0xff]
    %v282 = vld [vmem:[%s1 + $0x558] sm:$0xff]
    %v283 = vld [vmem:[%s1 + $0x560] sm:$0xff]
    %v284 = vld [vmem:[%s1 + $0x568] sm:$0xff]
    %v285 = vld [vmem:[%s1 + $0x570] sm:$0xff]
    %v286 = vld [vmem:[%s1 + $0x578] sm:$0xff]
    %v287 = vld [vmem:[%s1 + $0x580] sm:$0xff]
    %v288 = vld [vmem:[%s1 + $0x588] sm:$0xff]
    %v289 = vld [vmem:[%s1 + $0x590] sm:$0xff]
    %v290 = vld [vmem:[%s1 + $0x598] sm:$0xff]
    %v291 = vld [vmem:[%s1 + $0x5a0] sm:$0xff]
    %v292 = vld [vmem:[%s1 + $0x5a8] sm:$0xff]
    %v293 = vld [vmem:[%s1 + $0x5b0] sm:$0xff]
    %v294 = vld [vmem:[%s1 + $0x5b8] sm:$0xff]
    %v295 = vld [vmem:[%s1 + $0x5c0] sm:$0xff]
    %v296 = vld [vmem:[%s1 + $0x5c8] sm:$0xff]
    %v297 = vld [vmem:[%s1 + $0x5d0] sm:$0xff]
    %v298 = vld [vmem:[%s1 + $0x5d8] sm:$0xff]
    %v299 = vld [vmem:[%s1 + $0x5e0] sm:$0xff]
    %v300 = vld [vmem:[%s1 + $0x5e8] sm:$0xff]
    %v301 = vld [vmem:[%s1 + $0x5f0] sm:$0xff]
    %v302 = vld [vmem:[%s1 + $0x5f8] sm:$0xff]
    %v303 = vld [vmem:[%s1 + $0x600] sm:$0xff]
    %v304 = vld [vmem:[%s1 + $0x608] sm:$0xff]
    %v305 = vld [vmem:[%s1 + $0x610] sm:$0xff]
    %v306 = vld [vmem:[%s1 + $0x618] sm:$0xff]
    %v307 = vld [vmem:[%s1 + $0x620] sm:$0xff]
    %v308 = vld [vmem:[%s1 + $0x628] sm:$0xff]
    %v309 = vld [vmem:[%s1 + $0x630] sm:$0xff]
    %v310 = vld [vmem:[%s1 + $0x638] sm:$0xff]
    %v311 = vld [vmem:[%s1 + $0x640] sm:$0xff]
    %v312 = vld [vmem:[%s1 + $0x648] sm:$0xff]
    %v313 = vld [vmem:[%s1 + $0x650] sm:$0xff]
    %v314 = vld [vmem:[%s1 + $0x658] sm:$0xff]
    %v315 = vld [vmem:[%s1 + $0x660] sm:$0xff]
    %v316 = vld [vmem:[%s1 + $0x668] sm:$0xff]
    %v317 = vld [vmem:[%s1 + $0x670] sm:$0xff]
    %v318 = vld [vmem:[%s1 + $0x678] sm:$0xff]
    %v319 = vld [vmem:[%s1 + $0x680] sm:$0xff]
    %v320 = vld [vmem:[%s1 + $0x688] sm:$0xff]
    %v321 = vld [vmem:[%s1 + $0x690] sm:$0xff]
    %v322 = vld [vmem:[%s1 + $0x698] sm:$0xff]
    %v323 = vld [vmem:[%s1 + $0x6a0] sm:$0xff]
    %v324 = vld [vmem:[%s1 + $0x6a8] sm:$0xff]
    %v325 = vld [vmem:[%s1 + $0x6b0] sm:$0xff]
    %v326 = vld [vmem:[%s1 + $0x6b8] sm:$0xff]
    %v327 = vld [vmem:[%s1 + $0x6c0] sm:$0xff]
    %v328 = vld [vmem:[%s1 + $0x6c8] sm:$0xff]
    %v329 = vld [vmem:[%s1 + $0x6d0] sm:$0xff]
    %v330 = vld [vmem:[%s1 + $0x6d8] sm:$0xff]
    %v331 = vld [vmem:[%s1 + $0x6e0] sm:$0xff]
    %v332 = vld [vmem:[%s1 + $0x6e8] sm:$0xff]
    %v333 = vld [vmem:[%s1 + $0x6f0] sm:$0xff]
    %v334 = vld [vmem:[%s1 + $0x6f8] sm:$0xff]
    %v335 = vld [vmem:[%s1 + $0x700] sm:$0xff]
    %v336 = vld [vmem:[%s1 + $0x708] sm:$0xff]
    %v337 = vld [vmem:[%s1 + $0x710] sm:$0xff]
    %v338 = vld [vmem:[%s1 + $0x718] sm:$0xff]
    %v339 = vld [vmem:[%s1 + $0x720] sm:$0xff]
    %v340 = vld [vmem:[%s1 + $0x728] sm:$0xff]
    %v341 = vld [vmem:[%s1 + $0x730] sm:$0xff]
    %v342 = vld [vmem:[%s1 + $0x738] sm:$0xff]
    %v343 = vld [vmem:[%s1 + $0x740] sm:$0xff]
    %v344 = vld [vmem:[%s1 + $0x748] sm:$0xff]
    %v345 = vld [vmem:[%s1 + $0x750] sm:$0xff]
    %v346 = vld [vmem:[%s1 + $0x758] sm:$0xff]
    %v347 = vld [vmem:[%s1 + $0x760] sm:$0xff]
    %v348 = vld [vmem:[%s1 + $0x768] sm:$0xff]
    %v349 = vld [vmem:[%s1 + $0x770] sm:$0xff]
    %v350 = vld [vmem:[%s1 + $0x778] sm:$0xff]
    %v351 = vld [vmem:[%s1 + $0x780] sm:$0xff]
    %v352 = vld [vmem:[%s1 + $0x788] sm:$0xff]
    %v353 = vld [vmem:[%s1 + $0x790] sm:$0xff]
    %v354 = vld [vmem:[%s1 + $0x798] sm:$0xff]
    %v355 = vld [vmem:[%s1 + $0x7a0] sm:$0xff]
    %v356 = vld [vmem:[%s1 + $0x7a8] sm:$0xff]
    %v357 = vld [vmem:[%s1 + $0x7b0] sm:$0xff]
    %v358 = vld [vmem:[%s1 + $0x7b8] sm:$0xff]
    %v359 = vld [vmem:[%s1 + $0x7c0] sm:$0xff]
    %v360 = vld [vmem:[%s1 + $0x7c8] sm:$0xff]
    %v361 = vld [vmem:[%s1 + $0x7d0] sm:$0xff]
    %v362 = vld [vmem:[%s1 + $0x7d8] sm:$0xff]
    %v363 = vld [vmem:[%s1 + $0x7e0] sm:$0xff]
    %v364 = vld [vmem:[%s1 + $0x7e8] sm:$0xff]
    %v365 = vld [vmem:[%s1 + $0x7f0] sm:$0xff]
    %v366 = vld [vmem:[%s1 + $0x7f8] sm:$0xff]
    %v367 = vld [vmem:[%s1 + $0x800] sm:$0xff]
    %v368 = vld [vmem:[%s1 + $0x808] sm:$0xff]
    %v369 = vld [vmem:[%s1 + $0x810] sm:$0xff]
    %v370 = vld [vmem:[%s1 + $0x818] sm:$0xff]
    %v371 = vld [vmem:[%s1 + $0x820] sm:$0xff]
    %v372 = vld [vmem:[%s1 + $0x828] sm:$0xff]
    %v373 = vld [vmem:[%s1 + $0x830] sm:$0xff]
    %v374 = vld [vmem:[%s1 + $0x838] sm:$0xff]
    %v375 = vld [vmem:[%s1 + $0x840] sm:$0xff]
    %v376 = vld [vmem:[%s1 + $0x848] sm:$0xff]
    %v377 = vld [vmem:[%s1 + $0x850] sm:$0xff]
    %v378 = vld [vmem:[%s1 + $0x858] sm:$0xff]
    %v379 = vld [vmem:[%s1 + $0x860] sm:$0xff]
    %v380 = vld [vmem:[%s1 + $0x868] sm:$0xff]
    %v381 = vld [vmem:[%s1 + $0x870] sm:$0xff]
    %v382 = vld [vmem:[%s1 + $0x878] sm:$0xff]
    %v383 = vld [vmem:[%s1 + $0x880] sm:$0xff]
    %v384 = vld [vmem:[%s1 + $0x888] sm:$0xff]
    %v385 = vld [vmem:[%s1 + $0x890] sm:$0xff]
    %v386 = vld [vmem:[%s1 + $0x898] sm:$0xff]
    %v387 = vld [vmem:[%s1 + $0x8a0] sm:$0xff]
    %v388 = vld [vmem:[%s1 + $0x8a8] sm:$0xff]
    %v389 = vld [vmem:[%s1 + $0x8b0] sm:$0xff]
    %v390 = vld [vmem:[%s1 + $0x8b8] sm:$0xff]
    %v391 = vld [vmem:[%s1 + $0x8c0] sm:$0xff]
    %v392 = vld [vmem:[%s1 + $0x8c8] sm:$0xff]
    %v393 = vld [vmem:[%s1 + $0x8d0] sm:$0xff]
    %v394 = vld [vmem:[%s1 + $0x8d8] sm:$0xff]
    %v395 = vld [vmem:[%s1 + $0x8e0] sm:$0xff]
    %v396 = vld [vmem:[%s1 + $0x8e8] sm:$0xff]
    %v397 = vld [vmem:[%s1 + $0x8f0] sm:$0xff]
    %v398 = vld [vmem:[%s1 + $0x8f8] sm:$0xff]
    %v399 = vld [vmem:[%s1 + $0x900] sm:$0xff]
    %v400 = vld [vmem:[%s1 + $0x908] sm:$0xff]
    %v401 = vld [vmem:[%s1 + $0x910] sm:$0xff]
    %v402 = vld [vmem:[%s1 + $0x918] sm:$0xff]
    %v403 = vld [vmem:[%s1 + $0x920] sm:$0xff]
    %v404 = vld [vmem:[%s1 + $0x928] sm:$0xff]
    %v405 = vld [vmem:[%s1 + $0x930] sm:$0xff]
    %v406 = vld [vmem:[%s1 + $0x938] sm:$0xff]
    %v407 = vld [vmem:[%s1 + $0x940] sm:$0xff]
    %v408 = vld [vmem:[%s1 + $0x948] sm:$0xff]
    %v409 = vld [vmem:[%s1 + $0x950] sm:$0xff]
    %v410 = vld [vmem:[%s1 + $0x958] sm:$0xff]
    %v411 = vld [vmem:[%s1 + $0x960] sm:$0xff]
    %v412 = vld [vmem:[%s1 + $0x968] sm:$0xff]
    %v413 = vld [vmem:[%s1 + $0x970] sm:$0xff]
    %v414 = vld [vmem:[%s1 + $0x978] sm:$0xff]
    %v415 = vld [vmem:[%s1 + $0x980] sm:$0xff]
    %v416 = vld [vmem:[%s1 + $0x988] sm:$0xff]
    %v417 = vld [vmem:[%s1 + $0x990] sm:$0xff]
    %v418 = vld [vmem:[%s1 + $0x998] sm:$0xff]
    %v419 = vld [vmem:[%s1 + $0x9a0] sm:$0xff]
    %v420 = vld [vmem:[%s1 + $0x9a8] sm:$0xff]
    %v421 = vld [vmem:[%s1 + $0x9b0] sm:$0xff]
    %v422 = vld [vmem:[%s1 + $0x9b8] sm:$0xff]
    %v423 = vld [vmem:[%s1 + $0x9c0] sm:$0xff]
    %v424 = vld [vmem:[%s1 + $0x9c8] sm:$0xff]
    %v425 = vld [vmem:[%s1 + $0x9d0] sm:$0xff]
    %v426 = vld [vmem:[%s1 + $0x9d8] sm:$0xff]
    %v427 = vld [vmem:[%s1 + $0x9e0] sm:$0xff]
    %v428 = vld [vmem:[%s1 + $0x9e8] sm:$0xff]
    %v429 = vld [vmem:[%s1 + $0x9f0] sm:$0xff]
    %v430 = vld [vmem:[%s1 + $0x9f8] sm:$0xff]
    %v431 = vld [vmem:[%s1 + $0xa00] sm:$0xff]
    %v432 = vld [vmem:[%s1 + $0xa08] sm:$0xff]
    %v433 = vld [vmem:[%s1 + $0xa10] sm:$0xff]
    %v434 = vld [vmem:[%s1 + $0xa18] sm:$0xff]
    %v435 = vld [vmem:[%s1 + $0xa20] sm:$0xff]
    %v436 = vld [vmem:[%s1 + $0xa28] sm:$0xff]
    %v437 = vld [vmem:[%s1 + $0xa30] sm:$0xff]
    %v438 = vld [vmem:[%s1 + $0xa38] sm:$0xff]
    %v439 = vld [vmem:[%s1 + $0xa40] sm:$0xff]
    %v440 = vld [vmem:[%s1 + $0xa48] sm:$0xff]
    %v441 = vld [vmem:[%s1 + $0xa50] sm:$0xff]
    %v442 = vld [vmem:[%s1 + $0xa58] sm:$0xff]
    %v443 = vld [vmem:[%s1 + $0xa60] sm:$0xff]
    %v444 = vld [vmem:[%s1 + $0xa68] sm:$0xff]
    %v445 = vld [vmem:[%s1 + $0xa70] sm:$0xff]
    %v446 = vld [vmem:[%s1 + $0xa78] sm:$0xff]
    %v447 = vld [vmem:[%s1 + $0xa80] sm:$0xff]
    %v448 = vld [vmem:[%s1 + $0xa88] sm:$0xff]
    %v449 = vld [vmem:[%s1 + $0xa90] sm:$0xff]
    %v450 = vld [vmem:[%s1 + $0xa98] sm:$0xff]
    %v451 = vld [vmem:[%s1 + $0xaa0] sm:$0xff]
    %v452 = vld [vmem:[%s1 + $0xaa8] sm:$0xff]
    %v453 = vld [vmem:[%s1 + $0xab0] sm:$0xff]
    %v454 = vld [vmem:[%s1 + $0xab8] sm:$0xff]
    %v455 = vld [vmem:[%s1 + $0xac0] sm:$0xff]
    %v456 = vld [vmem:[%s1 + $0xac8] sm:$0xff]
    %v457 = vld [vmem:[%s1 + $0xad0] sm:$0xff]
    %v458 = vld [vmem:[%s1 + $0xad8] sm:$0xff]
    %v459 = vld [vmem:[%s1 + $0xae0] sm:$0xff]
    %v460 = vld [vmem:[%s1 + $0xae8] sm:$0xff]
    %v461 = vld [vmem:[%s1 + $0xaf0] sm:$0xff]
    %v462 = vld [vmem:[%s1 + $0xaf8] sm:$0xff]
    %v463 = vld [vmem:[%s1 + $0xb00] sm:$0xff]
    %v464 = vld [vmem:[%s1 + $0xb08] sm:$0xff]
    %v465 = vld [vmem:[%s1 + $0xb10] sm:$0xff]
    %v466 = vld [vmem:[%s1 + $0xb18] sm:$0xff]
    %v467 = vld [vmem:[%s1 + $0xb20] sm:$0xff]
    %v468 = vld [vmem:[%s1 + $0xb28] sm:$0xff]
    %v469 = vld [vmem:[%s1 + $0xb30] sm:$0xff]
    %v470 = vld [vmem:[%s1 + $0xb38] sm:$0xff]
    %v471 = vld [vmem:[%s1 + $0xb40] sm:$0xff]
    %v472 = vld [vmem:[%s1 + $0xb48] sm:$0xff]
    %v473 = vld [vmem:[%s1 + $0xb50] sm:$0xff]
    %v474 = vld [vmem:[%s1 + $0xb58] sm:$0xff]
    %v475 = vld [vmem:[%s1 + $0xb60] sm:$0xff]
    %v476 = vld [vmem:[%s1 + $0xb68] sm:$0xff]
    %v477 = vld [vmem:[%s1 + $0xb70] sm:$0xff]
    %v478 = vld [vmem:[%s1 + $0xb78] sm:$0xff]
    %v479 = vld [vmem:[%s1 + $0xb80] sm:$0xff]
    %v480 = vld [vmem:[%s1 + $0xb88] sm:$0xff]
    %v481 = vld [vmem:[%s1 + $0xb90] sm:$0xff]
    %v482 = vld [vmem:[%s1 + $0xb98] sm:$0xff]
    %v483 = vld [vmem:[%s1 + $0xba0] sm:$0xff]
    %v484 = vld [vmem:[%s1 + $0xba8] sm:$0xff]
    %v485 = vld [vmem:[%s1 + $0xbb0] sm:$0xff]
    %v486 = vld [vmem:[%s1 + $0xbb8] sm:$0xff]
    %v487 = vld [vmem:[%s1 + $0xbc0] sm:$0xff]
    %v488 = vld [vmem:[%s1 + $0xbc8] sm:$0xff]
    %v489 = vld [vmem:[%s1 + $0xbd0] sm:$0xff]
    %v490 = vld [vmem:[%s1 + $0xbd8] sm:$0xff]
    %v491 = vld [vmem:[%s1 + $0xbe0] sm:$0xff]
    %v492 = vld [vmem:[%s1 + $0xbe8] sm:$0xff]
    %v493 = vld [vmem:[%s1 + $0xbf0] sm:$0xff]
    %v494 = vld [vmem:[%s1 + $0xbf8] sm:$0xff]
    %v495 = vld [vmem:[%s1 + $0xc00] sm:$0xff]
    %v496 = vld [vmem:[%s1 + $0xc08] sm:$0xff]
    %v497 = vld [vmem:[%s1 + $0xc10] sm:$0xff]
    %v498 = vld [vmem:[%s1 + $0xc18] sm:$0xff]
    %v499 = vld [vmem:[%s1 + $0xc20] sm:$0xff]
    %v500 = vld [vmem:[%s1 + $0xc28] sm:$0xff]
    %v501 = vld [vmem:[%s1 + $0xc30] sm:$0xff]
    %v502 = vld [vmem:[%s1 + $0xc38] sm:$0xff]
    %v503 = vld [vmem:[%s1 + $0xc40] sm:$0xff]
    %v504 = vld [vmem:[%s1 + $0xc48] sm:$0xff]
    %v505 = vld [vmem:[%s1 + $0xc50] sm:$0xff]
    %v506 = vld [vmem:[%s1 + $0xc58] sm:$0xff]
    %v507 = vld [vmem:[%s1 + $0xc60] sm:$0xff]
    %v508 = vld [vmem:[%s1 + $0xc68] sm:$0xff]
    %v509 = vld [vmem:[%s1 + $0xc70] sm:$0xff]
    %v510 = vld [vmem:[%s1 + $0xc78] sm:$0xff]
    %v511 = vld [vmem:[%s1 + $0xc80] sm:$0xff]
    %v512 = vld [vmem:[%s1 + $0xc88] sm:$0xff]
    %v513 = vld [vmem:[%s1 + $0xc90] sm:$0xff]
    %v514 = vld [vmem:[%s1 + $0xc98] sm:$0xff]
    %v515 = vld [vmem:[%s1 + $0xca0] sm:$0xff]
    %v516 = vld [vmem:[%s1 + $0xca8] sm:$0xff]
    %v517 = vld [vmem:[%s1 + $0xcb0] sm:$0xff]
    %v518 = vld [vmem:[%s1 + $0xcb8] sm:$0xff]
    %v519 = vld [vmem:[%s1 + $0xcc0] sm:$0xff]
    %v520 = vld [vmem:[%s1 + $0xcc8] sm:$0xff]
    %v521 = vld [vmem:[%s1 + $0xcd0] sm:$0xff]
    %v522 = vld [vmem:[%s1 + $0xcd8] sm:$0xff]
    %v523 = vld [vmem:[%s1 + $0xce0] sm:$0xff]
    %v524 = vld [vmem:[%s1 + $0xce8] sm:$0xff]
    %v525 = vld [vmem:[%s1 + $0xcf0] sm:$0xff]
    %v526 = vld [vmem:[%s1 + $0xcf8] sm:$0xff]
    %v527 = vld [vmem:[%s1 + $0xd00] sm:$0xff]
    %v528 = vld [vmem:[%s1 + $0xd08] sm:$0xff]
    %v529 = vld [vmem:[%s1 + $0xd10] sm:$0xff]
    %v530 = vld [vmem:[%s1 + $0xd18] sm:$0xff]
    %v531 = vld [vmem:[%s1 + $0xd20] sm:$0xff]
    %v532 = vld [vmem:[%s1 + $0xd28] sm:$0xff]
    %v533 = vld [vmem:[%s1 + $0xd30] sm:$0xff]
    %v534 = vld [vmem:[%s1 + $0xd38] sm:$0xff]
    %v535 = vld [vmem:[%s1 + $0xd40] sm:$0xff]
    %v536 = vld [vmem:[%s1 + $0xd48] sm:$0xff]
    %v537 = vld [vmem:[%s1 + $0xd50] sm:$0xff]
    %v538 = vld [vmem:[%s1 + $0xd58] sm:$0xff]
    %v539 = vld [vmem:[%s1 + $0xd60] sm:$0xff]
    %v540 = vld [vmem:[%s1 + $0xd68] sm:$0xff]
    %v541 = vld [vmem:[%s1 + $0xd70] sm:$0xff]
    %v542 = vld [vmem:[%s1 + $0xd78] sm:$0xff]
    %v543 = vld [vmem:[%s1 + $0xd80] sm:$0xff]
    %v544 = vld [vmem:[%s1 + $0xd88] sm:$0xff]
    %v545 = vld [vmem:[%s1 + $0xd90] sm:$0xff]
    %v546 = vld [vmem:[%s1 + $0xd98] sm:$0xff]
    %v547 = vld [vmem:[%s1 + $0xda0] sm:$0xff]
    %v548 = vld [vmem:[%s1 + $0xda8] sm:$0xff]
    %v549 = vld [vmem:[%s1 + $0xdb0] sm:$0xff]
    %v550 = vld [vmem:[%s1 + $0xdb8] sm:$0xff]
    %v551 = vld [vmem:[%s1 + $0xdc0] sm:$0xff]
    %v552 = vld [vmem:[%s1 + $0xdc8] sm:$0xff]
    %v553 = vld [vmem:[%s1 + $0xdd0] sm:$0xff]
    %v554 = vld [vmem:[%s1 + $0xdd8] sm:$0xff]
    %v555 = vld [vmem:[%s1 + $0xde0] sm:$0xff]
    %v556 = vld [vmem:[%s1 + $0xde8] sm:$0xff]
    %v557 = vld [vmem:[%s1 + $0xdf0] sm:$0xff]
    %v558 = vld [vmem:[%s1 + $0xdf8] sm:$0xff]
    %v559 = vld [vmem:[%s1 + $0xe00] sm:$0xff]
    %v560 = vld [vmem:[%s1 + $0xe08] sm:$0xff]
    %v561 = vld [vmem:[%s1 + $0xe10] sm:$0xff]
    %v562 = vld [vmem:[%s1 + $0xe18] sm:$0xff]
    %v563 = vld [vmem:[%s1 + $0xe20] sm:$0xff]
    %v564 = vld [vmem:[%s1 + $0xe28] sm:$0xff]
    %v565 = vld [vmem:[%s1 + $0xe30] sm:$0xff]
    %v566 = vld [vmem:[%s1 + $0xe38] sm:$0xff]
    %v567 = vld [vmem:[%s1 + $0xe40] sm:$0xff]
    %v568 = vld [vmem:[%s1 + $0xe48] sm:$0xff]
    %v569 = vld [vmem:[%s1 + $0xe50] sm:$0xff]
    %v570 = vld [vmem:[%s1 + $0xe58] sm:$0xff]
    %v571 = vld [vmem:[%s1 + $0xe60] sm:$0xff]
    %v572 = vld [vmem:[%s1 + $0xe68] sm:$0xff]
    %v573 = vld [vmem:[%s1 + $0xe70] sm:$0xff]
    %v574 = vld [vmem:[%s1 + $0xe78] sm:$0xff]
    %v575 = vld [vmem:[%s1 + $0xe80] sm:$0xff]
    %v576 = vld [vmem:[%s1 + $0xe88] sm:$0xff]
    %v577 = vld [vmem:[%s1 + $0xe90] sm:$0xff]
    %v578 = vld [vmem:[%s1 + $0xe98] sm:$0xff]
    %v579 = vld [vmem:[%s1 + $0xea0] sm:$0xff]
    %v580 = vld [vmem:[%s1 + $0xea8] sm:$0xff]
    %v581 = vld [vmem:[%s1 + $0xeb0] sm:$0xff]
    %v582 = vld [vmem:[%s1 + $0xeb8] sm:$0xff]
    %v583 = vld [vmem:[%s1 + $0xec0] sm:$0xff]
    %v584 = vld [vmem:[%s1 + $0xec8] sm:$0xff]
    %v585 = vld [vmem:[%s1 + $0xed0] sm:$0xff]
    %v586 = vld [vmem:[%s1 + $0xed8] sm:$0xff]
    %v587 = vld [vmem:[%s1 + $0xee0] sm:$0xff]
    %v588 = vld [vmem:[%s1 + $0xee8] sm:$0xff]
    %v589 = vld [vmem:[%s1 + $0xef0] sm:$0xff]
    %v590 = vld [vmem:[%s1 + $0xef8] sm:$0xff]
    %v591 = vld [vmem:[%s1 + $0xf00] sm:$0xff]
    %v592 = vld [vmem:[%s1 + $0xf08] sm:$0xff]
    %v593 = vld [vmem:[%s1 + $0xf10] sm:$0xff]
    %v594 = vld [vmem:[%s1 + $0xf18] sm:$0xff]
    %v595 = vld [vmem:[%s1 + $0xf20] sm:$0xff]
    %v596 = vld [vmem:[%s1 + $0xf28] sm:$0xff]
    %v597 = vld [vmem:[%s1 + $0xf30] sm:$0xff]
    %v598 = vld [vmem:[%s1 + $0xf38] sm:$0xff]
    %v599 = vld [vmem:[%s1 + $0xf40] sm:$0xff]
    %v600 = vld [vmem:[%s1 + $0xf48] sm:$0xff]
    %v601 = vld [vmem:[%s1 + $0xf50] sm:$0xff]
    %v602 = vld [vmem:[%s1 + $0xf58] sm:$0xff]
    %v603 = vld [vmem:[%s1 + $0xf60] sm:$0xff]
    %v604 = vld [vmem:[%s1 + $0xf68] sm:$0xff]
    %v605 = vld [vmem:[%s1 + $0xf70] sm:$0xff]
    %v606 = vld [vmem:[%s1 + $0xf78] sm:$0xff]
    %v607 = vld [vmem:[%s1 + $0xf80] sm:$0xff]
    %v608 = vld [vmem:[%s1 + $0xf88] sm:$0xff]
    %v609 = vld [vmem:[%s1 + $0xf90] sm:$0xff]
    %v610 = vld [vmem:[%s1 + $0xf98] sm:$0xff]
    %v611 = vld [vmem:[%s1 + $0xfa0] sm:$0xff]
    %v612 = vld [vmem:[%s1 + $0xfa8] sm:$0xff]
    %v613 = vld [vmem:[%s1 + $0xfb0] sm:$0xff]
    %v614 = vld [vmem:[%s1 + $0xfb8] sm:$0xff]
    %v615 = vld [vmem:[%s1 + $0xfc0] sm:$0xff]
    %v616 = vld [vmem:[%s1 + $0xfc8] sm:$0xff]
    %v617 = vld [vmem:[%s1 + $0xfd0] sm:$0xff]
    %v618 = vld [vmem:[%s1 + $0xfd8] sm:$0xff]
    %v619 = vld [vmem:[%s1 + $0xfe0] sm:$0xff]
    %v620 = vld [vmem:[%s1 + $0xfe8] sm:$0xff]
    %v621 = vld [vmem:[%s1 + $0xff0] sm:$0xff]
    %v622 = vld [vmem:[%s1 + $0xff8] sm:$0xff]
    %v623 = vld [vmem:[%s1 + $0x1000] sm:$0xff]
    %v624 = vld [vmem:[%s1 + $0x1008] sm:$0xff]
    %v625 = vld [vmem:[%s1 + $0x1010] sm:$0xff]
    %v626 = vld [vmem:[%s1 + $0x1018] sm:$0xff]
    %v627 = vld [vmem:[%s1 + $0x1020] sm:$0xff]
    %v628 = vld [vmem:[%s1 + $0x1028] sm:$0xff]
    %v629 = vld [vmem:[%s1 + $0x1030] sm:$0xff]
    %v630 = vld [vmem:[%s1 + $0x1038] sm:$0xff]
    %v631 = vld [vmem:[%s1 + $0x1040] sm:$0xff]
    %v632 = vld [vmem:[%s1 + $0x1048] sm:$0xff]
    %v633 = vld [vmem:[%s1 + $0x1050] sm:$0xff]
    %v634 = vld [vmem:[%s1 + $0x1058] sm:$0xff]
    %v635 = vld [vmem:[%s1 + $0x1060] sm:$0xff]
    %v636 = vld [vmem:[%s1 + $0x1068] sm:$0xff]
    %v637 = vld [vmem:[%s1 + $0x1070] sm:$0xff]
    %v638 = vld [vmem:[%s1 + $0x1078] sm:$0xff]
    %v639 = vld [vmem:[%s1 + $0x1080] sm:$0xff]
    %v640 = vld [vmem:[%s1 + $0x1088] sm:$0xff]
    %v641 = vld [vmem:[%s1 + $0x1090] sm:$0xff]
    %v642 = vld [vmem:[%s1 + $0x1098] sm:$0xff]
    %v643 = vld [vmem:[%s1 + $0x10a0] sm:$0xff]
    %v644 = vld [vmem:[%s1 + $0x10a8] sm:$0xff]
    %v645 = vld [vmem:[%s1 + $0x10b0] sm:$0xff]
    %v646 = vld [vmem:[%s1 + $0x10b8] sm:$0xff]
    %v647 = vld [vmem:[%s1 + $0x10c0] sm:$0xff]
    %v648 = vld [vmem:[%s1 + $0x10c8] sm:$0xff]
    %v649 = vld [vmem:[%s1 + $0x10d0] sm:$0xff]
    %v650 = vld [vmem:[%s1 + $0x10d8] sm:$0xff]
    %v651 = vld [vmem:[%s1 + $0x10e0] sm:$0xff]
    %v652 = vld [vmem:[%s1 + $0x10e8] sm:$0xff]
    %v653 = vld [vmem:[%s1 + $0x10f0] sm:$0xff]
    %v654 = vld [vmem:[%s1 + $0x10f8] sm:$0xff]
    %v655 = vld [vmem:[%s1 + $0x1100] sm:$0xff]
    %v656 = vld [vmem:[%s1 + $0x1108] sm:$0xff]
    %v657 = vld [vmem:[%s1 + $0x1110] sm:$0xff]
    %v658 = vld [vmem:[%s1 + $0x1118] sm:$0xff]
    %v659 = vld [vmem:[%s1 + $0x1120] sm:$0xff]
    %v660 = vld [vmem:[%s1 + $0x1128] sm:$0xff]
    %v661 = vld [vmem:[%s1 + $0x1130] sm:$0xff]
    %v662 = vld [vmem:[%s1 + $0x1138] sm:$0xff]
    %v663 = vld [vmem:[%s1 + $0x1140] sm:$0xff]
    %v664 = vld [vmem:[%s1 + $0x1148] sm:$0xff]
    %v665 = vld [vmem:[%s1 + $0x1150] sm:$0xff]
    %v666 = vld [vmem:[%s1 + $0x1158] sm:$0xff]
    %v667 = vld [vmem:[%s1 + $0x1160] sm:$0xff]
    %v668 = vld [vmem:[%s1 + $0x1168] sm:$0xff]
    %v669 = vld [vmem:[%s1 + $0x1170] sm:$0xff]
    %v670 = vld [vmem:[%s1 + $0x1178] sm:$0xff]
    %v671 = vld [vmem:[%s1 + $0x1180] sm:$0xff]
    %v672 = vld [vmem:[%s1 + $0x1188] sm:$0xff]
    %v673 = vld [vmem:[%s1 + $0x1190] sm:$0xff]
    %v674 = vld [vmem:[%s1 + $0x1198] sm:$0xff]
    %v675 = vld [vmem:[%s1 + $0x11a0] sm:$0xff]
    %v676 = vld [vmem:[%s1 + $0x11a8] sm:$0xff]
    %v677 = vld [vmem:[%s1 + $0x11b0] sm:$0xff]
    %v678 = vld [vmem:[%s1 + $0x11b8] sm:$0xff]
    %v679 = vld [vmem:[%s1 + $0x11c0] sm:$0xff]
    %v680 = vld [vmem:[%s1 + $0x11c8] sm:$0xff]
    %v681 = vld [vmem:[%s1 + $0x11d0] sm:$0xff]
    %v682 = vld [vmem:[%s1 + $0x11d8] sm:$0xff]
    %v683 = vld [vmem:[%s1 + $0x11e0] sm:$0xff]
    %v684 = vld [vmem:[%s1 + $0x11e8] sm:$0xff]
    %v685 = vld [vmem:[%s1 + $0x11f0] sm:$0xff]
    %v686 = vld [vmem:[%s1 + $0x11f8] sm:$0xff]
    %v687 = vld [vmem:[%s1 + $0x1200] sm:$0xff]
    %v688 = vld [vmem:[%s1 + $0x1208] sm:$0xff]
    %v689 = vld [vmem:[%s1 + $0x1210] sm:$0xff]
    %v690 = vld [vmem:[%s1 + $0x1218] sm:$0xff]
    %v691 = vld [vmem:[%s1 + $0x1220] sm:$0xff]
    %v692 = vld [vmem:[%s1 + $0x1228] sm:$0xff]
    %v693 = vld [vmem:[%s1 + $0x1230] sm:$0xff]
    %v694 = vld [vmem:[%s1 + $0x1238] sm:$0xff]
    %v695 = vld [vmem:[%s1 + $0x1240] sm:$0xff]
    %v696 = vld [vmem:[%s1 + $0x1248] sm:$0xff]
    %v697 = vld [vmem:[%s1 + $0x1250] sm:$0xff]
    %v698 = vld [vmem:[%s1 + $0x1258] sm:$0xff]
    %v699 = vld [vmem:[%s1 + $0x1260] sm:$0xff]
    %v700 = vld [vmem:[%s1 + $0x1268] sm:$0xff]
    %v701 = vld [vmem:[%s1 + $0x1270] sm:$0xff]
    %v702 = vld [vmem:[%s1 + $0x1278] sm:$0xff]
    %v703 = vld [vmem:[%s1 + $0x1280] sm:$0xff]
    %v704 = vld [vmem:[%s1 + $0x1288] sm:$0xff]
    %v705 = vld [vmem:[%s1 + $0x1290] sm:$0xff]
    %v706 = vld [vmem:[%s1 + $0x1298] sm:$0xff]
    %v707 = vld [vmem:[%s1 + $0x12a0] sm:$0xff]
    %v708 = vld [vmem:[%s1 + $0x12a8] sm:$0xff]
    %v709 = vld [vmem:[%s1 + $0x12b0] sm:$0xff]
    %v710 = vld [vmem:[%s1 + $0x12b8] sm:$0xff]
    %v711 = vld [vmem:[%s1 + $0x12c0] sm:$0xff]
    %v712 = vld [vmem:[%s1 + $0x12c8] sm:$0xff]
    %v713 = vld [vmem:[%s1 + $0x12d0] sm:$0xff]
    %v714 = vld [vmem:[%s1 + $0x12d8] sm:$0xff]
    %v715 = vld [vmem:[%s1 + $0x12e0] sm:$0xff]
    %v716 = vld [vmem:[%s1 + $0x12e8] sm:$0xff]
    %v717 = vld [vmem:[%s1 + $0x12f0] sm:$0xff]
    %v718 = vld [vmem:[%s1 + $0x12f8] sm:$0xff]
    %v719 = vld [vmem:[%s1 + $0x1300] sm:$0xff]
    %v720 = vld [vmem:[%s1 + $0x1308] sm:$0xff]
    %v721 = vld [vmem:[%s1 + $0x1310] sm:$0xff]
    %v722 = vld [vmem:[%s1 + $0x1318] sm:$0xff]
    %v723 = vld [vmem:[%s1 + $0x1320] sm:$0xff]
    %v724 = vld [vmem:[%s1 + $0x1328] sm:$0xff]
    %v725 = vld [vmem:[%s1 + $0x1330] sm:$0xff]
    %v726 = vld [vmem:[%s1 + $0x1338] sm:$0xff]
    %v727 = vld [vmem:[%s1 + $0x1340] sm:$0xff]
    %v728 = vld [vmem:[%s1 + $0x1348] sm:$0xff]
    %v729 = vld [vmem:[%s1 + $0x1350] sm:$0xff]
    %v730 = vld [vmem:[%s1 + $0x1358] sm:$0xff]
    %v731 = vld [vmem:[%s1 + $0x1360] sm:$0xff]
    %v732 = vld [vmem:[%s1 + $0x1368] sm:$0xff]
    %v733 = vld [vmem:[%s1 + $0x1370] sm:$0xff]
    %v734 = vld [vmem:[%s1 + $0x1378] sm:$0xff]
    %v735 = vld [vmem:[%s1 + $0x1380] sm:$0xff]
    %v736 = vld [vmem:[%s1 + $0x1388] sm:$0xff]
    %v737 = vld [vmem:[%s1 + $0x1390] sm:$0xff]
    %v738 = vld [vmem:[%s1 + $0x1398] sm:$0xff]
    %v739 = vld [vmem:[%s1 + $0x13a0] sm:$0xff]
    %v740 = vld [vmem:[%s1 + $0x13a8] sm:$0xff]
    %v741 = vld [vmem:[%s1 + $0x13b0] sm:$0xff]
    %v742 = vld [vmem:[%s1 + $0x13b8] sm:$0xff]
    %v743 = vld [vmem:[%s1 + $0x13c0] sm:$0xff]
    %v744 = vld [vmem:[%s1 + $0x13c8] sm:$0xff]
    %v745 = vld [vmem:[%s1 + $0x13d0] sm:$0xff]
    %v746 = vld [vmem:[%s1 + $0x13d8] sm:$0xff]
    %v747 = vld [vmem:[%s1 + $0x13e0] sm:$0xff]
    %v748 = vld [vmem:[%s1 + $0x13e8] sm:$0xff]
    %v749 = vld [vmem:[%s1 + $0x13f0] sm:$0xff]
    %v750 = vld [vmem:[%s1 + $0x13f8] sm:$0xff]
    %v751 = vld [vmem:[%s1 + $0x1400] sm:$0xff]
    %v752 = vld [vmem:[%s1 + $0x1408] sm:$0xff]
    %v753 = vld [vmem:[%s1 + $0x1410] sm:$0xff]
    %v754 = vld [vmem:[%s1 + $0x1418] sm:$0xff]
    %v755 = vld [vmem:[%s1 + $0x1420] sm:$0xff]
    %v756 = vld [vmem:[%s1 + $0x1428] sm:$0xff]
    %v757 = vld [vmem:[%s1 + $0x1430] sm:$0xff]
    %v758 = vld [vmem:[%s1 + $0x1438] sm:$0xff]
    %v759 = vld [vmem:[%s1 + $0x1440] sm:$0xff]
    %v760 = vld [vmem:[%s1 + $0x1448] sm:$0xff]
    %v761 = vld [vmem:[%s1 + $0x1450] sm:$0xff]
    %v762 = vld [vmem:[%s1 + $0x1458] sm:$0xff]
    %v763 = vld [vmem:[%s1 + $0x1460] sm:$0xff]
    %v764 = vld [vmem:[%s1 + $0x1468] sm:$0xff]
    %v765 = vld [vmem:[%s1 + $0x1470] sm:$0xff]
    %v766 = vld [vmem:[%s1 + $0x1478] sm:$0xff]
    %v767 = vld [vmem:[%s1 + $0x1480] sm:$0xff]
    %v768 = vld [vmem:[%s1 + $0x1488] sm:$0xff]
    %v769 = vld [vmem:[%s1 + $0x1490] sm:$0xff]
    %v770 = vld [vmem:[%s1 + $0x1498] sm:$0xff]
    %v771 = vld [vmem:[%s1 + $0x14a0] sm:$0xff]
    %v772 = vld [vmem:[%s1 + $0x14a8] sm:$0xff]
    %v773 = vld [vmem:[%s1 + $0x14b0] sm:$0xff]
    %v774 = vld [vmem:[%s1 + $0x14b8] sm:$0xff]
    %v775 = vld [vmem:[%s1 + $0x14c0] sm:$0xff]
    %v776 = vld [vmem:[%s1 + $0x14c8] sm:$0xff]
    %v777 = vld [vmem:[%s1 + $0x14d0] sm:$0xff]
    %v778 = vld [vmem:[%s1 + $0x14d8] sm:$0xff]
    %v779 = vld [vmem:[%s1 + $0x14e0] sm:$0xff]
    %v780 = vld [vmem:[%s1 + $0x14e8] sm:$0xff]
    %v781 = vld [vmem:[%s1 + $0x14f0] sm:$0xff]
    %v782 = vld [vmem:[%s1 + $0x14f8] sm:$0xff]
    %v783 = vld [vmem:[%s1 + $0x1500] sm:$0xff]
    %v784 = vld [vmem:[%s1 + $0x1508] sm:$0xff]
    %v785 = vld [vmem:[%s1 + $0x1510] sm:$0xff]
    %v786 = vld [vmem:[%s1 + $0x1518] sm:$0xff]
    %v787 = vld [vmem:[%s1 + $0x1520] sm:$0xff]
    %v788 = vld [vmem:[%s1 + $0x1528] sm:$0xff]
    %v789 = vld [vmem:[%s1 + $0x1530] sm:$0xff]
    %v790 = vld [vmem:[%s1 + $0x1538] sm:$0xff]
    %v791 = vld [vmem:[%s1 + $0x1540] sm:$0xff]
    %v792 = vld [vmem:[%s1 + $0x1548] sm:$0xff]
    %v793 = vld [vmem:[%s1 + $0x1550] sm:$0xff]
    %v794 = vld [vmem:[%s1 + $0x1558] sm:$0xff]
    %v795 = vld [vmem:[%s1 + $0x1560] sm:$0xff]
    %v796 = vld [vmem:[%s1 + $0x1568] sm:$0xff]
    %v797 = vld [vmem:[%s1 + $0x1570] sm:$0xff]
    %v798 = vld [vmem:[%s1 + $0x1578] sm:$0xff]
    %v799 = vld [vmem:[%s1 + $0x1580] sm:$0xff]
    %v800 = vld [vmem:[%s1 + $0x1588] sm:$0xff]
    %v801 = vld [vmem:[%s1 + $0x1590] sm:$0xff]
    %v802 = vld [vmem:[%s1 + $0x1598] sm:$0xff]
    %v803 = vld [vmem:[%s1 + $0x15a0] sm:$0xff]
    %v804 = vld [vmem:[%s1 + $0x15a8] sm:$0xff]
    %v805 = vld [vmem:[%s1 + $0x15b0] sm:$0xff]
    %v806 = vld [vmem:[%s1 + $0x15b8] sm:$0xff]
    %v807 = vld [vmem:[%s1 + $0x15c0] sm:$0xff]
    %v808 = vld [vmem:[%s1 + $0x15c8] sm:$0xff]
    %v809 = vld [vmem:[%s1 + $0x15d0] sm:$0xff]
    %v810 = vld [vmem:[%s1 + $0x15d8] sm:$0xff]
    %v811 = vld [vmem:[%s1 + $0x15e0] sm:$0xff]
    %v812 = vld [vmem:[%s1 + $0x15e8] sm:$0xff]
    %v813 = vld [vmem:[%s1 + $0x15f0] sm:$0xff]
    %v814 = vld [vmem:[%s1 + $0x15f8] sm:$0xff]
    %v815 = vld [vmem:[%s1 + $0x1600] sm:$0xff]
    %v816 = vld [vmem:[%s1 + $0x1608] sm:$0xff]
    %v817 = vld [vmem:[%s1 + $0x1610] sm:$0xff]
    %v818 = vld [vmem:[%s1 + $0x1618] sm:$0xff]
    %v819 = vld [vmem:[%s1 + $0x1620] sm:$0xff]
    %v820 = vld [vmem:[%s1 + $0x1628] sm:$0xff]
    %v821 = vld [vmem:[%s1 + $0x1630] sm:$0xff]
    %v822 = vld [vmem:[%s1 + $0x1638] sm:$0xff]
    %v823 = vld [vmem:[%s1 + $0x1640] sm:$0xff]
    %v824 = vld [vmem:[%s1 + $0x1648] sm:$0xff]
    %v825 = vld [vmem:[%s1 + $0x1650] sm:$0xff]
    %v826 = vld [vmem:[%s1 + $0x1658] sm:$0xff]
    %v827 = vld [vmem:[%s1 + $0x1660] sm:$0xff]
    %v828 = vld [vmem:[%s1 + $0x1668] sm:$0xff]
    %v829 = vld [vmem:[%s1 + $0x1670] sm:$0xff]
    %v830 = vld [vmem:[%s1 + $0x1678] sm:$0xff]
    %v831 = vld [vmem:[%s1 + $0x1680] sm:$0xff]
    %v832 = vld [vmem:[%s1 + $0x1688] sm:$0xff]
    %v833 = vld [vmem:[%s1 + $0x1690] sm:$0xff]
    %v834 = vld [vmem:[%s1 + $0x1698] sm:$0xff]
    %v835 = vld [vmem:[%s1 + $0x16a0] sm:$0xff]
    %v836 = vld [vmem:[%s1 + $0x16a8] sm:$0xff]
    %v837 = vld [vmem:[%s1 + $0x16b0] sm:$0xff]
    %v838 = vld [vmem:[%s1 + $0x16b8] sm:$0xff]
    %v839 = vld [vmem:[%s1 + $0x16c0] sm:$0xff]
    %v840 = vld [vmem:[%s1 + $0x16c8] sm:$0xff]
    %v841 = vld [vmem:[%s1 + $0x16d0] sm:$0xff]
    %v842 = vld [vmem:[%s1 + $0x16d8] sm:$0xff]
    %v843 = vld [vmem:[%s1 + $0x16e0] sm:$0xff]
    %v844 = vld [vmem:[%s1 + $0x16e8] sm:$0xff]
    %v845 = vld [vmem:[%s1 + $0x16f0] sm:$0xff]
    %v846 = vld [vmem:[%s1 + $0x16f8] sm:$0xff]
    %v847 = vld [vmem:[%s1 + $0x1700] sm:$0xff]
    %v848 = vld [vmem:[%s1 + $0x1708] sm:$0xff]
    %v849 = vld [vmem:[%s1 + $0x1710] sm:$0xff]
    %v850 = vld [vmem:[%s1 + $0x1718] sm:$0xff]
    %v851 = vld [vmem:[%s1 + $0x1720] sm:$0xff]
    %v852 = vld [vmem:[%s1 + $0x1728] sm:$0xff]
    %v853 = vld [vmem:[%s1 + $0x1730] sm:$0xff]
    %v854 = vld [vmem:[%s1 + $0x1738] sm:$0xff]
    %v855 = vld [vmem:[%s1 + $0x1740] sm:$0xff]
    %v856 = vld [vmem:[%s1 + $0x1748] sm:$0xff]
    %v857 = vld [vmem:[%s1 + $0x1750] sm:$0xff]
    %v858 = vld [vmem:[%s1 + $0x1758] sm:$0xff]
    %v859 = vld [vmem:[%s1 + $0x1760] sm:$0xff]
    %v860 = vld [vmem:[%s1 + $0x1768] sm:$0xff]
    %v861 = vld [vmem:[%s1 + $0x1770] sm:$0xff]
    %v862 = vld [vmem:[%s1 + $0x1778] sm:$0xff]
    %v863 = vld [vmem:[%s1 + $0x1780] sm:$0xff]
    %v864 = vld [vmem:[%s1 + $0x1788] sm:$0xff]
    %v865 = vld [vmem:[%s1 + $0x1790] sm:$0xff]
    %v866 = vld [vmem:[%s1 + $0x1798] sm:$0xff]
    %v867 = vld [vmem:[%s1 + $0x17a0] sm:$0xff]
    %v868 = vld [vmem:[%s1 + $0x17a8] sm:$0xff]
    %v869 = vld [vmem:[%s1 + $0x17b0] sm:$0xff]
    %v870 = vld [vmem:[%s1 + $0x17b8] sm:$0xff]
    %v871 = vld [vmem:[%s1 + $0x17c0] sm:$0xff]
    %v872 = vld [vmem:[%s1 + $0x17c8] sm:$0xff]
    %v873 = vld [vmem:[%s1 + $0x17d0] sm:$0xff]
    %v874 = vld [vmem:[%s1 + $0x17d8] sm:$0xff]
    %v875 = vld [vmem:[%s1 + $0x17e0] sm:$0xff]
    %v876 = vld [vmem:[%s1 + $0x17e8] sm:$0xff]
    %v877 = vld [vmem:[%s1 + $0x17f0] sm:$0xff]
    %v878 = vld [vmem:[%s1 + $0x17f8] sm:$0xff]
    %v879 = vld [vmem:[%s1 + $0x1800] sm:$0xff]
    %v880 = vld [vmem:[%s1 + $0x1808] sm:$0xff]
    %v881 = vld [vmem:[%s1 + $0x1810] sm:$0xff]
    %v882 = vld [vmem:[%s1 + $0x1818] sm:$0xff]
    %v883 = vld [vmem:[%s1 + $0x1820] sm:$0xff]
    %v884 = vld [vmem:[%s1 + $0x1828] sm:$0xff]
    %v885 = vld [vmem:[%s1 + $0x1830] sm:$0xff]
    %v886 = vld [vmem:[%s1 + $0x1838] sm:$0xff]
    %v887 = vld [vmem:[%s1 + $0x1840] sm:$0xff]
    %v888 = vld [vmem:[%s1 + $0x1848] sm:$0xff]
    %v889 = vld [vmem:[%s1 + $0x1850] sm:$0xff]
    %v890 = vld [vmem:[%s1 + $0x1858] sm:$0xff]
    %v891 = vld [vmem:[%s1 + $0x1860] sm:$0xff]
    %v892 = vld [vmem:[%s1 + $0x1868] sm:$0xff]
    %v893 = vld [vmem:[%s1 + $0x1870] sm:$0xff]
    %v894 = vld [vmem:[%s1 + $0x1878] sm:$0xff]
    %v895 = vld [vmem:[%s1 + $0x1880] sm:$0xff]
    %v896 = vld [vmem:[%s1 + $0x1888] sm:$0xff]
    %v897 = vld [vmem:[%s1 + $0x1890] sm:$0xff]
    %v898 = vld [vmem:[%s1 + $0x1898] sm:$0xff]
    %v899 = vld [vmem:[%s1 + $0x18a0] sm:$0xff]
    %v900 = vld [vmem:[%s1 + $0x18a8] sm:$0xff]
    %v901 = vld [vmem:[%s1 + $0x18b0] sm:$0xff]
    %v902 = vld [vmem:[%s1 + $0x18b8] sm:$0xff]
    %v903 = vld [vmem:[%s1 + $0x18c0] sm:$0xff]
    %v904 = vld [vmem:[%s1 + $0x18c8] sm:$0xff]
    %v905 = vld [vmem:[%s1 + $0x18d0] sm:$0xff]
    %v906 = vld [vmem:[%s1 + $0x18d8] sm:$0xff]
    %v907 = vld [vmem:[%s1 + $0x18e0] sm:$0xff]
    %v908 = vld [vmem:[%s1 + $0x18e8] sm:$0xff]
    %v909 = vld [vmem:[%s1 + $0x18f0] sm:$0xff]
    %v910 = vld [vmem:[%s1 + $0x18f8] sm:$0xff]
    %v911 = vld [vmem:[%s1 + $0x1900] sm:$0xff]
    %v912 = vld [vmem:[%s1 + $0x1908] sm:$0xff]
    %v913 = vld [vmem:[%s1 + $0x1910] sm:$0xff]
    %v914 = vld [vmem:[%s1 + $0x1918] sm:$0xff]
    %v915 = vld [vmem:[%s1 + $0x1920] sm:$0xff]
    %v916 = vld [vmem:[%s1 + $0x1928] sm:$0xff]
    %v917 = vld [vmem:[%s1 + $0x1930] sm:$0xff]
    %v918 = vld [vmem:[%s1 + $0x1938] sm:$0xff]
    %v919 = vld [vmem:[%s1 + $0x1940] sm:$0xff]
    %v920 = vld [vmem:[%s1 + $0x1948] sm:$0xff]
    %v921 = vld [vmem:[%s1 + $0x1950] sm:$0xff]
    %v922 = vld [vmem:[%s1 + $0x1958] sm:$0xff]
    %v923 = vld [vmem:[%s1 + $0x1960] sm:$0xff]
    %v924 = vld [vmem:[%s1 + $0x1968] sm:$0xff]
    %v925 = vld [vmem:[%s1 + $0x1970] sm:$0xff]
    %v926 = vld [vmem:[%s1 + $0x1978] sm:$0xff]
    %v927 = vld [vmem:[%s1 + $0x1980] sm:$0xff]
    %v928 = vld [vmem:[%s1 + $0x1988] sm:$0xff]
    %v929 = vld [vmem:[%s1 + $0x1990] sm:$0xff]
    %v930 = vld [vmem:[%s1 + $0x1998] sm:$0xff]
    %v931 = vld [vmem:[%s1 + $0x19a0] sm:$0xff]
    %v932 = vld [vmem:[%s1 + $0x19a8] sm:$0xff]
    %v933 = vld [vmem:[%s1 + $0x19b0] sm:$0xff]
    %v934 = vld [vmem:[%s1 + $0x19b8] sm:$0xff]
    %v935 = vld [vmem:[%s1 + $0x19c0] sm:$0xff]
    %v936 = vld [vmem:[%s1 + $0x19c8] sm:$0xff]
    %v937 = vld [vmem:[%s1 + $0x19d0] sm:$0xff]
    %v938 = vld [vmem:[%s1 + $0x19d8] sm:$0xff]
    %v939 = vld [vmem:[%s1 + $0x19e0] sm:$0xff]
    %v940 = vld [vmem:[%s1 + $0x19e8] sm:$0xff]
    %v941 = vld [vmem:[%s1 + $0x19f0] sm:$0xff]
    %v942 = vld [vmem:[%s1 + $0x19f8] sm:$0xff]
    %v943 = vld [vmem:[%s1 + $0x1a00] sm:$0xff]
    %v944 = vld [vmem:[%s1 + $0x1a08] sm:$0xff]
    %v945 = vld [vmem:[%s1 + $0x1a10] sm:$0xff]
    %v946 = vld [vmem:[%s1 + $0x1a18] sm:$0xff]
    %v947 = vld [vmem:[%s1 + $0x1a20] sm:$0xff]
    %v948 = vld [vmem:[%s1 + $0x1a28] sm:$0xff]
    %v949 = vld [vmem:[%s1 + $0x1a30] sm:$0xff]
    %v950 = vld [vmem:[%s1 + $0x1a38] sm:$0xff]
    %v951 = vld [vmem:[%s1 + $0x1a40] sm:$0xff]
    %v952 = vld [vmem:[%s1 + $0x1a48] sm:$0xff]
    %v953 = vld [vmem:[%s1 + $0x1a50] sm:$0xff]
    %v954 = vld [vmem:[%s1 + $0x1a58] sm:$0xff]
    %v955 = vld [vmem:[%s1 + $0x1a60] sm:$0xff]
    %v956 = vld [vmem:[%s1 + $0x1a68] sm:$0xff]
    %v957 = vld [vmem:[%s1 + $0x1a70] sm:$0xff]
    %v958 = vld [vmem:[%s1 + $0x1a78] sm:$0xff]
    %v959 = vld [vmem:[%s1 + $0x1a80] sm:$0xff]
    %v960 = vld [vmem:[%s1 + $0x1a88] sm:$0xff]
    %v961 = vld [vmem:[%s1 + $0x1a90] sm:$0xff]
    %v962 = vld [vmem:[%s1 + $0x1a98] sm:$0xff]
    %v963 = vld [vmem:[%s1 + $0x1aa0] sm:$0xff]
    %v964 = vld [vmem:[%s1 + $0x1aa8] sm:$0xff]
    %v965 = vld [vmem:[%s1 + $0x1ab0] sm:$0xff]
    %v966 = vld [vmem:[%s1 + $0x1ab8] sm:$0xff]
    %v967 = vld [vmem:[%s1 + $0x1ac0] sm:$0xff]
    %v968 = vld [vmem:[%s1 + $0x1ac8] sm:$0xff]
    %v969 = vld [vmem:[%s1 + $0x1ad0] sm:$0xff]
    %v970 = vld [vmem:[%s1 + $0x1ad8] sm:$0xff]
    %v971 = vld [vmem:[%s1 + $0x1ae0] sm:$0xff]
    %v972 = vld [vmem:[%s1 + $0x1ae8] sm:$0xff]
    %v973 = vld [vmem:[%s1 + $0x1af0] sm:$0xff]
    %v974 = vld [vmem:[%s1 + $0x1af8] sm:$0xff]
    %v975 = vld [vmem:[%s1 + $0x1b00] sm:$0xff]
    %v976 = vld [vmem:[%s1 + $0x1b08] sm:$0xff]
    %v977 = vld [vmem:[%s1 + $0x1b10] sm:$0xff]
    %v978 = vld [vmem:[%s1 + $0x1b18] sm:$0xff]
    %v979 = vld [vmem:[%s1 + $0x1b20] sm:$0xff]
    %v980 = vld [vmem:[%s1 + $0x1b28] sm:$0xff]
    %v981 = vld [vmem:[%s1 + $0x1b30] sm:$0xff]
    %v982 = vld [vmem:[%s1 + $0x1b38] sm:$0xff]
    %v983 = vld [vmem:[%s1 + $0x1b40] sm:$0xff]
    %v984 = vld [vmem:[%s1 + $0x1b48] sm:$0xff]
    %v985 = vld [vmem:[%s1 + $0x1b50] sm:$0xff]
    %v986 = vld [vmem:[%s1 + $0x1b58] sm:$0xff]
    %v987 = vld [vmem:[%s1 + $0x1b60] sm:$0xff]
    %v988 = vld [vmem:[%s1 + $0x1b68] sm:$0xff]
    %v989 = vld [vmem:[%s1 + $0x1b70] sm:$0xff]
    %v990 = vld [vmem:[%s1 + $0x1b78] sm:$0xff]
    %v991 = vld [vmem:[%s1 + $0x1b80] sm:$0xff]
    %v992 = vld [vmem:[%s1 + $0x1b88] sm:$0xff]
    %v993 = vld [vmem:[%s1 + $0x1b90] sm:$0xff]
    %v994 = vld [vmem:[%s1 + $0x1b98] sm:$0xff]
    %v995 = vld [vmem:[%s1 + $0x1ba0] sm:$0xff]
    %v996 = vld [vmem:[%s1 + $0x1ba8] sm:$0xff]
    %v997 = vld [vmem:[%s1 + $0x1bb0] sm:$0xff]
    %v998 = vld [vmem:[%s1 + $0x1bb8] sm:$0xff]
    %v999 = vld [vmem:[%s1 + $0x1bc0] sm:$0xff]
    %v1000 = vld [vmem:[%s1 + $0x1bc8] sm:$0xff]
    %v1001 = vld [vmem:[%s1 + $0x1bd0] sm:$0xff]
    %v1002 = vld [vmem:[%s1 + $0x1bd8] sm:$0xff]
    %v1003 = vld [vmem:[%s1 + $0x1be0] sm:$0xff]
    %v1004 = vld [vmem:[%s1 + $0x1be8] sm:$0xff]
    %v1005 = vld [vmem:[%s1 + $0x1bf0] sm:$0xff]
    %v1006 = vld [vmem:[%s1 + $0x1bf8] sm:$0xff]
    %v1007 = vld [vmem:[%s1 + $0x1c00] sm:$0xff]
    %v1008 = vld [vmem:[%s1 + $0x1c08] sm:$0xff]
    %v1009 = vld [vmem:[%s1 + $0x1c10] sm:$0xff]
    %v1010 = vld [vmem:[%s1 + $0x1c18] sm:$0xff]
    %v1011 = vld [vmem:[%s1 + $0x1c20] sm:$0xff]
    %v1012 = vld [vmem:[%s1 + $0x1c28] sm:$0xff]
    %v1013 = vld [vmem:[%s1 + $0x1c30] sm:$0xff]
    %v1014 = vld [vmem:[%s1 + $0x1c38] sm:$0xff]
    %v1015 = vld [vmem:[%s1 + $0x1c40] sm:$0xff]
    %v1016 = vld [vmem:[%s1 + $0x1c48] sm:$0xff]
    %v1017 = vld [vmem:[%s1 + $0x1c50] sm:$0xff]
    %v1018 = vld [vmem:[%s1 + $0x1c58] sm:$0xff]
    %v1019 = vld [vmem:[%s1 + $0x1c60] sm:$0xff]
    %v1020 = vld [vmem:[%s1 + $0x1c68] sm:$0xff]
    %v1021 = vld [vmem:[%s1 + $0x1c70] sm:$0xff]
    %v1022 = vld [vmem:[%s1 + $0x1c78] sm:$0xff]
    %v1023 = vld [vmem:[%s1 + $0x1c80] sm:$0xff]
    %v1024 = vld [vmem:[%s1 + $0x1c88] sm:$0xff]
    %v1025 = vld [vmem:[%s1 + $0x1c90] sm:$0xff]
    %v1026 = vld [vmem:[%s1 + $0x1c98] sm:$0xff]
    %v1027 = vld [vmem:[%s1 + $0x1ca0] sm:$0xff]
    %v1028 = vld [vmem:[%s1 + $0x1ca8] sm:$0xff]
    %v1029 = vld [vmem:[%s1 + $0x1cb0] sm:$0xff]
    %v1030 = vld [vmem:[%s1 + $0x1cb8] sm:$0xff]
    %v1031 = vld [vmem:[%s1 + $0x1cc0] sm:$0xff]
    %v1032 = vld [vmem:[%s1 + $0x1cc8] sm:$0xff]
    %v1033 = vld [vmem:[%s1 + $0x1cd0] sm:$0xff]
    %v1034 = vld [vmem:[%s1 + $0x1cd8] sm:$0xff]
    %v1035 = vld [vmem:[%s1 + $0x1ce0] sm:$0xff]
    %v1036 = vld [vmem:[%s1 + $0x1ce8] sm:$0xff]
    %v1037 = vld [vmem:[%s1 + $0x1cf0] sm:$0xff]
    %v1038 = vld [vmem:[%s1 + $0x1cf8] sm:$0xff]
    %v1039 = vld [vmem:[%s1 + $0x1d00] sm:$0xff]
    %v1040 = vld [vmem:[%s1 + $0x1d08] sm:$0xff]
    %v1041 = vld [vmem:[%s1 + $0x1d10] sm:$0xff]
    %v1042 = vld [vmem:[%s1 + $0x1d18] sm:$0xff]
    %v1043 = vld [vmem:[%s1 + $0x1d20] sm:$0xff]
    %v1044 = vld [vmem:[%s1 + $0x1d28] sm:$0xff]
    %v1045 = vld [vmem:[%s1 + $0x1d30] sm:$0xff]
    %v1046 = vld [vmem:[%s1 + $0x1d38] sm:$0xff]
    %v1047 = vld [vmem:[%s1 + $0x1d40] sm:$0xff]
    %v1048 = vld [vmem:[%s1 + $0x1d48] sm:$0xff]
    %v1049 = vld [vmem:[%s1 + $0x1d50] sm:$0xff]
    %v1050 = vld [vmem:[%s1 + $0x1d58] sm:$0xff]
    %v1051 = vld [vmem:[%s1 + $0x1d60] sm:$0xff]
    %v1052 = vld [vmem:[%s1 + $0x1d68] sm:$0xff]
    %v1053 = vld [vmem:[%s1 + $0x1d70] sm:$0xff]
    %v1054 = vld [vmem:[%s1 + $0x1d78] sm:$0xff]
    %v1055 = vld [vmem:[%s1 + $0x1d80] sm:$0xff]
    %v1056 = vld [vmem:[%s1 + $0x1d88] sm:$0xff]
    %v1057 = vld [vmem:[%s1 + $0x1d90] sm:$0xff]
    %v1058 = vld [vmem:[%s1 + $0x1d98] sm:$0xff]
    %v1059 = vld [vmem:[%s1 + $0x1da0] sm:$0xff]
    %v1060 = vld [vmem:[%s1 + $0x1da8] sm:$0xff]
    %v1061 = vld [vmem:[%s1 + $0x1db0] sm:$0xff]
    %v1062 = vld [vmem:[%s1 + $0x1db8] sm:$0xff]
    %v1063 = vld [vmem:[%s1 + $0x1dc0] sm:$0xff]
    %v1064 = vld [vmem:[%s1 + $0x1dc8] sm:$0xff]
    %v1065 = vld [vmem:[%s1 + $0x1dd0] sm:$0xff]
    %v1066 = vld [vmem:[%s1 + $0x1dd8] sm:$0xff]
    %v1067 = vld [vmem:[%s1 + $0x1de0] sm:$0xff]
    %v1068 = vld [vmem:[%s1 + $0x1de8] sm:$0xff]
    %v1069 = vld [vmem:[%s1 + $0x1df0] sm:$0xff]
    %v1070 = vld [vmem:[%s1 + $0x1df8] sm:$0xff]
    %v1071 = vld [vmem:[%s1 + $0x1e00] sm:$0xff]
    %v1072 = vld [vmem:[%s1 + $0x1e08] sm:$0xff]
    %v1073 = vld [vmem:[%s1 + $0x1e10] sm:$0xff]
    %v1074 = vld [vmem:[%s1 + $0x1e18] sm:$0xff]
    %v1075 = vld [vmem:[%s1 + $0x1e20] sm:$0xff]
    %v1076 = vld [vmem:[%s1 + $0x1e28] sm:$0xff]
    %v1077 = vld [vmem:[%s1 + $0x1e30] sm:$0xff]
    %v1078 = vld [vmem:[%s1 + $0x1e38] sm:$0xff]
    %v1079 = vld [vmem:[%s1 + $0x1e40] sm:$0xff]
    %v1080 = vld [vmem:[%s1 + $0x1e48] sm:$0xff]
    %v1081 = vld [vmem:[%s1 + $0x1e50] sm:$0xff]
    %v1082 = vld [vmem:[%s1 + $0x1e58] sm:$0xff]
    %v1083 = vld [vmem:[%s1 + $0x1e60] sm:$0xff]
    %v1084 = vld [vmem:[%s1 + $0x1e68] sm:$0xff]
    %v1085 = vld [vmem:[%s1 + $0x1e70] sm:$0xff]
    %v1086 = vld [vmem:[%s1 + $0x1e78] sm:$0xff]
    %v1087 = vld [vmem:[%s1 + $0x1e80] sm:$0xff]
    %v1088 = vld [vmem:[%s1 + $0x1e88] sm:$0xff]
    %v1089 = vld [vmem:[%s1 + $0x1e90] sm:$0xff]
    %v1090 = vld [vmem:[%s1 + $0x1e98] sm:$0xff]
    %v1091 = vld [vmem:[%s1 + $0x1ea0] sm:$0xff]
    %v1092 = vld [vmem:[%s1 + $0x1ea8] sm:$0xff]
    %v1093 = vld [vmem:[%s1 + $0x1eb0] sm:$0xff]
    %v1094 = vld [vmem:[%s1 + $0x1eb8] sm:$0xff]
    %v1095 = vld [vmem:[%s1 + $0x1ec0] sm:$0xff]
    %v1096 = vld [vmem:[%s1 + $0x1ec8] sm:$0xff]
    %v1097 = vld [vmem:[%s1 + $0x1ed0] sm:$0xff]
    %v1098 = vld [vmem:[%s1 + $0x1ed8] sm:$0xff]
    %v1099 = vld [vmem:[%s1 + $0x1ee0] sm:$0xff]
    %v1100 = vld [vmem:[%s1 + $0x1ee8] sm:$0xff]
    %v1101 = vld [vmem:[%s1 + $0x1ef0] sm:$0xff]
    %v1102 = vld [vmem:[%s1 + $0x1ef8] sm:$0xff]
    %v1103 = vld [vmem:[%s1 + $0x1f00] sm:$0xff]
    %v1104 = vld [vmem:[%s1 + $0x1f08] sm:$0xff]
    %v1105 = vld [vmem:[%s1 + $0x1f10] sm:$0xff]
    %v1106 = vld [vmem:[%s1 + $0x1f18] sm:$0xff]
    %v1107 = vld [vmem:[%s1 + $0x1f20] sm:$0xff]
    %v1108 = vld [vmem:[%s1 + $0x1f28] sm:$0xff]
    %v1109 = vld [vmem:[%s1 + $0x1f30] sm:$0xff]
    %v1110 = vld [vmem:[%s1 + $0x1f38] sm:$0xff]
    %v1111 = vld [vmem:[%s1 + $0x1f40] sm:$0xff]
    %v1112 = vld [vmem:[%s1 + $0x1f48] sm:$0xff]
    %v1113 = vld [vmem:[%s1 + $0x1f50] sm:$0xff]
    %v1114 = vld [vmem:[%s1 + $0x1f58] sm:$0xff]
    %v1115 = vld [vmem:[%s1 + $0x1f60] sm:$0xff]
    %v1116 = vld [vmem:[%s1 + $0x1f68] sm:$0xff]
    %v1117 = vld [vmem:[%s1 + $0x1f70] sm:$0xff]
    %v1118 = vld [vmem:[%s1 + $0x1f78] sm:$0xff]
    %v1119 = vld [vmem:[%s1 + $0x1f80] sm:$0xff]
    %v1120 = vld [vmem:[%s1 + $0x1f88] sm:$0xff]
    %v1121 = vld [vmem:[%s1 + $0x1f90] sm:$0xff]
    %v1122 = vld [vmem:[%s1 + $0x1f98] sm:$0xff]
    %v1123 = vld [vmem:[%s1 + $0x1fa0] sm:$0xff]
    %v1124 = vld [vmem:[%s1 + $0x1fa8] sm:$0xff]
    %v1125 = vld [vmem:[%s1 + $0x1fb0] sm:$0xff]
    %v1126 = vld [vmem:[%s1 + $0x1fb8] sm:$0xff]
    %v1127 = vld [vmem:[%s1 + $0x1fc0] sm:$0xff]
    %v1128 = vld [vmem:[%s1 + $0x1fc8] sm:$0xff]
    %v1129 = vld [vmem:[%s1 + $0x1fd0] sm:$0xff]
    %v1130 = vld [vmem:[%s1 + $0x1fd8] sm:$0xff]
    %v1131 = vld [vmem:[%s1 + $0x1fe0] sm:$0xff]
    %v1132 = vld [vmem:[%s1 + $0x1fe8] sm:$0xff]
    %v1133 = vld [vmem:[%s1 + $0x1ff0] sm:$0xff]
    %v1134 = vld [vmem:[%s1 + $0x1ff8] sm:$0xff]
    %v1135 = vld [vmem:[%s1 + $0x2000] sm:$0xff]
    %v1136 = vld [vmem:[%s1 + $0x2008] sm:$0xff]
    %v1137 = vld [vmem:[%s1 + $0x2010] sm:$0xff]
    %v1138 = vld [vmem:[%s1 + $0x2018] sm:$0xff]
    %v1139 = vld [vmem:[%s1 + $0x2020] sm:$0xff]
    %v1140 = vld [vmem:[%s1 + $0x2028] sm:$0xff]
    %v1141 = vld [vmem:[%s1 + $0x2030] sm:$0xff]
    %v1142 = vld [vmem:[%s1 + $0x2038] sm:$0xff]
    %v1143 = vld [vmem:[%s1 + $0x2040] sm:$0xff]
    %v1144 = vld [vmem:[%s1 + $0x2048] sm:$0xff]
    %v1145 = vld [vmem:[%s1 + $0x2050] sm:$0xff]
    %v1146 = vld [vmem:[%s1 + $0x2058] sm:$0xff]
    %v1147 = vld [vmem:[%s1 + $0x2060] sm:$0xff]
    %v1148 = vld [vmem:[%s1 + $0x2068] sm:$0xff]
    %v1149 = vld [vmem:[%s1 + $0x2070] sm:$0xff]
    %v1150 = vld [vmem:[%s1 + $0x2078] sm:$0xff]
    %v1151 = vld [vmem:[%s1 + $0x2080] sm:$0xff]
    %v1152 = vld [vmem:[%s1 + $0x2088] sm:$0xff]
    %v1153 = vld [vmem:[%s1 + $0x2090] sm:$0xff]
    %v1154 = vld [vmem:[%s1 + $0x2098] sm:$0xff]
    %v1155 = vld [vmem:[%s1 + $0x20a0] sm:$0xff]
    %v1156 = vld [vmem:[%s1 + $0x20a8] sm:$0xff]
    %v1157 = vld [vmem:[%s1 + $0x20b0] sm:$0xff]
    %v1158 = vld [vmem:[%s1 + $0x20b8] sm:$0xff]
    %v1159 = vld [vmem:[%s1 + $0x20c0] sm:$0xff]
    %v1160 = vld [vmem:[%s1 + $0x20c8] sm:$0xff]
    %v1161 = vld [vmem:[%s1 + $0x20d0] sm:$0xff]
    %v1162 = vld [vmem:[%s1 + $0x20d8] sm:$0xff]
    %v1163 = vld [vmem:[%s1 + $0x20e0] sm:$0xff]
    %v1164 = vld [vmem:[%s1 + $0x20e8] sm:$0xff]
    %v1165 = vld [vmem:[%s1 + $0x20f0] sm:$0xff]
    %v1166 = vld [vmem:[%s1 + $0x20f8] sm:$0xff]
    %v1167 = vld [vmem:[%s1 + $0x2100] sm:$0xff]
    %v1168 = vld [vmem:[%s1 + $0x2108] sm:$0xff]
    %v1169 = vld [vmem:[%s1 + $0x2110] sm:$0xff]
    %v1170 = vld [vmem:[%s1 + $0x2118] sm:$0xff]
    %v1171 = vld [vmem:[%s1 + $0x2120] sm:$0xff]
    %v1172 = vld [vmem:[%s1 + $0x2128] sm:$0xff]
    %v1173 = vld [vmem:[%s1 + $0x2130] sm:$0xff]
    %v1174 = vld [vmem:[%s1 + $0x2138] sm:$0xff]
    %v1175 = vld [vmem:[%s1 + $0x2140] sm:$0xff]
    %v1176 = vld [vmem:[%s1 + $0x2148] sm:$0xff]
    %v1177 = vld [vmem:[%s1 + $0x2150] sm:$0xff]
    %v1178 = vld [vmem:[%s1 + $0x2158] sm:$0xff]
    %v1179 = vld [vmem:[%s1 + $0x2160] sm:$0xff]
    %v1180 = vld [vmem:[%s1 + $0x2168] sm:$0xff]
    %v1181 = vld [vmem:[%s1 + $0x2170] sm:$0xff]
    %v1182 = vld [vmem:[%s1 + $0x2178] sm:$0xff]
    %v1183 = vld [vmem:[%s1 + $0x2180] sm:$0xff]
    %v1184 = vld [vmem:[%s1 + $0x2188] sm:$0xff]
    %v1185 = vld [vmem:[%s1 + $0x2190] sm:$0xff]
    %v1186 = vld [vmem:[%s1 + $0x2198] sm:$0xff]
    %v1187 = vld [vmem:[%s1 + $0x21a0] sm:$0xff]
    %v1188 = vld [vmem:[%s1 + $0x21a8] sm:$0xff]
    %v1189 = vld [vmem:[%s1 + $0x21b0] sm:$0xff]
    %v1190 = vld [vmem:[%s1 + $0x21b8] sm:$0xff]
    %v1191 = vld [vmem:[%s1 + $0x21c0] sm:$0xff]
    %v1192 = vld [vmem:[%s1 + $0x21c8] sm:$0xff]
    %v1193 = vld [vmem:[%s1 + $0x21d0] sm:$0xff]
    %v1194 = vld [vmem:[%s1 + $0x21d8] sm:$0xff]
    %v1195 = vld [vmem:[%s1 + $0x21e0] sm:$0xff]
    %v1196 = vld [vmem:[%s1 + $0x21e8] sm:$0xff]
    %v1197 = vld [vmem:[%s1 + $0x21f0] sm:$0xff]
    %v1198 = vld [vmem:[%s1 + $0x21f8] sm:$0xff]
    %v1199 = vld [vmem:[%s1 + $0x2200] sm:$0xff]
    %v1200 = vld [vmem:[%s1 + $0x2208] sm:$0xff]
    %v1201 = vld [vmem:[%s1 + $0x2210] sm:$0xff]
    %v1202 = vld [vmem:[%s1 + $0x2218] sm:$0xff]
    %v1203 = vld [vmem:[%s1 + $0x2220] sm:$0xff]
    %v1204 = vld [vmem:[%s1 + $0x2228] sm:$0xff]
    %v1205 = vld [vmem:[%s1 + $0x2230] sm:$0xff]
    %v1206 = vld [vmem:[%s1 + $0x2238] sm:$0xff]
    %v1207 = vld [vmem:[%s1 + $0x2240] sm:$0xff]
    %v1208 = vld [vmem:[%s1 + $0x2248] sm:$0xff]
    %v1209 = vld [vmem:[%s1 + $0x2250] sm:$0xff]
    %v1210 = vld [vmem:[%s1 + $0x2258] sm:$0xff]
    %v1211 = vld [vmem:[%s1 + $0x2260] sm:$0xff]
    %v1212 = vld [vmem:[%s1 + $0x2268] sm:$0xff]
    %v1213 = vld [vmem:[%s1 + $0x2270] sm:$0xff]
    %v1214 = vld [vmem:[%s1 + $0x2278] sm:$0xff]
    %v1215 = vld [vmem:[%s1 + $0x2280] sm:$0xff]
    %v1216 = vld [vmem:[%s1 + $0x2288] sm:$0xff]
    %v1217 = vld [vmem:[%s1 + $0x2290] sm:$0xff]
    %v1218 = vld [vmem:[%s1 + $0x2298] sm:$0xff]
    %v1219 = vld [vmem:[%s1 + $0x22a0] sm:$0xff]
    %v1220 = vld [vmem:[%s1 + $0x22a8] sm:$0xff]
    %v1221 = vld [vmem:[%s1 + $0x22b0] sm:$0xff]
    %v1222 = vld [vmem:[%s1 + $0x22b8] sm:$0xff]
    %v1223 = vld [vmem:[%s1 + $0x22c0] sm:$0xff]
    %v1224 = vld [vmem:[%s1 + $0x22c8] sm:$0xff]
    %v1225 = vld [vmem:[%s1 + $0x22d0] sm:$0xff]
    %v1226 = vld [vmem:[%s1 + $0x22d8] sm:$0xff]
    %v1227 = vld [vmem:[%s1 + $0x22e0] sm:$0xff]
    %v1228 = vld [vmem:[%s1 + $0x22e8] sm:$0xff]
    %v1229 = vld [vmem:[%s1 + $0x22f0] sm:$0xff]
    %v1230 = vld [vmem:[%s1 + $0x22f8] sm:$0xff]
    %v1231 = vld [vmem:[%s1 + $0x2300] sm:$0xff]
    %v1232 = vld [vmem:[%s1 + $0x2308] sm:$0xff]
    %v1233 = vld [vmem:[%s1 + $0x2310] sm:$0xff]
    %v1234 = vld [vmem:[%s1 + $0x2318] sm:$0xff]
    %v1235 = vld [vmem:[%s1 + $0x2320] sm:$0xff]
    %v1236 = vld [vmem:[%s1 + $0x2328] sm:$0xff]
    %v1237 = vld [vmem:[%s1 + $0x2330] sm:$0xff]
    %v1238 = vld [vmem:[%s1 + $0x2338] sm:$0xff]
    %v1239 = vld [vmem:[%s1 + $0x2340] sm:$0xff]
    %v1240 = vld [vmem:[%s1 + $0x2348] sm:$0xff]
    %v1241 = vld [vmem:[%s1 + $0x2350] sm:$0xff]
    %v1242 = vld [vmem:[%s1 + $0x2358] sm:$0xff]
    %v1243 = vld [vmem:[%s1 + $0x2360] sm:$0xff]
    %v1244 = vld [vmem:[%s1 + $0x2368] sm:$0xff]
    %v1245 = vld [vmem:[%s1 + $0x2370] sm:$0xff]
    %v1246 = vld [vmem:[%s1 + $0x2378] sm:$0xff]
    %v1247 = vld [vmem:[%s1 + $0x2380] sm:$0xff]
    %v1248 = vld [vmem:[%s1 + $0x2388] sm:$0xff]
    %v1249 = vld [vmem:[%s1 + $0x2390] sm:$0xff]
    %v1250 = vld [vmem:[%s1 + $0x2398] sm:$0xff]
    %v1251 = vld [vmem:[%s1 + $0x23a0] sm:$0xff]
    %v1252 = vld [vmem:[%s1 + $0x23a8] sm:$0xff]
    %v1253 = vld [vmem:[%s1 + $0x23b0] sm:$0xff]
    %v1254 = vld [vmem:[%s1 + $0x23b8] sm:$0xff]
    %v1255 = vld [vmem:[%s1 + $0x23c0] sm:$0xff]
    %v1256 = vld [vmem:[%s1 + $0x23c8] sm:$0xff]
    %v1257 = vld [vmem:[%s1 + $0x23d0] sm:$0xff]
    %v1258 = vld [vmem:[%s1 + $0x23d8] sm:$0xff]
    %v1259 = vld [vmem:[%s1 + $0x23e0] sm:$0xff]
    %v1260 = vld [vmem:[%s1 + $0x23e8] sm:$0xff]
    %v1261 = vld [vmem:[%s1 + $0x23f0] sm:$0xff]
    %v1262 = vld [vmem:[%s1 + $0x23f8] sm:$0xff]
    %v1263 = vld [vmem:[%s1 + $0x2400] sm:$0xff]
    %v1264 = vld [vmem:[%s1 + $0x2408] sm:$0xff]
    %v1265 = vld [vmem:[%s1 + $0x2410] sm:$0xff]
    %v1266 = vld [vmem:[%s1 + $0x2418] sm:$0xff]
    %v1267 = vld [vmem:[%s1 + $0x2420] sm:$0xff]
    %v1268 = vld [vmem:[%s1 + $0x2428] sm:$0xff]
    %v1269 = vld [vmem:[%s1 + $0x2430] sm:$0xff]
    %v1270 = vld [vmem:[%s1 + $0x2438] sm:$0xff]
    %v1271 = vld [vmem:[%s1 + $0x2440] sm:$0xff]
    %v1272 = vld [vmem:[%s1 + $0x2448] sm:$0xff]
    %v1273 = vld [vmem:[%s1 + $0x2450] sm:$0xff]
    %v1274 = vld [vmem:[%s1 + $0x2458] sm:$0xff]
    %v1275 = vld [vmem:[%s1 + $0x2460] sm:$0xff]
    %v1276 = vld [vmem:[%s1 + $0x2468] sm:$0xff]
    %v1277 = vld [vmem:[%s1 + $0x2470] sm:$0xff]
    %v1278 = vld [vmem:[%s1 + $0x2478] sm:$0xff]
    %v1279 = vld [vmem:[%s1 + $0x2480] sm:$0xff]
    %v1280 = vld [vmem:[%s1 + $0x2488] sm:$0xff]
    %v1281 = vld [vmem:[%s1 + $0x2490] sm:$0xff]
    %v1282 = vld [vmem:[%s1 + $0x2498] sm:$0xff]
    %v1283 = vld [vmem:[%s1 + $0x24a0] sm:$0xff]
    %v1284 = vld [vmem:[%s1 + $0x24a8] sm:$0xff]
    %v1285 = vld [vmem:[%s1 + $0x24b0] sm:$0xff]
    %v1286 = vld [vmem:[%s1 + $0x24b8] sm:$0xff]
    %v1287 = vld [vmem:[%s1 + $0x24c0] sm:$0xff]
    %v1288 = vld [vmem:[%s1 + $0x24c8] sm:$0xff]
    %v1289 = vld [vmem:[%s1 + $0x24d0] sm:$0xff]
    %v1290 = vld [vmem:[%s1 + $0x24d8] sm:$0xff]
    %v1291 = vld [vmem:[%s1 + $0x24e0] sm:$0xff]
    %v1292 = vld [vmem:[%s1 + $0x24e8] sm:$0xff]
    %v1293 = vld [vmem:[%s1 + $0x24f0] sm:$0xff]
    %v1294 = vld [vmem:[%s1 + $0x24f8] sm:$0xff]
    %v1295 = vld [vmem:[%s1 + $0x2500] sm:$0xff]
    %v1296 = vld [vmem:[%s1 + $0x2508] sm:$0xff]
    %v1297 = vld [vmem:[%s1 + $0x2510] sm:$0xff]
    %v1298 = vld [vmem:[%s1 + $0x2518] sm:$0xff]
    %v1299 = vld [vmem:[%s1 + $0x2520] sm:$0xff]
    %v1300 = vld [vmem:[%s1 + $0x2528] sm:$0xff]
    %v1301 = vld [vmem:[%s1 + $0x2530] sm:$0xff]
    %v1302 = vld [vmem:[%s1 + $0x2538] sm:$0xff]
    %v1303 = vld [vmem:[%s1 + $0x2540] sm:$0xff]
    %v1304 = vld [vmem:[%s1 + $0x2548] sm:$0xff]
    %v1305 = vld [vmem:[%s1 + $0x2550] sm:$0xff]
    %v1306 = vld [vmem:[%s1 + $0x2558] sm:$0xff]
    %v1307 = vld [vmem:[%s1 + $0x2560] sm:$0xff]
    %v1308 = vld [vmem:[%s1 + $0x2568] sm:$0xff]
    %v1309 = vld [vmem:[%s1 + $0x2570] sm:$0xff]
    %v1310 = vld [vmem:[%s1 + $0x2578] sm:$0xff]
    %v1311 = vld [vmem:[%s1 + $0x2580] sm:$0xff]
    %v1312 = vld [vmem:[%s1 + $0x2588] sm:$0xff]
    %v1313 = vld [vmem:[%s1 + $0x2590] sm:$0xff]
    %v1314 = vld [vmem:[%s1 + $0x2598] sm:$0xff]
    %v1315 = vld [vmem:[%s1 + $0x25a0] sm:$0xff]
    %v1316 = vld [vmem:[%s1 + $0x25a8] sm:$0xff]
    %v1317 = vld [vmem:[%s1 + $0x25b0] sm:$0xff]
    %v1318 = vld [vmem:[%s1 + $0x25b8] sm:$0xff]
    %v1319 = vld [vmem:[%s1 + $0x25c0] sm:$0xff]
    %v1320 = vld [vmem:[%s1 + $0x25c8] sm:$0xff]
    %v1321 = vld [vmem:[%s1 + $0x25d0] sm:$0xff]
    %v1322 = vld [vmem:[%s1 + $0x25d8] sm:$0xff]
    %v1323 = vld [vmem:[%s1 + $0x25e0] sm:$0xff]
    %v1324 = vld [vmem:[%s1 + $0x25e8] sm:$0xff]
    %v1325 = vld [vmem:[%s1 + $0x25f0] sm:$0xff]
    %v1326 = vld [vmem:[%s1 + $0x25f8] sm:$0xff]
    %v1327 = vld [vmem:[%s1 + $0x2600] sm:$0xff]
    %v1328 = vld [vmem:[%s1 + $0x2608] sm:$0xff]
    %v1329 = vld [vmem:[%s1 + $0x2610] sm:$0xff]
    %v1330 = vld [vmem:[%s1 + $0x2618] sm:$0xff]
    %v1331 = vld [vmem:[%s1 + $0x2620] sm:$0xff]
    %v1332 = vld [vmem:[%s1 + $0x2628] sm:$0xff]
    %v1333 = vld [vmem:[%s1 + $0x2630] sm:$0xff]
    %v1334 = vld [vmem:[%s1 + $0x2638] sm:$0xff]
    %v1335 = vld [vmem:[%s1 + $0x2640] sm:$0xff]
    %v1336 = vld [vmem:[%s1 + $0x2648] sm:$0xff]
    %v1337 = vld [vmem:[%s1 + $0x2650] sm:$0xff]
    %v1338 = vld [vmem:[%s1 + $0x2658] sm:$0xff]
    %v1339 = vld [vmem:[%s1 + $0x2660] sm:$0xff]
    %v1340 = vld [vmem:[%s1 + $0x2668] sm:$0xff]
    %v1341 = vld [vmem:[%s1 + $0x2670] sm:$0xff]
    %v1342 = vld [vmem:[%s1 + $0x2678] sm:$0xff]
    %v1343 = vld [vmem:[%s1 + $0x2680] sm:$0xff]
    %v1344 = vld [vmem:[%s1 + $0x2688] sm:$0xff]
    %v1345 = vld [vmem:[%s1 + $0x2690] sm:$0xff]
    %v1346 = vld [vmem:[%s1 + $0x2698] sm:$0xff]
    %v1347 = vld [vmem:[%s1 + $0x26a0] sm:$0xff]
    %v1348 = vld [vmem:[%s1 + $0x26a8] sm:$0xff]
    %v1349 = vld [vmem:[%s1 + $0x26b0] sm:$0xff]
    %v1350 = vld [vmem:[%s1 + $0x26b8] sm:$0xff]
    %v1351 = vld [vmem:[%s1 + $0x26c0] sm:$0xff]
    %v1352 = vld [vmem:[%s1 + $0x26c8] sm:$0xff]
    %v1353 = vld [vmem:[%s1 + $0x26d0] sm:$0xff]
    %v1354 = vld [vmem:[%s1 + $0x26d8] sm:$0xff]
    %v1355 = vld [vmem:[%s1 + $0x26e0] sm:$0xff]
    %v1356 = vld [vmem:[%s1 + $0x26e8] sm:$0xff]
    %v1357 = vld [vmem:[%s1 + $0x26f0] sm:$0xff]
    %v1358 = vld [vmem:[%s1 + $0x26f8] sm:$0xff]
    %v1359 = vld [vmem:[%s1 + $0x2700] sm:$0xff]
    %v1360 = vld [vmem:[%s1 + $0x2708] sm:$0xff]
    %v1361 = vld [vmem:[%s1 + $0x2710] sm:$0xff]
    %v1362 = vld [vmem:[%s1 + $0x2718] sm:$0xff]
    %v1363 = vld [vmem:[%s1 + $0x2720] sm:$0xff]
    %v1364 = vld [vmem:[%s1 + $0x2728] sm:$0xff]
    %v1365 = vld [vmem:[%s1 + $0x2730] sm:$0xff]
    %v1366 = vld [vmem:[%s1 + $0x2738] sm:$0xff]
    %v1367 = vld [vmem:[%s1 + $0x2740] sm:$0xff]
    %v1368 = vld [vmem:[%s1 + $0x2748] sm:$0xff]
    %v1369 = vld [vmem:[%s1 + $0x2750] sm:$0xff]
    %v1370 = vld [vmem:[%s1 + $0x2758] sm:$0xff]
    %v1371 = vld [vmem:[%s1 + $0x2760] sm:$0xff]
    %v1372 = vld [vmem:[%s1 + $0x2768] sm:$0xff]
    %v1373 = vld [vmem:[%s1 + $0x2770] sm:$0xff]
    %v1374 = vld [vmem:[%s1 + $0x2778] sm:$0xff]
    %v1375 = vld [vmem:[%s1 + $0x2780] sm:$0xff]
    %v1376 = vld [vmem:[%s1 + $0x2788] sm:$0xff]
    %v1377 = vld [vmem:[%s1 + $0x2790] sm:$0xff]
    %v1378 = vld [vmem:[%s1 + $0x2798] sm:$0xff]
    %v1379 = vld [vmem:[%s1 + $0x27a0] sm:$0xff]
    %v1380 = vld [vmem:[%s1 + $0x27a8] sm:$0xff]
    %v1381 = vld [vmem:[%s1 + $0x27b0] sm:$0xff]
    %v1382 = vld [vmem:[%s1 + $0x27b8] sm:$0xff]
    %v1383 = vld [vmem:[%s1 + $0x27c0] sm:$0xff]
    %v1384 = vld [vmem:[%s1 + $0x27c8] sm:$0xff]
    %v1385 = vld [vmem:[%s1 + $0x27d0] sm:$0xff]
    %v1386 = vld [vmem:[%s1 + $0x27d8] sm:$0xff]
    %v1387 = vld [vmem:[%s1 + $0x27e0] sm:$0xff]
    %v1388 = vld [vmem:[%s1 + $0x27e8] sm:$0xff]
    %v1389 = vld [vmem:[%s1 + $0x27f0] sm:$0xff]
    %v1390 = vld [vmem:[%s1 + $0x27f8] sm:$0xff]
    %v1391 = vld [vmem:[%s1 + $0x2800] sm:$0xff]
    %v1392 = vld [vmem:[%s1 + $0x2808] sm:$0xff]
    %v1393 = vld [vmem:[%s1 + $0x2810] sm:$0xff]
    %v1394 = vld [vmem:[%s1 + $0x2818] sm:$0xff]
    %v1395 = vld [vmem:[%s1 + $0x2820] sm:$0xff]
    %v1396 = vld [vmem:[%s1 + $0x2828] sm:$0xff]
    %v1397 = vld [vmem:[%s1 + $0x2830] sm:$0xff]
    %v1398 = vld [vmem:[%s1 + $0x2838] sm:$0xff]
    %v1399 = vld [vmem:[%s1 + $0x2840] sm:$0xff]
    %v1400 = vld [vmem:[%s1 + $0x2848] sm:$0xff]
    %v1401 = vld [vmem:[%s1 + $0x2850] sm:$0xff]
    %v1402 = vld [vmem:[%s1 + $0x2858] sm:$0xff]
    %v1403 = vld [vmem:[%s1 + $0x2860] sm:$0xff]
    %v1404 = vld [vmem:[%s1 + $0x2868] sm:$0xff]
    %v1405 = vld [vmem:[%s1 + $0x2870] sm:$0xff]
    %v1406 = vld [vmem:[%s1 + $0x2878] sm:$0xff]
    %v1407 = vld [vmem:[%s1 + $0x2880] sm:$0xff]
    %v1408 = vld [vmem:[%s1 + $0x2888] sm:$0xff]
    %v1409 = vld [vmem:[%s1 + $0x2890] sm:$0xff]
    %v1410 = vld [vmem:[%s1 + $0x2898] sm:$0xff]
    %v1411 = vld [vmem:[%s1 + $0x28a0] sm:$0xff]
    %v1412 = vld [vmem:[%s1 + $0x28a8] sm:$0xff]
    %v1413 = vld [vmem:[%s1 + $0x28b0] sm:$0xff]
    %v1414 = vld [vmem:[%s1 + $0x28b8] sm:$0xff]
    %v1415 = vld [vmem:[%s1 + $0x28c0] sm:$0xff]
    %v1416 = vld [vmem:[%s1 + $0x28c8] sm:$0xff]
    %v1417 = vld [vmem:[%s1 + $0x28d0] sm:$0xff]
    %v1418 = vld [vmem:[%s1 + $0x28d8] sm:$0xff]
    %v1419 = vld [vmem:[%s1 + $0x28e0] sm:$0xff]
    %v1420 = vld [vmem:[%s1 + $0x28e8] sm:$0xff]
    %v1421 = vld [vmem:[%s1 + $0x28f0] sm:$0xff]
    %v1422 = vld [vmem:[%s1 + $0x28f8] sm:$0xff]
    %v1423 = vld [vmem:[%s1 + $0x2900] sm:$0xff]
    %v1424 = vld [vmem:[%s1 + $0x2908] sm:$0xff]
    %v1425 = vld [vmem:[%s1 + $0x2910] sm:$0xff]
    %v1426 = vld [vmem:[%s1 + $0x2918] sm:$0xff]
    %v1427 = vld [vmem:[%s1 + $0x2920] sm:$0xff]
    %v1428 = vld [vmem:[%s1 + $0x2928] sm:$0xff]
    %v1429 = vld [vmem:[%s1 + $0x2930] sm:$0xff]
    %v1430 = vld [vmem:[%s1 + $0x2938] sm:$0xff]
    %v1431 = vld [vmem:[%s1 + $0x2940] sm:$0xff]
    %v1432 = vld [vmem:[%s1 + $0x2948] sm:$0xff]
    %v1433 = vld [vmem:[%s1 + $0x2950] sm:$0xff]
    %v1434 = vld [vmem:[%s1 + $0x2958] sm:$0xff]
    %v1435 = vld [vmem:[%s1 + $0x2960] sm:$0xff]
    %v1436 = vld [vmem:[%s1 + $0x2968] sm:$0xff]
    %v1437 = vld [vmem:[%s1 + $0x2970] sm:$0xff]
    %v1438 = vld [vmem:[%s1 + $0x2978] sm:$0xff]
    %v1439 = vld [vmem:[%s1 + $0x2980] sm:$0xff]
    %v1440 = vld [vmem:[%s1 + $0x2988] sm:$0xff]
    %v1441 = vld [vmem:[%s1 + $0x2990] sm:$0xff]
    %v1442 = vld [vmem:[%s1 + $0x2998] sm:$0xff]
    %v1443 = vld [vmem:[%s1 + $0x29a0] sm:$0xff]
    %v1444 = vld [vmem:[%s1 + $0x29a8] sm:$0xff]
    %v1445 = vld [vmem:[%s1 + $0x29b0] sm:$0xff]
    %v1446 = vld [vmem:[%s1 + $0x29b8] sm:$0xff]
    %v1447 = vld [vmem:[%s1 + $0x29c0] sm:$0xff]
    %v1448 = vld [vmem:[%s1 + $0x29c8] sm:$0xff]
    %v1449 = vld [vmem:[%s1 + $0x29d0] sm:$0xff]
    %v1450 = vld [vmem:[%s1 + $0x29d8] sm:$0xff]
    %v1451 = vld [vmem:[%s1 + $0x29e0] sm:$0xff]
    %v1452 = vld [vmem:[%s1 + $0x29e8] sm:$0xff]
    %v1453 = vld [vmem:[%s1 + $0x29f0] sm:$0xff]
    %v1454 = vld [vmem:[%s1 + $0x29f8] sm:$0xff]
    %v1455 = vld [vmem:[%s1 + $0x2a00] sm:$0xff]
    %v1456 = vld [vmem:[%s1 + $0x2a08] sm:$0xff]
    %v1457 = vld [vmem:[%s1 + $0x2a10] sm:$0xff]
    %v1458 = vld [vmem:[%s1 + $0x2a18] sm:$0xff]
    %v1459 = vld [vmem:[%s1 + $0x2a20] sm:$0xff]
    %v1460 = vld [vmem:[%s1 + $0x2a28] sm:$0xff]
    %v1461 = vld [vmem:[%s1 + $0x2a30] sm:$0xff]
    %v1462 = vld [vmem:[%s1 + $0x2a38] sm:$0xff]
    %v1463 = vld [vmem:[%s1 + $0x2a40] sm:$0xff]
    %v1464 = vld [vmem:[%s1 + $0x2a48] sm:$0xff]
    %v1465 = vld [vmem:[%s1 + $0x2a50] sm:$0xff]
    %v1466 = vld [vmem:[%s1 + $0x2a58] sm:$0xff]
    %v1467 = vld [vmem:[%s1 + $0x2a60] sm:$0xff]
    %v1468 = vld [vmem:[%s1 + $0x2a68] sm:$0xff]
    %v1469 = vld [vmem:[%s1 + $0x2a70] sm:$0xff]
    %v1470 = vld [vmem:[%s1 + $0x2a78] sm:$0xff]
    %v1471 = vld [vmem:[%s1 + $0x2a80] sm:$0xff]
    %v1472 = vld [vmem:[%s1 + $0x2a88] sm:$0xff]
    %v1473 = vld [vmem:[%s1 + $0x2a90] sm:$0xff]
    %v1474 = vld [vmem:[%s1 + $0x2a98] sm:$0xff]
    %v1475 = vld [vmem:[%s1 + $0x2aa0] sm:$0xff]
    %v1476 = vld [vmem:[%s1 + $0x2aa8] sm:$0xff]
    %v1477 = vld [vmem:[%s1 + $0x2ab0] sm:$0xff]
    %v1478 = vld [vmem:[%s1 + $0x2ab8] sm:$0xff]
    %v1479 = vld [vmem:[%s1 + $0x2ac0] sm:$0xff]
    %v1480 = vld [vmem:[%s1 + $0x2ac8] sm:$0xff]
    %v1481 = vld [vmem:[%s1 + $0x2ad0] sm:$0xff]
    %v1482 = vld [vmem:[%s1 + $0x2ad8] sm:$0xff]
    %v1483 = vld [vmem:[%s1 + $0x2ae0] sm:$0xff]
    %v1484 = vld [vmem:[%s1 + $0x2ae8] sm:$0xff]
    %v1485 = vld [vmem:[%s1 + $0x2af0] sm:$0xff]
    %v1486 = vld [vmem:[%s1 + $0x2af8] sm:$0xff]
    %v1487 = vld [vmem:[%s1 + $0x2b00] sm:$0xff]
    %v1488 = vld [vmem:[%s1 + $0x2b08] sm:$0xff]
    %v1489 = vld [vmem:[%s1 + $0x2b10] sm:$0xff]
    %v1490 = vld [vmem:[%s1 + $0x2b18] sm:$0xff]
    %v1491 = vld [vmem:[%s1 + $0x2b20] sm:$0xff]
    %v1492 = vld [vmem:[%s1 + $0x2b28] sm:$0xff]
    %v1493 = vld [vmem:[%s1 + $0x2b30] sm:$0xff]
    %v1494 = vld [vmem:[%s1 + $0x2b38] sm:$0xff]
    %v1495 = vld [vmem:[%s1 + $0x2b40] sm:$0xff]
    %v1496 = vld [vmem:[%s1 + $0x2b48] sm:$0xff]
    %v1497 = vld [vmem:[%s1 + $0x2b50] sm:$0xff]
    %v1498 = vld [vmem:[%s1 + $0x2b58] sm:$0xff]
    %v1499 = vld [vmem:[%s1 + $0x2b60] sm:$0xff]
    %v1500 = vld [vmem:[%s1 + $0x2b68] sm:$0xff]
    %v1501 = vld [vmem:[%s1 + $0x2b70] sm:$0xff]
    %v1502 = vld [vmem:[%s1 + $0x2b78] sm:$0xff]
    %v1503 = vld [vmem:[%s1 + $0x2b80] sm:$0xff]
    %v1504 = vld [vmem:[%s1 + $0x2b88] sm:$0xff]
    %v1505 = vld [vmem:[%s1 + $0x2b90] sm:$0xff]
    %v1506 = vld [vmem:[%s1 + $0x2b98] sm:$0xff]
    %v1507 = vld [vmem:[%s1 + $0x2ba0] sm:$0xff]
    %v1508 = vld [vmem:[%s1 + $0x2ba8] sm:$0xff]
    %v1509 = vld [vmem:[%s1 + $0x2bb0] sm:$0xff]
    %v1510 = vld [vmem:[%s1 + $0x2bb8] sm:$0xff]
    %v1511 = vld [vmem:[%s1 + $0x2bc0] sm:$0xff]
    %v1512 = vld [vmem:[%s1 + $0x2bc8] sm:$0xff]
    %v1513 = vld [vmem:[%s1 + $0x2bd0] sm:$0xff]
    %v1514 = vld [vmem:[%s1 + $0x2bd8] sm:$0xff]
    %v1515 = vld [vmem:[%s1 + $0x2be0] sm:$0xff]
    %v1516 = vld [vmem:[%s1 + $0x2be8] sm:$0xff]
    %v1517 = vld [vmem:[%s1 + $0x2bf0] sm:$0xff]
    %v1518 = vld [vmem:[%s1 + $0x2bf8] sm:$0xff]
    %v1519 = vld [vmem:[%s1 + $0x2c00] sm:$0xff]
    %v1520 = vld [vmem:[%s1 + $0x2c08] sm:$0xff]
    %v1521 = vld [vmem:[%s1 + $0x2c10] sm:$0xff]
    %v1522 = vld [vmem:[%s1 + $0x2c18] sm:$0xff]
    %v1523 = vld [vmem:[%s1 + $0x2c20] sm:$0xff]
    %v1524 = vld [vmem:[%s1 + $0x2c28] sm:$0xff]
    %v1525 = vld [vmem:[%s1 + $0x2c30] sm:$0xff]
    %v1526 = vld [vmem:[%s1 + $0x2c38] sm:$0xff]
    %v1527 = vld [vmem:[%s1 + $0x2c40] sm:$0xff]
    %v1528 = vld [vmem:[%s1 + $0x2c48] sm:$0xff]
    %v1529 = vld [vmem:[%s1 + $0x2c50] sm:$0xff]
    %v1530 = vld [vmem:[%s1 + $0x2c58] sm:$0xff]
    %v1531 = vld [vmem:[%s1 + $0x2c60] sm:$0xff]
    %v1532 = vld [vmem:[%s1 + $0x2c68] sm:$0xff]
    %v1533 = vld [vmem:[%s1 + $0x2c70] sm:$0xff]
    %v1534 = vld [vmem:[%s1 + $0x2c78] sm:$0xff]
    %v1535 = vld [vmem:[%s1 + $0x2c80] sm:$0xff]
    %v1536 = vld [vmem:[%s1 + $0x2c88] sm:$0xff]
    %v1537 = vld [vmem:[%s1 + $0x2c90] sm:$0xff]
    %v1538 = vld [vmem:[%s1 + $0x2c98] sm:$0xff]
    %v1539 = vld [vmem:[%s1 + $0x2ca0] sm:$0xff]
    %v1540 = vld [vmem:[%s1 + $0x2ca8] sm:$0xff]
    %v1541 = vld [vmem:[%s1 + $0x2cb0] sm:$0xff]
    %v1542 = vld [vmem:[%s1 + $0x2cb8] sm:$0xff]
    %v1543 = vld [vmem:[%s1 + $0x2cc0] sm:$0xff]
    %v1544 = vld [vmem:[%s1 + $0x2cc8] sm:$0xff]
    %v1545 = vld [vmem:[%s1 + $0x2cd0] sm:$0xff]
    %v1546 = vld [vmem:[%s1 + $0x2cd8] sm:$0xff]
    %v1547 = vld [vmem:[%s1 + $0x2ce0] sm:$0xff]
    %v1548 = vld [vmem:[%s1 + $0x2ce8] sm:$0xff]
    %v1549 = vld [vmem:[%s1 + $0x2cf0] sm:$0xff]
    %v1550 = vld [vmem:[%s1 + $0x2cf8] sm:$0xff]
    %v1551 = vld [vmem:[%s1 + $0x2d00] sm:$0xff]
    %v1552 = vld [vmem:[%s1 + $0x2d08] sm:$0xff]
    %v1553 = vld [vmem:[%s1 + $0x2d10] sm:$0xff]
    %v1554 = vld [vmem:[%s1 + $0x2d18] sm:$0xff]
    %v1555 = vld [vmem:[%s1 + $0x2d20] sm:$0xff]
    %v1556 = vld [vmem:[%s1 + $0x2d28] sm:$0xff]
    %v1557 = vld [vmem:[%s1 + $0x2d30] sm:$0xff]
    %v1558 = vld [vmem:[%s1 + $0x2d38] sm:$0xff]
    %v1559 = vld [vmem:[%s1 + $0x2d40] sm:$0xff]
    %v1560 = vld [vmem:[%s1 + $0x2d48] sm:$0xff]
    %v1561 = vld [vmem:[%s1 + $0x2d50] sm:$0xff]
    %v1562 = vld [vmem:[%s1 + $0x2d58] sm:$0xff]
    %v1563 = vld [vmem:[%s1 + $0x2d60] sm:$0xff]
    %v1564 = vld [vmem:[%s1 + $0x2d68] sm:$0xff]
    %v1565 = vld [vmem:[%s1 + $0x2d70] sm:$0xff]
    %v1566 = vld [vmem:[%s1 + $0x2d78] sm:$0xff]
    %v1567 = vld [vmem:[%s1 + $0x2d80] sm:$0xff]
    %v1568 = vld [vmem:[%s1 + $0x2d88] sm:$0xff]
    %v1569 = vld [vmem:[%s1 + $0x2d90] sm:$0xff]
    %v1570 = vld [vmem:[%s1 + $0x2d98] sm:$0xff]
    %v1571 = vld [vmem:[%s1 + $0x2da0] sm:$0xff]
    %v1572 = vld [vmem:[%s1 + $0x2da8] sm:$0xff]
    %v1573 = vld [vmem:[%s1 + $0x2db0] sm:$0xff]
    %v1574 = vld [vmem:[%s1 + $0x2db8] sm:$0xff]
    %v1575 = vld [vmem:[%s1 + $0x2dc0] sm:$0xff]
    %v1576 = vld [vmem:[%s1 + $0x2dc8] sm:$0xff]
    %v1577 = vld [vmem:[%s1 + $0x2dd0] sm:$0xff]
    %v1578 = vld [vmem:[%s1 + $0x2dd8] sm:$0xff]
    %v1579 = vld [vmem:[%s1 + $0x2de0] sm:$0xff]
    %v1580 = vld [vmem:[%s1 + $0x2de8] sm:$0xff]
    %v1581 = vld [vmem:[%s1 + $0x2df0] sm:$0xff]
    %v1582 = vld [vmem:[%s1 + $0x2df8] sm:$0xff]
    %v1583 = vld [vmem:[%s1 + $0x2e00] sm:$0xff]
    %v1584 = vld [vmem:[%s1 + $0x2e08] sm:$0xff]
    %v1585 = vld [vmem:[%s1 + $0x2e10] sm:$0xff]
    %v1586 = vld [vmem:[%s1 + $0x2e18] sm:$0xff]
    %v1587 = vld [vmem:[%s1 + $0x2e20] sm:$0xff]
    %v1588 = vld [vmem:[%s1 + $0x2e28] sm:$0xff]
    %v1589 = vld [vmem:[%s1 + $0x2e30] sm:$0xff]
    %v1590 = vld [vmem:[%s1 + $0x2e38] sm:$0xff]
    %v1591 = vld [vmem:[%s1 + $0x2e40] sm:$0xff]
    %v1592 = vld [vmem:[%s1 + $0x2e48] sm:$0xff]
    %v1593 = vld [vmem:[%s1 + $0x2e50] sm:$0xff]
    %v1594 = vld [vmem:[%s1 + $0x2e58] sm:$0xff]
    %v1595 = vld [vmem:[%s1 + $0x2e60] sm:$0xff]
    %v1596 = vld [vmem:[%s1 + $0x2e68] sm:$0xff]
    %v1597 = vld [vmem:[%s1 + $0x2e70] sm:$0xff]
    %v1598 = vld [vmem:[%s1 + $0x2e78] sm:$0xff]
    %v1599 = vld [vmem:[%s1 + $0x2e80] sm:$0xff]
    %v1600 = vld [vmem:[%s1 + $0x2e88] sm:$0xff]
    %v1601 = vld [vmem:[%s1 + $0x2e90] sm:$0xff]
    %v1602 = vld [vmem:[%s1 + $0x2e98] sm:$0xff]
    %v1603 = vld [vmem:[%s1 + $0x2ea0] sm:$0xff]
    %v1604 = vld [vmem:[%s1 + $0x2ea8] sm:$0xff]
    %v1605 = vld [vmem:[%s1 + $0x2eb0] sm:$0xff]
    %v1606 = vld [vmem:[%s1 + $0x2eb8] sm:$0xff]
    %v1607 = vld [vmem:[%s1 + $0x2ec0] sm:$0xff]
    %v1608 = vld [vmem:[%s1 + $0x2ec8] sm:$0xff]
    %v1609 = vld [vmem:[%s1 + $0x2ed0] sm:$0xff]
    %v1610 = vld [vmem:[%s1 + $0x2ed8] sm:$0xff]
    %v1611 = vld [vmem:[%s1 + $0x2ee0] sm:$0xff]
    %v1612 = vld [vmem:[%s1 + $0x2ee8] sm:$0xff]
    %v1613 = vld [vmem:[%s1 + $0x2ef0] sm:$0xff]
    %v1614 = vld [vmem:[%s1 + $0x2ef8] sm:$0xff]
    %v1615 = vld [vmem:[%s1 + $0x2f00] sm:$0xff]
    %v1616 = vld [vmem:[%s1 + $0x2f08] sm:$0xff]
    %v1617 = vld [vmem:[%s1 + $0x2f10] sm:$0xff]
    %v1618 = vld [vmem:[%s1 + $0x2f18] sm:$0xff]
    %v1619 = vld [vmem:[%s1 + $0x2f20] sm:$0xff]
    %v1620 = vld [vmem:[%s1 + $0x2f28] sm:$0xff]
    %v1621 = vld [vmem:[%s1 + $0x2f30] sm:$0xff]
    %v1622 = vld [vmem:[%s1 + $0x2f38] sm:$0xff]
    %v1623 = vld [vmem:[%s1 + $0x2f40] sm:$0xff]
    %v1624 = vld [vmem:[%s1 + $0x2f48] sm:$0xff]
    %v1625 = vld [vmem:[%s1 + $0x2f50] sm:$0xff]
    %v1626 = vld [vmem:[%s1 + $0x2f58] sm:$0xff]
    %v1627 = vld [vmem:[%s1 + $0x2f60] sm:$0xff]
    %v1628 = vld [vmem:[%s1 + $0x2f68] sm:$0xff]
    %v1629 = vld [vmem:[%s1 + $0x2f70] sm:$0xff]
    %v1630 = vld [vmem:[%s1 + $0x2f78] sm:$0xff]
    %v1631 = vld [vmem:[%s1 + $0x2f80] sm:$0xff]
    %v1632 = vld [vmem:[%s1 + $0x2f88] sm:$0xff]
    %v1633 = vld [vmem:[%s1 + $0x2f90] sm:$0xff]
    %v1634 = vld [vmem:[%s1 + $0x2f98] sm:$0xff]
    %v1635 = vld [vmem:[%s1 + $0x2fa0] sm:$0xff]
    %v1636 = vld [vmem:[%s1 + $0x2fa8] sm:$0xff]
    %v1637 = vld [vmem:[%s1 + $0x2fb0] sm:$0xff]
    %v1638 = vld [vmem:[%s1 + $0x2fb8] sm:$0xff]
    %v1639 = vld [vmem:[%s1 + $0x2fc0] sm:$0xff]
    %v1640 = vld [vmem:[%s1 + $0x2fc8] sm:$0xff]
    %v1641 = vld [vmem:[%s1 + $0x2fd0] sm:$0xff]
    %v1642 = vld [vmem:[%s1 + $0x2fd8] sm:$0xff]
    %v1643 = vld [vmem:[%s1 + $0x2fe0] sm:$0xff]
    %v1644 = vld [vmem:[%s1 + $0x2fe8] sm:$0xff]
    %v1645 = vld [vmem:[%s1 + $0x2ff0] sm:$0xff]
    %v1646 = vld [vmem:[%s1 + $0x2ff8] sm:$0xff]
    %v1647 = vld [vmem:[%s2] sm:$0x1]
    %v1649 = vlaneseq
    %v1650 = vshrl.u32 %v1649, 7
    %v1651 = vsub.s32 0, %v1650
    %v1652 = vrot.slane %v1647, %v1651
    %v1750 = vcombine.low %v15, %v39
    %v1751 = vcombine.high %v15, %v39
    %v1752 = vcombine.low %v63, %v87
    %v1753 = vcombine.high %v63, %v87
    %v1755 = vunpack.c.l.s4 1983009808
    %v1756 = vunpack.c.0.s8 %v1755
    %v1757 = vlaneseq
    %v1758 = vshrl.u32 %v1757, 7
    %v1759 = vsub.s32 %v1756, %v1758
    %v1760 = vrot.slane %v1750, %v1759
    %v1762 = vunpack.c.l.s4 1983009808
    %v1763 = vunpack.c.0.s8 %v1762
    %v1764 = vlaneseq
    %v1765 = vshrl.u32 %v1764, 7
    %v1766 = vsub.s32 %v1763, %v1765
    %v1767 = vrot.slane %v1751, %v1766
    %v1769 = vunpack.c.l.s4 1983009808
    %v1770 = vunpack.c.0.s8 %v1769
    %v1771 = vlaneseq
    %v1772 = vshrl.u32 %v1771, 7
    %v1773 = vsub.s32 %v1770, %v1772
    %v1774 = vrot.slane %v1752, %v1773
    %v1776 = vunpack.c.l.s4 1983009808
    %v1777 = vunpack.c.0.s8 %v1776
    %v1778 = vlaneseq
    %v1779 = vshrl.u32 %v1778, 7
    %v1780 = vsub.s32 %v1777, %v1779
    %v1781 = vrot.slane %v1753, %v1780
    %v1782 = vcombine.low %v1760, %v1774
    %v1783 = vcombine.high %v1760, %v1774
    %v1784 = vcombine.low %v1767, %v1781
    %v1785 = vcombine.high %v1767, %v1781
    %v1786 = vcombine.low %v16, %v40
    %v1787 = vcombine.high %v16, %v40
    %v1788 = vcombine.low %v64, %v88
    %v1789 = vcombine.high %v64, %v88
    %v1791 = vunpack.c.l.s4 1983009808
    %v1792 = vunpack.c.0.s8 %v1791
    %v1793 = vlaneseq
    %v1794 = vshrl.u32 %v1793, 7
    %v1795 = vsub.s32 %v1792, %v1794
    %v1796 = vrot.slane %v1786, %v1795
    %v1798 = vunpack.c.l.s4 1983009808
    %v1799 = vunpack.c.0.s8 %v1798
    %v1800 = vlaneseq
    %v1801 = vshrl.u32 %v1800, 7
    %v1802 = vsub.s32 %v1799, %v1801
    %v1803 = vrot.slane %v1787, %v1802
    %v1805 = vunpack.c.l.s4 1983009808
    %v1806 = vunpack.c.0.s8 %v1805
    %v1807 = vlaneseq
    %v1808 = vshrl.u32 %v1807, 7
    %v1809 = vsub.s32 %v1806, %v1808
    %v1810 = vrot.slane %v1788, %v1809
    %v1812 = vunpack.c.l.s4 1983009808
    %v1813 = vunpack.c.0.s8 %v1812
    %v1814 = vlaneseq
    %v1815 = vshrl.u32 %v1814, 7
    %v1816 = vsub.s32 %v1813, %v1815
    %v1817 = vrot.slane %v1789, %v1816
    %v1818 = vcombine.low %v1796, %v1810
    %v1819 = vcombine.high %v1796, %v1810
    %v1820 = vcombine.low %v1803, %v1817
    %v1821 = vcombine.high %v1803, %v1817
    %v1822 = vcombine.low %v17, %v41
    %v1823 = vcombine.high %v17, %v41
    %v1824 = vcombine.low %v65, %v89
    %v1825 = vcombine.high %v65, %v89
    %v1827 = vunpack.c.l.s4 1983009808
    %v1828 = vunpack.c.0.s8 %v1827
    %v1829 = vlaneseq
    %v1830 = vshrl.u32 %v1829, 7
    %v1831 = vsub.s32 %v1828, %v1830
    %v1832 = vrot.slane %v1822, %v1831
    %v1834 = vunpack.c.l.s4 1983009808
    %v1835 = vunpack.c.0.s8 %v1834
    %v1836 = vlaneseq
    %v1837 = vshrl.u32 %v1836, 7
    %v1838 = vsub.s32 %v1835, %v1837
    %v1839 = vrot.slane %v1823, %v1838
    %v1841 = vunpack.c.l.s4 1983009808
    %v1842 = vunpack.c.0.s8 %v1841
    %v1843 = vlaneseq
    %v1844 = vshrl.u32 %v1843, 7
    %v1845 = vsub.s32 %v1842, %v1844
    %v1846 = vrot.slane %v1824, %v1845
    %v1848 = vunpack.c.l.s4 1983009808
    %v1849 = vunpack.c.0.s8 %v1848
    %v1850 = vlaneseq
    %v1851 = vshrl.u32 %v1850, 7
    %v1852 = vsub.s32 %v1849, %v1851
    %v1853 = vrot.slane %v1825, %v1852
    %v1854 = vcombine.low %v1832, %v1846
    %v1855 = vcombine.high %v1832, %v1846
    %v1856 = vcombine.low %v1839, %v1853
    %v1857 = vcombine.high %v1839, %v1853
    %v1858 = vcombine.low %v18, %v42
    %v1859 = vcombine.high %v18, %v42
    %v1860 = vcombine.low %v66, %v90
    %v1861 = vcombine.high %v66, %v90
    %v1863 = vunpack.c.l.s4 1983009808
    %v1864 = vunpack.c.0.s8 %v1863
    %v1865 = vlaneseq
    %v1866 = vshrl.u32 %v1865, 7
    %v1867 = vsub.s32 %v1864, %v1866
    %v1868 = vrot.slane %v1858, %v1867
    %v1870 = vunpack.c.l.s4 1983009808
    %v1871 = vunpack.c.0.s8 %v1870
    %v1872 = vlaneseq
    %v1873 = vshrl.u32 %v1872, 7
    %v1874 = vsub.s32 %v1871, %v1873
    %v1875 = vrot.slane %v1859, %v1874
    %v1877 = vunpack.c.l.s4 1983009808
    %v1878 = vunpack.c.0.s8 %v1877
    %v1879 = vlaneseq
    %v1880 = vshrl.u32 %v1879, 7
    %v1881 = vsub.s32 %v1878, %v1880
    %v1882 = vrot.slane %v1860, %v1881
    %v1884 = vunpack.c.l.s4 1983009808
    %v1885 = vunpack.c.0.s8 %v1884
    %v1886 = vlaneseq
    %v1887 = vshrl.u32 %v1886, 7
    %v1888 = vsub.s32 %v1885, %v1887
    %v1889 = vrot.slane %v1861, %v1888
    %v1890 = vcombine.low %v1868, %v1882
    %v1891 = vcombine.high %v1868, %v1882
    %v1892 = vcombine.low %v1875, %v1889
    %v1893 = vcombine.high %v1875, %v1889
    %v1894 = vcombine.low %v19, %v43
    %v1895 = vcombine.high %v19, %v43
    %v1896 = vcombine.low %v67, %v91
    %v1897 = vcombine.high %v67, %v91
    %v1899 = vunpack.c.l.s4 1983009808
    %v1900 = vunpack.c.0.s8 %v1899
    %v1901 = vlaneseq
    %v1902 = vshrl.u32 %v1901, 7
    %v1903 = vsub.s32 %v1900, %v1902
    %v1904 = vrot.slane %v1894, %v1903
    %v1906 = vunpack.c.l.s4 1983009808
    %v1907 = vunpack.c.0.s8 %v1906
    %v1908 = vlaneseq
    %v1909 = vshrl.u32 %v1908, 7
    %v1910 = vsub.s32 %v1907, %v1909
    %v1911 = vrot.slane %v1895, %v1910
    %v1913 = vunpack.c.l.s4 1983009808
    %v1914 = vunpack.c.0.s8 %v1913
    %v1915 = vlaneseq
    %v1916 = vshrl.u32 %v1915, 7
    %v1917 = vsub.s32 %v1914, %v1916
    %v1918 = vrot.slane %v1896, %v1917
    %v1920 = vunpack.c.l.s4 1983009808
    %v1921 = vunpack.c.0.s8 %v1920
    %v1922 = vlaneseq
    %v1923 = vshrl.u32 %v1922, 7
    %v1924 = vsub.s32 %v1921, %v1923
    %v1925 = vrot.slane %v1897, %v1924
    %v1926 = vcombine.low %v1904, %v1918
    %v1927 = vcombine.high %v1904, %v1918
    %v1928 = vcombine.low %v1911, %v1925
    %v1929 = vcombine.high %v1911, %v1925
    %v1930 = vcombine.low %v20, %v44
    %v1931 = vcombine.high %v20, %v44
    %v1932 = vcombine.low %v68, %v92
    %v1933 = vcombine.high %v68, %v92
    %v1935 = vunpack.c.l.s4 1983009808
    %v1936 = vunpack.c.0.s8 %v1935
    %v1937 = vlaneseq
    %v1938 = vshrl.u32 %v1937, 7
    %v1939 = vsub.s32 %v1936, %v1938
    %v1940 = vrot.slane %v1930, %v1939
    %v1942 = vunpack.c.l.s4 1983009808
    %v1943 = vunpack.c.0.s8 %v1942
    %v1944 = vlaneseq
    %v1945 = vshrl.u32 %v1944, 7
    %v1946 = vsub.s32 %v1943, %v1945
    %v1947 = vrot.slane %v1931, %v1946
    %v1949 = vunpack.c.l.s4 1983009808
    %v1950 = vunpack.c.0.s8 %v1949
    %v1951 = vlaneseq
    %v1952 = vshrl.u32 %v1951, 7
    %v1953 = vsub.s32 %v1950, %v1952
    %v1954 = vrot.slane %v1932, %v1953
    %v1956 = vunpack.c.l.s4 1983009808
    %v1957 = vunpack.c.0.s8 %v1956
    %v1958 = vlaneseq
    %v1959 = vshrl.u32 %v1958, 7
    %v1960 = vsub.s32 %v1957, %v1959
    %v1961 = vrot.slane %v1933, %v1960
    %v1962 = vcombine.low %v1940, %v1954
    %v1963 = vcombine.high %v1940, %v1954
    %v1964 = vcombine.low %v1947, %v1961
    %v1965 = vcombine.high %v1947, %v1961
    %v1966 = vcombine.low %v21, %v45
    %v1967 = vcombine.high %v21, %v45
    %v1968 = vcombine.low %v69, %v93
    %v1969 = vcombine.high %v69, %v93
    %v1971 = vunpack.c.l.s4 1983009808
    %v1972 = vunpack.c.0.s8 %v1971
    %v1973 = vlaneseq
    %v1974 = vshrl.u32 %v1973, 7
    %v1975 = vsub.s32 %v1972, %v1974
    %v1976 = vrot.slane %v1966, %v1975
    %v1978 = vunpack.c.l.s4 1983009808
    %v1979 = vunpack.c.0.s8 %v1978
    %v1980 = vlaneseq
    %v1981 = vshrl.u32 %v1980, 7
    %v1982 = vsub.s32 %v1979, %v1981
    %v1983 = vrot.slane %v1967, %v1982
    %v1985 = vunpack.c.l.s4 1983009808
    %v1986 = vunpack.c.0.s8 %v1985
    %v1987 = vlaneseq
    %v1988 = vshrl.u32 %v1987, 7
    %v1989 = vsub.s32 %v1986, %v1988
    %v1990 = vrot.slane %v1968, %v1989
    %v1992 = vunpack.c.l.s4 1983009808
    %v1993 = vunpack.c.0.s8 %v1992
    %v1994 = vlaneseq
    %v1995 = vshrl.u32 %v1994, 7
    %v1996 = vsub.s32 %v1993, %v1995
    %v1997 = vrot.slane %v1969, %v1996
    %v1998 = vcombine.low %v1976, %v1990
    %v1999 = vcombine.high %v1976, %v1990
    %v2000 = vcombine.low %v1983, %v1997
    %v2001 = vcombine.high %v1983, %v1997
    %v2002 = vcombine.low %v22, %v46
    %v2003 = vcombine.high %v22, %v46
    %v2004 = vcombine.low %v70, %v94
    %v2005 = vcombine.high %v70, %v94
    %v2007 = vunpack.c.l.s4 1983009808
    %v2008 = vunpack.c.0.s8 %v2007
    %v2009 = vlaneseq
    %v2010 = vshrl.u32 %v2009, 7
    %v2011 = vsub.s32 %v2008, %v2010
    %v2012 = vrot.slane %v2002, %v2011
    %v2014 = vunpack.c.l.s4 1983009808
    %v2015 = vunpack.c.0.s8 %v2014
    %v2016 = vlaneseq
    %v2017 = vshrl.u32 %v2016, 7
    %v2018 = vsub.s32 %v2015, %v2017
    %v2019 = vrot.slane %v2003, %v2018
    %v2021 = vunpack.c.l.s4 1983009808
    %v2022 = vunpack.c.0.s8 %v2021
    %v2023 = vlaneseq
    %v2024 = vshrl.u32 %v2023, 7
    %v2025 = vsub.s32 %v2022, %v2024
    %v2026 = vrot.slane %v2004, %v2025
    %v2028 = vunpack.c.l.s4 1983009808
    %v2029 = vunpack.c.0.s8 %v2028
    %v2030 = vlaneseq
    %v2031 = vshrl.u32 %v2030, 7
    %v2032 = vsub.s32 %v2029, %v2031
    %v2033 = vrot.slane %v2005, %v2032
    %v2034 = vcombine.low %v2012, %v2026
    %v2035 = vcombine.high %v2012, %v2026
    %v2036 = vcombine.low %v2019, %v2033
    %v2037 = vcombine.high %v2019, %v2033
    %v2038 = vcombine.low %v23, %v47
    %v2039 = vcombine.high %v23, %v47
    %v2040 = vcombine.low %v71, %v95
    %v2041 = vcombine.high %v71, %v95
    %v2043 = vunpack.c.l.s4 1983009808
    %v2044 = vunpack.c.0.s8 %v2043
    %v2045 = vlaneseq
    %v2046 = vshrl.u32 %v2045, 7
    %v2047 = vsub.s32 %v2044, %v2046
    %v2048 = vrot.slane %v2038, %v2047
    %v2050 = vunpack.c.l.s4 1983009808
    %v2051 = vunpack.c.0.s8 %v2050
    %v2052 = vlaneseq
    %v2053 = vshrl.u32 %v2052, 7
    %v2054 = vsub.s32 %v2051, %v2053
    %v2055 = vrot.slane %v2039, %v2054
    %v2057 = vunpack.c.l.s4 1983009808
    %v2058 = vunpack.c.0.s8 %v2057
    %v2059 = vlaneseq
    %v2060 = vshrl.u32 %v2059, 7
    %v2061 = vsub.s32 %v2058, %v2060
    %v2062 = vrot.slane %v2040, %v2061
    %v2064 = vunpack.c.l.s4 1983009808
    %v2065 = vunpack.c.0.s8 %v2064
    %v2066 = vlaneseq
    %v2067 = vshrl.u32 %v2066, 7
    %v2068 = vsub.s32 %v2065, %v2067
    %v2069 = vrot.slane %v2041, %v2068
    %v2070 = vcombine.low %v2048, %v2062
    %v2071 = vcombine.high %v2048, %v2062
    %v2072 = vcombine.low %v2055, %v2069
    %v2073 = vcombine.high %v2055, %v2069
    %v2074 = vcombine.low %v24, %v48
    %v2075 = vcombine.high %v24, %v48
    %v2076 = vcombine.low %v72, %v96
    %v2077 = vcombine.high %v72, %v96
    %v2079 = vunpack.c.l.s4 1983009808
    %v2080 = vunpack.c.0.s8 %v2079
    %v2081 = vlaneseq
    %v2082 = vshrl.u32 %v2081, 7
    %v2083 = vsub.s32 %v2080, %v2082
    %v2084 = vrot.slane %v2074, %v2083
    %v2086 = vunpack.c.l.s4 1983009808
    %v2087 = vunpack.c.0.s8 %v2086
    %v2088 = vlaneseq
    %v2089 = vshrl.u32 %v2088, 7
    %v2090 = vsub.s32 %v2087, %v2089
    %v2091 = vrot.slane %v2075, %v2090
    %v2093 = vunpack.c.l.s4 1983009808
    %v2094 = vunpack.c.0.s8 %v2093
    %v2095 = vlaneseq
    %v2096 = vshrl.u32 %v2095, 7
    %v2097 = vsub.s32 %v2094, %v2096
    %v2098 = vrot.slane %v2076, %v2097
    %v2100 = vunpack.c.l.s4 1983009808
    %v2101 = vunpack.c.0.s8 %v2100
    %v2102 = vlaneseq
    %v2103 = vshrl.u32 %v2102, 7
    %v2104 = vsub.s32 %v2101, %v2103
    %v2105 = vrot.slane %v2077, %v2104
    %v2106 = vcombine.low %v2084, %v2098
    %v2107 = vcombine.high %v2084, %v2098
    %v2108 = vcombine.low %v2091, %v2105
    %v2109 = vcombine.high %v2091, %v2105
    %v2110 = vcombine.low %v25, %v49
    %v2111 = vcombine.high %v25, %v49
    %v2112 = vcombine.low %v73, %v97
    %v2113 = vcombine.high %v73, %v97
    %v2115 = vunpack.c.l.s4 1983009808
    %v2116 = vunpack.c.0.s8 %v2115
    %v2117 = vlaneseq
    %v2118 = vshrl.u32 %v2117, 7
    %v2119 = vsub.s32 %v2116, %v2118
    %v2120 = vrot.slane %v2110, %v2119
    %v2122 = vunpack.c.l.s4 1983009808
    %v2123 = vunpack.c.0.s8 %v2122
    %v2124 = vlaneseq
    %v2125 = vshrl.u32 %v2124, 7
    %v2126 = vsub.s32 %v2123, %v2125
    %v2127 = vrot.slane %v2111, %v2126
    %v2129 = vunpack.c.l.s4 1983009808
    %v2130 = vunpack.c.0.s8 %v2129
    %v2131 = vlaneseq
    %v2132 = vshrl.u32 %v2131, 7
    %v2133 = vsub.s32 %v2130, %v2132
    %v2134 = vrot.slane %v2112, %v2133
    %v2136 = vunpack.c.l.s4 1983009808
    %v2137 = vunpack.c.0.s8 %v2136
    %v2138 = vlaneseq
    %v2139 = vshrl.u32 %v2138, 7
    %v2140 = vsub.s32 %v2137, %v2139
    %v2141 = vrot.slane %v2113, %v2140
    %v2142 = vcombine.low %v2120, %v2134
    %v2143 = vcombine.high %v2120, %v2134
    %v2144 = vcombine.low %v2127, %v2141
    %v2145 = vcombine.high %v2127, %v2141
    %v2146 = vcombine.low %v26, %v50
    %v2147 = vcombine.high %v26, %v50
    %v2148 = vcombine.low %v74, %v98
    %v2149 = vcombine.high %v74, %v98
    %v2151 = vunpack.c.l.s4 1983009808
    %v2152 = vunpack.c.0.s8 %v2151
    %v2153 = vlaneseq
    %v2154 = vshrl.u32 %v2153, 7
    %v2155 = vsub.s32 %v2152, %v2154
    %v2156 = vrot.slane %v2146, %v2155
    %v2158 = vunpack.c.l.s4 1983009808
    %v2159 = vunpack.c.0.s8 %v2158
    %v2160 = vlaneseq
    %v2161 = vshrl.u32 %v2160, 7
    %v2162 = vsub.s32 %v2159, %v2161
    %v2163 = vrot.slane %v2147, %v2162
    %v2165 = vunpack.c.l.s4 1983009808
    %v2166 = vunpack.c.0.s8 %v2165
    %v2167 = vlaneseq
    %v2168 = vshrl.u32 %v2167, 7
    %v2169 = vsub.s32 %v2166, %v2168
    %v2170 = vrot.slane %v2148, %v2169
    %v2172 = vunpack.c.l.s4 1983009808
    %v2173 = vunpack.c.0.s8 %v2172
    %v2174 = vlaneseq
    %v2175 = vshrl.u32 %v2174, 7
    %v2176 = vsub.s32 %v2173, %v2175
    %v2177 = vrot.slane %v2149, %v2176
    %v2178 = vcombine.low %v2156, %v2170
    %v2179 = vcombine.high %v2156, %v2170
    %v2180 = vcombine.low %v2163, %v2177
    %v2181 = vcombine.high %v2163, %v2177
    %v2182 = vcombine.low %v27, %v51
    %v2183 = vcombine.high %v27, %v51
    %v2184 = vcombine.low %v75, %v99
    %v2185 = vcombine.high %v75, %v99
    %v2187 = vunpack.c.l.s4 1983009808
    %v2188 = vunpack.c.0.s8 %v2187
    %v2189 = vlaneseq
    %v2190 = vshrl.u32 %v2189, 7
    %v2191 = vsub.s32 %v2188, %v2190
    %v2192 = vrot.slane %v2182, %v2191
    %v2194 = vunpack.c.l.s4 1983009808
    %v2195 = vunpack.c.0.s8 %v2194
    %v2196 = vlaneseq
    %v2197 = vshrl.u32 %v2196, 7
    %v2198 = vsub.s32 %v2195, %v2197
    %v2199 = vrot.slane %v2183, %v2198
    %v2201 = vunpack.c.l.s4 1983009808
    %v2202 = vunpack.c.0.s8 %v2201
    %v2203 = vlaneseq
    %v2204 = vshrl.u32 %v2203, 7
    %v2205 = vsub.s32 %v2202, %v2204
    %v2206 = vrot.slane %v2184, %v2205
    %v2208 = vunpack.c.l.s4 1983009808
    %v2209 = vunpack.c.0.s8 %v2208
    %v2210 = vlaneseq
    %v2211 = vshrl.u32 %v2210, 7
    %v2212 = vsub.s32 %v2209, %v2211
    %v2213 = vrot.slane %v2185, %v2212
    %v2214 = vcombine.low %v2192, %v2206
    %v2215 = vcombine.high %v2192, %v2206
    %v2216 = vcombine.low %v2199, %v2213
    %v2217 = vcombine.high %v2199, %v2213
    %v2218 = vcombine.low %v28, %v52
    %v2219 = vcombine.high %v28, %v52
    %v2220 = vcombine.low %v76, %v100
    %v2221 = vcombine.high %v76, %v100
    %v2223 = vunpack.c.l.s4 1983009808
    %v2224 = vunpack.c.0.s8 %v2223
    %v2225 = vlaneseq
    %v2226 = vshrl.u32 %v2225, 7
    %v2227 = vsub.s32 %v2224, %v2226
    %v2228 = vrot.slane %v2218, %v2227
    %v2230 = vunpack.c.l.s4 1983009808
    %v2231 = vunpack.c.0.s8 %v2230
    %v2232 = vlaneseq
    %v2233 = vshrl.u32 %v2232, 7
    %v2234 = vsub.s32 %v2231, %v2233
    %v2235 = vrot.slane %v2219, %v2234
    %v2237 = vunpack.c.l.s4 1983009808
    %v2238 = vunpack.c.0.s8 %v2237
    %v2239 = vlaneseq
    %v2240 = vshrl.u32 %v2239, 7
    %v2241 = vsub.s32 %v2238, %v2240
    %v2242 = vrot.slane %v2220, %v2241
    %v2244 = vunpack.c.l.s4 1983009808
    %v2245 = vunpack.c.0.s8 %v2244
    %v2246 = vlaneseq
    %v2247 = vshrl.u32 %v2246, 7
    %v2248 = vsub.s32 %v2245, %v2247
    %v2249 = vrot.slane %v2221, %v2248
    %v2250 = vcombine.low %v2228, %v2242
    %v2251 = vcombine.high %v2228, %v2242
    %v2252 = vcombine.low %v2235, %v2249
    %v2253 = vcombine.high %v2235, %v2249
    %v2254 = vcombine.low %v29, %v53
    %v2255 = vcombine.high %v29, %v53
    %v2256 = vcombine.low %v77, %v101
    %v2257 = vcombine.high %v77, %v101
    %v2259 = vunpack.c.l.s4 1983009808
    %v2260 = vunpack.c.0.s8 %v2259
    %v2261 = vlaneseq
    %v2262 = vshrl.u32 %v2261, 7
    %v2263 = vsub.s32 %v2260, %v2262
    %v2264 = vrot.slane %v2254, %v2263
    %v2266 = vunpack.c.l.s4 1983009808
    %v2267 = vunpack.c.0.s8 %v2266
    %v2268 = vlaneseq
    %v2269 = vshrl.u32 %v2268, 7
    %v2270 = vsub.s32 %v2267, %v2269
    %v2271 = vrot.slane %v2255, %v2270
    %v2273 = vunpack.c.l.s4 1983009808
    %v2274 = vunpack.c.0.s8 %v2273
    %v2275 = vlaneseq
    %v2276 = vshrl.u32 %v2275, 7
    %v2277 = vsub.s32 %v2274, %v2276
    %v2278 = vrot.slane %v2256, %v2277
    %v2280 = vunpack.c.l.s4 1983009808
    %v2281 = vunpack.c.0.s8 %v2280
    %v2282 = vlaneseq
    %v2283 = vshrl.u32 %v2282, 7
    %v2284 = vsub.s32 %v2281, %v2283
    %v2285 = vrot.slane %v2257, %v2284
    %v2286 = vcombine.low %v2264, %v2278
    %v2287 = vcombine.high %v2264, %v2278
    %v2288 = vcombine.low %v2271, %v2285
    %v2289 = vcombine.high %v2271, %v2285
    %v2290 = vcombine.low %v30, %v54
    %v2291 = vcombine.high %v30, %v54
    %v2292 = vcombine.low %v78, %v102
    %v2293 = vcombine.high %v78, %v102
    %v2295 = vunpack.c.l.s4 1983009808
    %v2296 = vunpack.c.0.s8 %v2295
    %v2297 = vlaneseq
    %v2298 = vshrl.u32 %v2297, 7
    %v2299 = vsub.s32 %v2296, %v2298
    %v2300 = vrot.slane %v2290, %v2299
    %v2302 = vunpack.c.l.s4 1983009808
    %v2303 = vunpack.c.0.s8 %v2302
    %v2304 = vlaneseq
    %v2305 = vshrl.u32 %v2304, 7
    %v2306 = vsub.s32 %v2303, %v2305
    %v2307 = vrot.slane %v2291, %v2306
    %v2309 = vunpack.c.l.s4 1983009808
    %v2310 = vunpack.c.0.s8 %v2309
    %v2311 = vlaneseq
    %v2312 = vshrl.u32 %v2311, 7
    %v2313 = vsub.s32 %v2310, %v2312
    %v2314 = vrot.slane %v2292, %v2313
    %v2316 = vunpack.c.l.s4 1983009808
    %v2317 = vunpack.c.0.s8 %v2316
    %v2318 = vlaneseq
    %v2319 = vshrl.u32 %v2318, 7
    %v2320 = vsub.s32 %v2317, %v2319
    %v2321 = vrot.slane %v2293, %v2320
    %v2322 = vcombine.low %v2300, %v2314
    %v2323 = vcombine.high %v2300, %v2314
    %v2324 = vcombine.low %v2307, %v2321
    %v2325 = vcombine.high %v2307, %v2321
    %v2326 = vcombine.low %v31, %v55
    %v2327 = vcombine.high %v31, %v55
    %v2328 = vcombine.low %v79, %v103
    %v2329 = vcombine.high %v79, %v103
    %v2331 = vunpack.c.l.s4 1983009808
    %v2332 = vunpack.c.0.s8 %v2331
    %v2333 = vlaneseq
    %v2334 = vshrl.u32 %v2333, 7
    %v2335 = vsub.s32 %v2332, %v2334
    %v2336 = vrot.slane %v2326, %v2335
    %v2338 = vunpack.c.l.s4 1983009808
    %v2339 = vunpack.c.0.s8 %v2338
    %v2340 = vlaneseq
    %v2341 = vshrl.u32 %v2340, 7
    %v2342 = vsub.s32 %v2339, %v2341
    %v2343 = vrot.slane %v2327, %v2342
    %v2345 = vunpack.c.l.s4 1983009808
    %v2346 = vunpack.c.0.s8 %v2345
    %v2347 = vlaneseq
    %v2348 = vshrl.u32 %v2347, 7
    %v2349 = vsub.s32 %v2346, %v2348
    %v2350 = vrot.slane %v2328, %v2349
    %v2352 = vunpack.c.l.s4 1983009808
    %v2353 = vunpack.c.0.s8 %v2352
    %v2354 = vlaneseq
    %v2355 = vshrl.u32 %v2354, 7
    %v2356 = vsub.s32 %v2353, %v2355
    %v2357 = vrot.slane %v2329, %v2356
    %v2358 = vcombine.low %v2336, %v2350
    %v2359 = vcombine.high %v2336, %v2350
    %v2360 = vcombine.low %v2343, %v2357
    %v2361 = vcombine.high %v2343, %v2357
    %v2362 = vcombine.low %v32, %v56
    %v2363 = vcombine.high %v32, %v56
    %v2364 = vcombine.low %v80, %v104
    %v2365 = vcombine.high %v80, %v104
    %v2367 = vunpack.c.l.s4 1983009808
    %v2368 = vunpack.c.0.s8 %v2367
    %v2369 = vlaneseq
    %v2370 = vshrl.u32 %v2369, 7
    %v2371 = vsub.s32 %v2368, %v2370
    %v2372 = vrot.slane %v2362, %v2371
    %v2374 = vunpack.c.l.s4 1983009808
    %v2375 = vunpack.c.0.s8 %v2374
    %v2376 = vlaneseq
    %v2377 = vshrl.u32 %v2376, 7
    %v2378 = vsub.s32 %v2375, %v2377
    %v2379 = vrot.slane %v2363, %v2378
    %v2381 = vunpack.c.l.s4 1983009808
    %v2382 = vunpack.c.0.s8 %v2381
    %v2383 = vlaneseq
    %v2384 = vshrl.u32 %v2383, 7
    %v2385 = vsub.s32 %v2382, %v2384
    %v2386 = vrot.slane %v2364, %v2385
    %v2388 = vunpack.c.l.s4 1983009808
    %v2389 = vunpack.c.0.s8 %v2388
    %v2390 = vlaneseq
    %v2391 = vshrl.u32 %v2390, 7
    %v2392 = vsub.s32 %v2389, %v2391
    %v2393 = vrot.slane %v2365, %v2392
    %v2394 = vcombine.low %v2372, %v2386
    %v2395 = vcombine.high %v2372, %v2386
    %v2396 = vcombine.low %v2379, %v2393
    %v2397 = vcombine.high %v2379, %v2393
    %v2398 = vcombine.low %v33, %v57
    %v2399 = vcombine.high %v33, %v57
    %v2400 = vcombine.low %v81, %v105
    %v2401 = vcombine.high %v81, %v105
    %v2403 = vunpack.c.l.s4 1983009808
    %v2404 = vunpack.c.0.s8 %v2403
    %v2405 = vlaneseq
    %v2406 = vshrl.u32 %v2405, 7
    %v2407 = vsub.s32 %v2404, %v2406
    %v2408 = vrot.slane %v2398, %v2407
    %v2410 = vunpack.c.l.s4 1983009808
    %v2411 = vunpack.c.0.s8 %v2410
    %v2412 = vlaneseq
    %v2413 = vshrl.u32 %v2412, 7
    %v2414 = vsub.s32 %v2411, %v2413
    %v2415 = vrot.slane %v2399, %v2414
    %v2417 = vunpack.c.l.s4 1983009808
    %v2418 = vunpack.c.0.s8 %v2417
    %v2419 = vlaneseq
    %v2420 = vshrl.u32 %v2419, 7
    %v2421 = vsub.s32 %v2418, %v2420
    %v2422 = vrot.slane %v2400, %v2421
    %v2424 = vunpack.c.l.s4 1983009808
    %v2425 = vunpack.c.0.s8 %v2424
    %v2426 = vlaneseq
    %v2427 = vshrl.u32 %v2426, 7
    %v2428 = vsub.s32 %v2425, %v2427
    %v2429 = vrot.slane %v2401, %v2428
    %v2430 = vcombine.low %v2408, %v2422
    %v2431 = vcombine.high %v2408, %v2422
    %v2432 = vcombine.low %v2415, %v2429
    %v2433 = vcombine.high %v2415, %v2429
    %v2434 = vcombine.low %v34, %v58
    %v2435 = vcombine.high %v34, %v58
    %v2436 = vcombine.low %v82, %v106
    %v2437 = vcombine.high %v82, %v106
    %v2439 = vunpack.c.l.s4 1983009808
    %v2440 = vunpack.c.0.s8 %v2439
    %v2441 = vlaneseq
    %v2442 = vshrl.u32 %v2441, 7
    %v2443 = vsub.s32 %v2440, %v2442
    %v2444 = vrot.slane %v2434, %v2443
    %v2446 = vunpack.c.l.s4 1983009808
    %v2447 = vunpack.c.0.s8 %v2446
    %v2448 = vlaneseq
    %v2449 = vshrl.u32 %v2448, 7
    %v2450 = vsub.s32 %v2447, %v2449
    %v2451 = vrot.slane %v2435, %v2450
    %v2453 = vunpack.c.l.s4 1983009808
    %v2454 = vunpack.c.0.s8 %v2453
    %v2455 = vlaneseq
    %v2456 = vshrl.u32 %v2455, 7
    %v2457 = vsub.s32 %v2454, %v2456
    %v2458 = vrot.slane %v2436, %v2457
    %v2460 = vunpack.c.l.s4 1983009808
    %v2461 = vunpack.c.0.s8 %v2460
    %v2462 = vlaneseq
    %v2463 = vshrl.u32 %v2462, 7
    %v2464 = vsub.s32 %v2461, %v2463
    %v2465 = vrot.slane %v2437, %v2464
    %v2466 = vcombine.low %v2444, %v2458
    %v2467 = vcombine.high %v2444, %v2458
    %v2468 = vcombine.low %v2451, %v2465
    %v2469 = vcombine.high %v2451, %v2465
    %v2470 = vcombine.low %v35, %v59
    %v2471 = vcombine.high %v35, %v59
    %v2472 = vcombine.low %v83, %v107
    %v2473 = vcombine.high %v83, %v107
    %v2475 = vunpack.c.l.s4 1983009808
    %v2476 = vunpack.c.0.s8 %v2475
    %v2477 = vlaneseq
    %v2478 = vshrl.u32 %v2477, 7
    %v2479 = vsub.s32 %v2476, %v2478
    %v2480 = vrot.slane %v2470, %v2479
    %v2482 = vunpack.c.l.s4 1983009808
    %v2483 = vunpack.c.0.s8 %v2482
    %v2484 = vlaneseq
    %v2485 = vshrl.u32 %v2484, 7
    %v2486 = vsub.s32 %v2483, %v2485
    %v2487 = vrot.slane %v2471, %v2486
    %v2489 = vunpack.c.l.s4 1983009808
    %v2490 = vunpack.c.0.s8 %v2489
    %v2491 = vlaneseq
    %v2492 = vshrl.u32 %v2491, 7
    %v2493 = vsub.s32 %v2490, %v2492
    %v2494 = vrot.slane %v2472, %v2493
    %v2496 = vunpack.c.l.s4 1983009808
    %v2497 = vunpack.c.0.s8 %v2496
    %v2498 = vlaneseq
    %v2499 = vshrl.u32 %v2498, 7
    %v2500 = vsub.s32 %v2497, %v2499
    %v2501 = vrot.slane %v2473, %v2500
    %v2502 = vcombine.low %v2480, %v2494
    %v2503 = vcombine.high %v2480, %v2494
    %v2504 = vcombine.low %v2487, %v2501
    %v2505 = vcombine.high %v2487, %v2501
    %v2506 = vcombine.low %v36, %v60
    %v2507 = vcombine.high %v36, %v60
    %v2508 = vcombine.low %v84, %v108
    %v2509 = vcombine.high %v84, %v108
    %v2511 = vunpack.c.l.s4 1983009808
    %v2512 = vunpack.c.0.s8 %v2511
    %v2513 = vlaneseq
    %v2514 = vshrl.u32 %v2513, 7
    %v2515 = vsub.s32 %v2512, %v2514
    %v2516 = vrot.slane %v2506, %v2515
    %v2518 = vunpack.c.l.s4 1983009808
    %v2519 = vunpack.c.0.s8 %v2518
    %v2520 = vlaneseq
    %v2521 = vshrl.u32 %v2520, 7
    %v2522 = vsub.s32 %v2519, %v2521
    %v2523 = vrot.slane %v2507, %v2522
    %v2525 = vunpack.c.l.s4 1983009808
    %v2526 = vunpack.c.0.s8 %v2525
    %v2527 = vlaneseq
    %v2528 = vshrl.u32 %v2527, 7
    %v2529 = vsub.s32 %v2526, %v2528
    %v2530 = vrot.slane %v2508, %v2529
    %v2532 = vunpack.c.l.s4 1983009808
    %v2533 = vunpack.c.0.s8 %v2532
    %v2534 = vlaneseq
    %v2535 = vshrl.u32 %v2534, 7
    %v2536 = vsub.s32 %v2533, %v2535
    %v2537 = vrot.slane %v2509, %v2536
    %v2538 = vcombine.low %v2516, %v2530
    %v2539 = vcombine.high %v2516, %v2530
    %v2540 = vcombine.low %v2523, %v2537
    %v2541 = vcombine.high %v2523, %v2537
    %v2542 = vcombine.low %v37, %v61
    %v2543 = vcombine.high %v37, %v61
    %v2544 = vcombine.low %v85, %v109
    %v2545 = vcombine.high %v85, %v109
    %v2547 = vunpack.c.l.s4 1983009808
    %v2548 = vunpack.c.0.s8 %v2547
    %v2549 = vlaneseq
    %v2550 = vshrl.u32 %v2549, 7
    %v2551 = vsub.s32 %v2548, %v2550
    %v2552 = vrot.slane %v2542, %v2551
    %v2554 = vunpack.c.l.s4 1983009808
    %v2555 = vunpack.c.0.s8 %v2554
    %v2556 = vlaneseq
    %v2557 = vshrl.u32 %v2556, 7
    %v2558 = vsub.s32 %v2555, %v2557
    %v2559 = vrot.slane %v2543, %v2558
    %v2561 = vunpack.c.l.s4 1983009808
    %v2562 = vunpack.c.0.s8 %v2561
    %v2563 = vlaneseq
    %v2564 = vshrl.u32 %v2563, 7
    %v2565 = vsub.s32 %v2562, %v2564
    %v2566 = vrot.slane %v2544, %v2565
    %v2568 = vunpack.c.l.s4 1983009808
    %v2569 = vunpack.c.0.s8 %v2568
    %v2570 = vlaneseq
    %v2571 = vshrl.u32 %v2570, 7
    %v2572 = vsub.s32 %v2569, %v2571
    %v2573 = vrot.slane %v2545, %v2572
    %v2574 = vcombine.low %v2552, %v2566
    %v2575 = vcombine.high %v2552, %v2566
    %v2576 = vcombine.low %v2559, %v2573
    %v2577 = vcombine.high %v2559, %v2573
    %v2578 = vcombine.low %v38, %v62
    %v2579 = vcombine.high %v38, %v62
    %v2580 = vcombine.low %v86, %v110
    %v2581 = vcombine.high %v86, %v110
    %v2583 = vunpack.c.l.s4 1983009808
    %v2584 = vunpack.c.0.s8 %v2583
    %v2585 = vlaneseq
    %v2586 = vshrl.u32 %v2585, 7
    %v2587 = vsub.s32 %v2584, %v2586
    %v2588 = vrot.slane %v2578, %v2587
    %v2590 = vunpack.c.l.s4 1983009808
    %v2591 = vunpack.c.0.s8 %v2590
    %v2592 = vlaneseq
    %v2593 = vshrl.u32 %v2592, 7
    %v2594 = vsub.s32 %v2591, %v2593
    %v2595 = vrot.slane %v2579, %v2594
    %v2597 = vunpack.c.l.s4 1983009808
    %v2598 = vunpack.c.0.s8 %v2597
    %v2599 = vlaneseq
    %v2600 = vshrl.u32 %v2599, 7
    %v2601 = vsub.s32 %v2598, %v2600
    %v2602 = vrot.slane %v2580, %v2601
    %v2604 = vunpack.c.l.s4 1983009808
    %v2605 = vunpack.c.0.s8 %v2604
    %v2606 = vlaneseq
    %v2607 = vshrl.u32 %v2606, 7
    %v2608 = vsub.s32 %v2605, %v2607
    %v2609 = vrot.slane %v2581, %v2608
    %v2610 = vcombine.low %v2588, %v2602
    %v2611 = vcombine.high %v2588, %v2602
    %v2612 = vcombine.low %v2595, %v2609
    %v2613 = vcombine.high %v2595, %v2609
    %2710 = vmatprep.subr.mxu0 0.0
    %2711 = vmatpush1.msra.mxu0 %v126
    %2712 = vmatprep.subr.mxu0 0.0
    %2713 = vmatpush1.msra.mxu0 %v125
    %2714 = vmatprep.subr.mxu0 0.0
    %2715 = vmatpush1.msra.mxu0 %v124
    %2716 = vmatprep.subr.mxu0 0.0
    %2717 = vmatpush1.msra.mxu0 %v123
    %2718 = vmatprep.subr.mxu0 0.0
    %2719 = vmatpush1.msra.mxu0 %v122
    %2720 = vmatprep.subr.mxu0 0.0
    %2721 = vmatpush1.msra.mxu0 %v121
    %2722 = vmatprep.subr.mxu0 0.0
    %2723 = vmatpush1.msra.mxu0 %v120
    %2724 = vmatprep.subr.mxu0 0.0
    %2725 = vmatpush1.msra.mxu0 %v119
    %2726 = vmatprep.subr.mxu0 0.0
    %2727 = vmatpush1.msra.mxu0 %v118
    %2728 = vmatprep.subr.mxu0 0.0
    %2729 = vmatpush1.msra.mxu0 %v117
    %2730 = vmatprep.subr.mxu0 0.0
    %2731 = vmatpush1.msra.mxu0 %v116
    %2732 = vmatprep.subr.mxu0 0.0
    %2733 = vmatpush1.msra.mxu0 %v115
    %2734 = vmatprep.subr.mxu0 0.0
    %2735 = vmatpush1.msra.mxu0 %v114
    %2736 = vmatprep.subr.mxu0 0.0
    %2737 = vmatpush1.msra.mxu0 %v113
    %2738 = vmatprep.subr.mxu0 0.0
    %2739 = vmatpush1.msra.mxu0 %v112
    %2740 = vmatprep.subr.mxu0 0.0
    %2741 = vmatpush1.msra.mxu0 %v111
    %2742 = vmatprep.subr.mxu0 0.0
    %2743 = vmatpush2.msra.mxu0 %v142
    %2744 = vmatprep.subr.mxu0 0.0
    %2745 = vmatpush2.msra.mxu0 %v141
    %2746 = vmatprep.subr.mxu0 0.0
    %2747 = vmatpush2.msra.mxu0 %v140
    %2748 = vmatprep.subr.mxu0 0.0
    %2749 = vmatpush2.msra.mxu0 %v139
    %2750 = vmatprep.subr.mxu0 0.0
    %2751 = vmatpush2.msra.mxu0 %v138
    %2752 = vmatprep.subr.mxu0 0.0
    %2753 = vmatpush2.msra.mxu0 %v137
    %2754 = vmatprep.subr.mxu0 0.0
    %2755 = vmatpush2.msra.mxu0 %v136
    %2756 = vmatprep.subr.mxu0 0.0
    %2757 = vmatpush2.msra.mxu0 %v135
    %2758 = vmatprep.subr.mxu0 0.0
    %2759 = vmatpush2.msra.mxu0 %v134
    %2760 = vmatprep.subr.mxu0 0.0
    %2761 = vmatpush2.msra.mxu0 %v133
    %2762 = vmatprep.subr.mxu0 0.0
    %2763 = vmatpush2.msra.mxu0 %v132
    %2764 = vmatprep.subr.mxu0 0.0
    %2765 = vmatpush2.msra.mxu0 %v131
    %2766 = vmatprep.subr.mxu0 0.0
    %2767 = vmatpush2.msra.mxu0 %v130
    %2768 = vmatprep.subr.mxu0 0.0
    %2769 = vmatpush2.msra.mxu0 %v129
    %2770 = vmatprep.subr.mxu0 0.0
    %2771 = vmatpush2.msra.mxu0 %v128
    %2772 = vmatprep.subr.mxu0 0.0
    %2773 = vmatpush2.msra.mxu0 %v127
    %2774 = vmatprep.mubr.f32.mxu0 %v1783
    %2775 = vmatmul.mubr.f32.gmra.mxu0 %v1782
    %v2776 = vpop.f32.mrf.mxu0
    %v2777 = vadd.f32 %v1652, %v2776
    %v2778 = vpop.f32.mrf.mxu0
    %2779 = vdwg.mxu0
    %2780 = vmatprep.subr.mxu0 0.0
    %2781 = vmatpush1.msra.mxu0 %v158
    %2782 = vmatprep.subr.mxu0 0.0
    %2783 = vmatpush1.msra.mxu0 %v157
    %2784 = vmatprep.subr.mxu0 0.0
    %2785 = vmatpush1.msra.mxu0 %v156
    %2786 = vmatprep.subr.mxu0 0.0
    %2787 = vmatpush1.msra.mxu0 %v155
    %2788 = vmatprep.subr.mxu0 0.0
    %2789 = vmatpush1.msra.mxu0 %v154
    %2790 = vmatprep.subr.mxu0 0.0
    %2791 = vmatpush1.msra.mxu0 %v153
    %2792 = vmatprep.subr.mxu0 0.0
    %2793 = vmatpush1.msra.mxu0 %v152
    %2794 = vmatprep.subr.mxu0 0.0
    %2795 = vmatpush1.msra.mxu0 %v151
    %2796 = vmatprep.subr.mxu0 0.0
    %2797 = vmatpush1.msra.mxu0 %v150
    %2798 = vmatprep.subr.mxu0 0.0
    %2799 = vmatpush1.msra.mxu0 %v149
    %2800 = vmatprep.subr.mxu0 0.0
    %2801 = vmatpush1.msra.mxu0 %v148
    %2802 = vmatprep.subr.mxu0 0.0
    %2803 = vmatpush1.msra.mxu0 %v147
    %2804 = vmatprep.subr.mxu0 0.0
    %2805 = vmatpush1.msra.mxu0 %v146
    %2806 = vmatprep.subr.mxu0 0.0
    %2807 = vmatpush1.msra.mxu0 %v145
    %2808 = vmatprep.subr.mxu0 0.0
    %2809 = vmatpush1.msra.mxu0 %v144
    %2810 = vmatprep.subr.mxu0 0.0
    %2811 = vmatpush1.msra.mxu0 %v143
    %2812 = vmatprep.subr.mxu0 0.0
    %2813 = vmatpush2.msra.mxu0 %v174
    %2814 = vmatprep.subr.mxu0 0.0
    %2815 = vmatpush2.msra.mxu0 %v173
    %2816 = vmatprep.subr.mxu0 0.0
    %2817 = vmatpush2.msra.mxu0 %v172
    %2818 = vmatprep.subr.mxu0 0.0
    %2819 = vmatpush2.msra.mxu0 %v171
    %2820 = vmatprep.subr.mxu0 0.0
    %2821 = vmatpush2.msra.mxu0 %v170
    %2822 = vmatprep.subr.mxu0 0.0
    %2823 = vmatpush2.msra.mxu0 %v169
    %2824 = vmatprep.subr.mxu0 0.0
    %2825 = vmatpush2.msra.mxu0 %v168
    %2826 = vmatprep.subr.mxu0 0.0
    %2827 = vmatpush2.msra.mxu0 %v167
    %2828 = vmatprep.subr.mxu0 0.0
    %2829 = vmatpush2.msra.mxu0 %v166
    %2830 = vmatprep.subr.mxu0 0.0
    %2831 = vmatpush2.msra.mxu0 %v165
    %2832 = vmatprep.subr.mxu0 0.0
    %2833 = vmatpush2.msra.mxu0 %v164
    %2834 = vmatprep.subr.mxu0 0.0
    %2835 = vmatpush2.msra.mxu0 %v163
    %2836 = vmatprep.subr.mxu0 0.0
    %2837 = vmatpush2.msra.mxu0 %v162
    %2838 = vmatprep.subr.mxu0 0.0
    %2839 = vmatpush2.msra.mxu0 %v161
    %2840 = vmatprep.subr.mxu0 0.0
    %2841 = vmatpush2.msra.mxu0 %v160
    %2842 = vmatprep.subr.mxu0 0.0
    %2843 = vmatpush2.msra.mxu0 %v159
    %2844 = vmatprep.mubr.f32.mxu0 %v1785
    %2845 = vmatmul.mubr.f32.gmra.mxu0 %v1784
    %v2846 = vpop.f32.mrf.mxu0
    %v2847 = vadd.f32 %v2777, %v2846
    %v2848 = vpop.f32.mrf.mxu0
    %2849 = vdwg.mxu0
    %2850 = vmatprep.subr.mxu0 0.0
    %2851 = vmatpush1.msra.mxu0 %v190
    %2852 = vmatprep.subr.mxu0 0.0
    %2853 = vmatpush1.msra.mxu0 %v189
    %2854 = vmatprep.subr.mxu0 0.0
    %2855 = vmatpush1.msra.mxu0 %v188
    %2856 = vmatprep.subr.mxu0 0.0
    %2857 = vmatpush1.msra.mxu0 %v187
    %2858 = vmatprep.subr.mxu0 0.0
    %2859 = vmatpush1.msra.mxu0 %v186
    %2860 = vmatprep.subr.mxu0 0.0
    %2861 = vmatpush1.msra.mxu0 %v185
    %2862 = vmatprep.subr.mxu0 0.0
    %2863 = vmatpush1.msra.mxu0 %v184
    %2864 = vmatprep.subr.mxu0 0.0
    %2865 = vmatpush1.msra.mxu0 %v183
    %2866 = vmatprep.subr.mxu0 0.0
    %2867 = vmatpush1.msra.mxu0 %v182
    %2868 = vmatprep.subr.mxu0 0.0
    %2869 = vmatpush1.msra.mxu0 %v181
    %2870 = vmatprep.subr.mxu0 0.0
    %2871 = vmatpush1.msra.mxu0 %v180
    %2872 = vmatprep.subr.mxu0 0.0
    %2873 = vmatpush1.msra.mxu0 %v179
    %2874 = vmatprep.subr.mxu0 0.0
    %2875 = vmatpush1.msra.mxu0 %v178
    %2876 = vmatprep.subr.mxu0 0.0
    %2877 = vmatpush1.msra.mxu0 %v177
    %2878 = vmatprep.subr.mxu0 0.0
    %2879 = vmatpush1.msra.mxu0 %v176
    %2880 = vmatprep.subr.mxu0 0.0
    %2881 = vmatpush1.msra.mxu0 %v175
    %2882 = vmatprep.subr.mxu0 0.0
    %2883 = vmatpush2.msra.mxu0 %v206
    %2884 = vmatprep.subr.mxu0 0.0
    %2885 = vmatpush2.msra.mxu0 %v205
    %2886 = vmatprep.subr.mxu0 0.0
    %2887 = vmatpush2.msra.mxu0 %v204
    %2888 = vmatprep.subr.mxu0 0.0
    %2889 = vmatpush2.msra.mxu0 %v203
    %2890 = vmatprep.subr.mxu0 0.0
    %2891 = vmatpush2.msra.mxu0 %v202
    %2892 = vmatprep.subr.mxu0 0.0
    %2893 = vmatpush2.msra.mxu0 %v201
    %2894 = vmatprep.subr.mxu0 0.0
    %2895 = vmatpush2.msra.mxu0 %v200
    %2896 = vmatprep.subr.mxu0 0.0
    %2897 = vmatpush2.msra.mxu0 %v199
    %2898 = vmatprep.subr.mxu0 0.0
    %2899 = vmatpush2.msra.mxu0 %v198
    %2900 = vmatprep.subr.mxu0 0.0
    %2901 = vmatpush2.msra.mxu0 %v197
    %2902 = vmatprep.subr.mxu0 0.0
    %2903 = vmatpush2.msra.mxu0 %v196
    %2904 = vmatprep.subr.mxu0 0.0
    %2905 = vmatpush2.msra.mxu0 %v195
    %2906 = vmatprep.subr.mxu0 0.0
    %2907 = vmatpush2.msra.mxu0 %v194
    %2908 = vmatprep.subr.mxu0 0.0
    %2909 = vmatpush2.msra.mxu0 %v193
    %2910 = vmatprep.subr.mxu0 0.0
    %2911 = vmatpush2.msra.mxu0 %v192
    %2912 = vmatprep.subr.mxu0 0.0
    %2913 = vmatpush2.msra.mxu0 %v191
    %2914 = vmatprep.mubr.f32.mxu0 %v1819
    %2915 = vmatmul.mubr.f32.gmra.mxu0 %v1818
    %v2916 = vpop.f32.mrf.mxu0
    %v2917 = vadd.f32 %v2847, %v2916
    %v2918 = vpop.f32.mrf.mxu0
    %2919 = vdwg.mxu0
    %2920 = vmatprep.subr.mxu0 0.0
    %2921 = vmatpush1.msra.mxu0 %v222
    %2922 = vmatprep.subr.mxu0 0.0
    %2923 = vmatpush1.msra.mxu0 %v221
    %2924 = vmatprep.subr.mxu0 0.0
    %2925 = vmatpush1.msra.mxu0 %v220
    %2926 = vmatprep.subr.mxu0 0.0
    %2927 = vmatpush1.msra.mxu0 %v219
    %2928 = vmatprep.subr.mxu0 0.0
    %2929 = vmatpush1.msra.mxu0 %v218
    %2930 = vmatprep.subr.mxu0 0.0
    %2931 = vmatpush1.msra.mxu0 %v217
    %2932 = vmatprep.subr.mxu0 0.0
    %2933 = vmatpush1.msra.mxu0 %v216
    %2934 = vmatprep.subr.mxu0 0.0
    %2935 = vmatpush1.msra.mxu0 %v215
    %2936 = vmatprep.subr.mxu0 0.0
    %2937 = vmatpush1.msra.mxu0 %v214
    %2938 = vmatprep.subr.mxu0 0.0
    %2939 = vmatpush1.msra.mxu0 %v213
    %2940 = vmatprep.subr.mxu0 0.0
    %2941 = vmatpush1.msra.mxu0 %v212
    %2942 = vmatprep.subr.mxu0 0.0
    %2943 = vmatpush1.msra.mxu0 %v211
    %2944 = vmatprep.subr.mxu0 0.0
    %2945 = vmatpush1.msra.mxu0 %v210
    %2946 = vmatprep.subr.mxu0 0.0
    %2947 = vmatpush1.msra.mxu0 %v209
    %2948 = vmatprep.subr.mxu0 0.0
    %2949 = vmatpush1.msra.mxu0 %v208
    %2950 = vmatprep.subr.mxu0 0.0
    %2951 = vmatpush1.msra.mxu0 %v207
    %2952 = vmatprep.subr.mxu0 0.0
    %2953 = vmatpush2.msra.mxu0 %v238
    %2954 = vmatprep.subr.mxu0 0.0
    %2955 = vmatpush2.msra.mxu0 %v237
    %2956 = vmatprep.subr.mxu0 0.0
    %2957 = vmatpush2.msra.mxu0 %v236
    %2958 = vmatprep.subr.mxu0 0.0
    %2959 = vmatpush2.msra.mxu0 %v235
    %2960 = vmatprep.subr.mxu0 0.0
    %2961 = vmatpush2.msra.mxu0 %v234
    %2962 = vmatprep.subr.mxu0 0.0
    %2963 = vmatpush2.msra.mxu0 %v233
    %2964 = vmatprep.subr.mxu0 0.0
    %2965 = vmatpush2.msra.mxu0 %v232
    %2966 = vmatprep.subr.mxu0 0.0
    %2967 = vmatpush2.msra.mxu0 %v231
    %2968 = vmatprep.subr.mxu0 0.0
    %2969 = vmatpush2.msra.mxu0 %v230
    %2970 = vmatprep.subr.mxu0 0.0
    %2971 = vmatpush2.msra.mxu0 %v229
    %2972 = vmatprep.subr.mxu0 0.0
    %2973 = vmatpush2.msra.mxu0 %v228
    %2974 = vmatprep.subr.mxu0 0.0
    %2975 = vmatpush2.msra.mxu0 %v227
    %2976 = vmatprep.subr.mxu0 0.0
    %2977 = vmatpush2.msra.mxu0 %v226
    %2978 = vmatprep.subr.mxu0 0.0
    %2979 = vmatpush2.msra.mxu0 %v225
    %2980 = vmatprep.subr.mxu0 0.0
    %2981 = vmatpush2.msra.mxu0 %v224
    %2982 = vmatprep.subr.mxu0 0.0
    %2983 = vmatpush2.msra.mxu0 %v223
    %2984 = vmatprep.mubr.f32.mxu0 %v1821
    %2985 = vmatmul.mubr.f32.gmra.mxu0 %v1820
    %v2986 = vpop.f32.mrf.mxu0
    %v2987 = vadd.f32 %v2917, %v2986
    %v2988 = vpop.f32.mrf.mxu0
    %2989 = vdwg.mxu0
    %2990 = vmatprep.subr.mxu0 0.0
    %2991 = vmatpush1.msra.mxu0 %v254
    %2992 = vmatprep.subr.mxu0 0.0
    %2993 = vmatpush1.msra.mxu0 %v253
    %2994 = vmatprep.subr.mxu0 0.0
    %2995 = vmatpush1.msra.mxu0 %v252
    %2996 = vmatprep.subr.mxu0 0.0
    %2997 = vmatpush1.msra.mxu0 %v251
    %2998 = vmatprep.subr.mxu0 0.0
    %2999 = vmatpush1.msra.mxu0 %v250
    %3000 = vmatprep.subr.mxu0 0.0
    %3001 = vmatpush1.msra.mxu0 %v249
    %3002 = vmatprep.subr.mxu0 0.0
    %3003 = vmatpush1.msra.mxu0 %v248
    %3004 = vmatprep.subr.mxu0 0.0
    %3005 = vmatpush1.msra.mxu0 %v247
    %3006 = vmatprep.subr.mxu0 0.0
    %3007 = vmatpush1.msra.mxu0 %v246
    %3008 = vmatprep.subr.mxu0 0.0
    %3009 = vmatpush1.msra.mxu0 %v245
    %3010 = vmatprep.subr.mxu0 0.0
    %3011 = vmatpush1.msra.mxu0 %v244
    %3012 = vmatprep.subr.mxu0 0.0
    %3013 = vmatpush1.msra.mxu0 %v243
    %3014 = vmatprep.subr.mxu0 0.0
    %3015 = vmatpush1.msra.mxu0 %v242
    %3016 = vmatprep.subr.mxu0 0.0
    %3017 = vmatpush1.msra.mxu0 %v241
    %3018 = vmatprep.subr.mxu0 0.0
    %3019 = vmatpush1.msra.mxu0 %v240
    %3020 = vmatprep.subr.mxu0 0.0
    %3021 = vmatpush1.msra.mxu0 %v239
    %3022 = vmatprep.subr.mxu0 0.0
    %3023 = vmatpush2.msra.mxu0 %v270
    %3024 = vmatprep.subr.mxu0 0.0
    %3025 = vmatpush2.msra.mxu0 %v269
    %3026 = vmatprep.subr.mxu0 0.0
    %3027 = vmatpush2.msra.mxu0 %v268
    %3028 = vmatprep.subr.mxu0 0.0
    %3029 = vmatpush2.msra.mxu0 %v267
    %3030 = vmatprep.subr.mxu0 0.0
    %3031 = vmatpush2.msra.mxu0 %v266
    %3032 = vmatprep.subr.mxu0 0.0
    %3033 = vmatpush2.msra.mxu0 %v265
    %3034 = vmatprep.subr.mxu0 0.0
    %3035 = vmatpush2.msra.mxu0 %v264
    %3036 = vmatprep.subr.mxu0 0.0
    %3037 = vmatpush2.msra.mxu0 %v263
    %3038 = vmatprep.subr.mxu0 0.0
    %3039 = vmatpush2.msra.mxu0 %v262
    %3040 = vmatprep.subr.mxu0 0.0
    %3041 = vmatpush2.msra.mxu0 %v261
    %3042 = vmatprep.subr.mxu0 0.0
    %3043 = vmatpush2.msra.mxu0 %v260
    %3044 = vmatprep.subr.mxu0 0.0
    %3045 = vmatpush2.msra.mxu0 %v259
    %3046 = vmatprep.subr.mxu0 0.0
    %3047 = vmatpush2.msra.mxu0 %v258
    %3048 = vmatprep.subr.mxu0 0.0
    %3049 = vmatpush2.msra.mxu0 %v257
    %3050 = vmatprep.subr.mxu0 0.0
    %3051 = vmatpush2.msra.mxu0 %v256
    %3052 = vmatprep.subr.mxu0 0.0
    %3053 = vmatpush2.msra.mxu0 %v255
    %3054 = vmatprep.mubr.f32.mxu0 %v1855
    %3055 = vmatmul.mubr.f32.gmra.mxu0 %v1854
    %v3056 = vpop.f32.mrf.mxu0
    %v3057 = vadd.f32 %v2987, %v3056
    %v3058 = vpop.f32.mrf.mxu0
    %3059 = vdwg.mxu0
    %3060 = vmatprep.subr.mxu0 0.0
    %3061 = vmatpush1.msra.mxu0 %v286
    %3062 = vmatprep.subr.mxu0 0.0
    %3063 = vmatpush1.msra.mxu0 %v285
    %3064 = vmatprep.subr.mxu0 0.0
    %3065 = vmatpush1.msra.mxu0 %v284
    %3066 = vmatprep.subr.mxu0 0.0
    %3067 = vmatpush1.msra.mxu0 %v283
    %3068 = vmatprep.subr.mxu0 0.0
    %3069 = vmatpush1.msra.mxu0 %v282
    %3070 = vmatprep.subr.mxu0 0.0
    %3071 = vmatpush1.msra.mxu0 %v281
    %3072 = vmatprep.subr.mxu0 0.0
    %3073 = vmatpush1.msra.mxu0 %v280
    %3074 = vmatprep.subr.mxu0 0.0
    %3075 = vmatpush1.msra.mxu0 %v279
    %3076 = vmatprep.subr.mxu0 0.0
    %3077 = vmatpush1.msra.mxu0 %v278
    %3078 = vmatprep.subr.mxu0 0.0
    %3079 = vmatpush1.msra.mxu0 %v277
    %3080 = vmatprep.subr.mxu0 0.0
    %3081 = vmatpush1.msra.mxu0 %v276
    %3082 = vmatprep.subr.mxu0 0.0
    %3083 = vmatpush1.msra.mxu0 %v275
    %3084 = vmatprep.subr.mxu0 0.0
    %3085 = vmatpush1.msra.mxu0 %v274
    %3086 = vmatprep.subr.mxu0 0.0
    %3087 = vmatpush1.msra.mxu0 %v273
    %3088 = vmatprep.subr.mxu0 0.0
    %3089 = vmatpush1.msra.mxu0 %v272
    %3090 = vmatprep.subr.mxu0 0.0
    %3091 = vmatpush1.msra.mxu0 %v271
    %3092 = vmatprep.subr.mxu0 0.0
    %3093 = vmatpush2.msra.mxu0 %v302
    %3094 = vmatprep.subr.mxu0 0.0
    %3095 = vmatpush2.msra.mxu0 %v301
    %3096 = vmatprep.subr.mxu0 0.0
    %3097 = vmatpush2.msra.mxu0 %v300
    %3098 = vmatprep.subr.mxu0 0.0
    %3099 = vmatpush2.msra.mxu0 %v299
    %3100 = vmatprep.subr.mxu0 0.0
    %3101 = vmatpush2.msra.mxu0 %v298
    %3102 = vmatprep.subr.mxu0 0.0
    %3103 = vmatpush2.msra.mxu0 %v297
    %3104 = vmatprep.subr.mxu0 0.0
    %3105 = vmatpush2.msra.mxu0 %v296
    %3106 = vmatprep.subr.mxu0 0.0
    %3107 = vmatpush2.msra.mxu0 %v295
    %3108 = vmatprep.subr.mxu0 0.0
    %3109 = vmatpush2.msra.mxu0 %v294
    %3110 = vmatprep.subr.mxu0 0.0
    %3111 = vmatpush2.msra.mxu0 %v293
    %3112 = vmatprep.subr.mxu0 0.0
    %3113 = vmatpush2.msra.mxu0 %v292
    %3114 = vmatprep.subr.mxu0 0.0
    %3115 = vmatpush2.msra.mxu0 %v291
    %3116 = vmatprep.subr.mxu0 0.0
    %3117 = vmatpush2.msra.mxu0 %v290
    %3118 = vmatprep.subr.mxu0 0.0
    %3119 = vmatpush2.msra.mxu0 %v289
    %3120 = vmatprep.subr.mxu0 0.0
    %3121 = vmatpush2.msra.mxu0 %v288
    %3122 = vmatprep.subr.mxu0 0.0
    %3123 = vmatpush2.msra.mxu0 %v287
    %3124 = vmatprep.mubr.f32.mxu0 %v1857
    %3125 = vmatmul.mubr.f32.gmra.mxu0 %v1856
    %v3126 = vpop.f32.mrf.mxu0
    %v3127 = vadd.f32 %v3057, %v3126
    %v3128 = vpop.f32.mrf.mxu0
    %3129 = vdwg.mxu0
    %3130 = vmatprep.subr.mxu0 0.0
    %3131 = vmatpush1.msra.mxu0 %v318
    %3132 = vmatprep.subr.mxu0 0.0
    %3133 = vmatpush1.msra.mxu0 %v317
    %3134 = vmatprep.subr.mxu0 0.0
    %3135 = vmatpush1.msra.mxu0 %v316
    %3136 = vmatprep.subr.mxu0 0.0
    %3137 = vmatpush1.msra.mxu0 %v315
    %3138 = vmatprep.subr.mxu0 0.0
    %3139 = vmatpush1.msra.mxu0 %v314
    %3140 = vmatprep.subr.mxu0 0.0
    %3141 = vmatpush1.msra.mxu0 %v313
    %3142 = vmatprep.subr.mxu0 0.0
    %3143 = vmatpush1.msra.mxu0 %v312
    %3144 = vmatprep.subr.mxu0 0.0
    %3145 = vmatpush1.msra.mxu0 %v311
    %3146 = vmatprep.subr.mxu0 0.0
    %3147 = vmatpush1.msra.mxu0 %v310
    %3148 = vmatprep.subr.mxu0 0.0
    %3149 = vmatpush1.msra.mxu0 %v309
    %3150 = vmatprep.subr.mxu0 0.0
    %3151 = vmatpush1.msra.mxu0 %v308
    %3152 = vmatprep.subr.mxu0 0.0
    %3153 = vmatpush1.msra.mxu0 %v307
    %3154 = vmatprep.subr.mxu0 0.0
    %3155 = vmatpush1.msra.mxu0 %v306
    %3156 = vmatprep.subr.mxu0 0.0
    %3157 = vmatpush1.msra.mxu0 %v305
    %3158 = vmatprep.subr.mxu0 0.0
    %3159 = vmatpush1.msra.mxu0 %v304
    %3160 = vmatprep.subr.mxu0 0.0
    %3161 = vmatpush1.msra.mxu0 %v303
    %3162 = vmatprep.subr.mxu0 0.0
    %3163 = vmatpush2.msra.mxu0 %v334
    %3164 = vmatprep.subr.mxu0 0.0
    %3165 = vmatpush2.msra.mxu0 %v333
    %3166 = vmatprep.subr.mxu0 0.0
    %3167 = vmatpush2.msra.mxu0 %v332
    %3168 = vmatprep.subr.mxu0 0.0
    %3169 = vmatpush2.msra.mxu0 %v331
    %3170 = vmatprep.subr.mxu0 0.0
    %3171 = vmatpush2.msra.mxu0 %v330
    %3172 = vmatprep.subr.mxu0 0.0
    %3173 = vmatpush2.msra.mxu0 %v329
    %3174 = vmatprep.subr.mxu0 0.0
    %3175 = vmatpush2.msra.mxu0 %v328
    %3176 = vmatprep.subr.mxu0 0.0
    %3177 = vmatpush2.msra.mxu0 %v327
    %3178 = vmatprep.subr.mxu0 0.0
    %3179 = vmatpush2.msra.mxu0 %v326
    %3180 = vmatprep.subr.mxu0 0.0
    %3181 = vmatpush2.msra.mxu0 %v325
    %3182 = vmatprep.subr.mxu0 0.0
    %3183 = vmatpush2.msra.mxu0 %v324
    %3184 = vmatprep.subr.mxu0 0.0
    %3185 = vmatpush2.msra.mxu0 %v323
    %3186 = vmatprep.subr.mxu0 0.0
    %3187 = vmatpush2.msra.mxu0 %v322
    %3188 = vmatprep.subr.mxu0 0.0
    %3189 = vmatpush2.msra.mxu0 %v321
    %3190 = vmatprep.subr.mxu0 0.0
    %3191 = vmatpush2.msra.mxu0 %v320
    %3192 = vmatprep.subr.mxu0 0.0
    %3193 = vmatpush2.msra.mxu0 %v319
    %3194 = vmatprep.mubr.f32.mxu0 %v1891
    %3195 = vmatmul.mubr.f32.gmra.mxu0 %v1890
    %v3196 = vpop.f32.mrf.mxu0
    %v3197 = vadd.f32 %v3127, %v3196
    %v3198 = vpop.f32.mrf.mxu0
    %3199 = vdwg.mxu0
    %3200 = vmatprep.subr.mxu0 0.0
    %3201 = vmatpush1.msra.mxu0 %v350
    %3202 = vmatprep.subr.mxu0 0.0
    %3203 = vmatpush1.msra.mxu0 %v349
    %3204 = vmatprep.subr.mxu0 0.0
    %3205 = vmatpush1.msra.mxu0 %v348
    %3206 = vmatprep.subr.mxu0 0.0
    %3207 = vmatpush1.msra.mxu0 %v347
    %3208 = vmatprep.subr.mxu0 0.0
    %3209 = vmatpush1.msra.mxu0 %v346
    %3210 = vmatprep.subr.mxu0 0.0
    %3211 = vmatpush1.msra.mxu0 %v345
    %3212 = vmatprep.subr.mxu0 0.0
    %3213 = vmatpush1.msra.mxu0 %v344
    %3214 = vmatprep.subr.mxu0 0.0
    %3215 = vmatpush1.msra.mxu0 %v343
    %3216 = vmatprep.subr.mxu0 0.0
    %3217 = vmatpush1.msra.mxu0 %v342
    %3218 = vmatprep.subr.mxu0 0.0
    %3219 = vmatpush1.msra.mxu0 %v341
    %3220 = vmatprep.subr.mxu0 0.0
    %3221 = vmatpush1.msra.mxu0 %v340
    %3222 = vmatprep.subr.mxu0 0.0
    %3223 = vmatpush1.msra.mxu0 %v339
    %3224 = vmatprep.subr.mxu0 0.0
    %3225 = vmatpush1.msra.mxu0 %v338
    %3226 = vmatprep.subr.mxu0 0.0
    %3227 = vmatpush1.msra.mxu0 %v337
    %3228 = vmatprep.subr.mxu0 0.0
    %3229 = vmatpush1.msra.mxu0 %v336
    %3230 = vmatprep.subr.mxu0 0.0
    %3231 = vmatpush1.msra.mxu0 %v335
    %3232 = vmatprep.subr.mxu0 0.0
    %3233 = vmatpush2.msra.mxu0 %v366
    %3234 = vmatprep.subr.mxu0 0.0
    %3235 = vmatpush2.msra.mxu0 %v365
    %3236 = vmatprep.subr.mxu0 0.0
    %3237 = vmatpush2.msra.mxu0 %v364
    %3238 = vmatprep.subr.mxu0 0.0
    %3239 = vmatpush2.msra.mxu0 %v363
    %3240 = vmatprep.subr.mxu0 0.0
    %3241 = vmatpush2.msra.mxu0 %v362
    %3242 = vmatprep.subr.mxu0 0.0
    %3243 = vmatpush2.msra.mxu0 %v361
    %3244 = vmatprep.subr.mxu0 0.0
    %3245 = vmatpush2.msra.mxu0 %v360
    %3246 = vmatprep.subr.mxu0 0.0
    %3247 = vmatpush2.msra.mxu0 %v359
    %3248 = vmatprep.subr.mxu0 0.0
    %3249 = vmatpush2.msra.mxu0 %v358
    %3250 = vmatprep.subr.mxu0 0.0
    %3251 = vmatpush2.msra.mxu0 %v357
    %3252 = vmatprep.subr.mxu0 0.0
    %3253 = vmatpush2.msra.mxu0 %v356
    %3254 = vmatprep.subr.mxu0 0.0
    %3255 = vmatpush2.msra.mxu0 %v355
    %3256 = vmatprep.subr.mxu0 0.0
    %3257 = vmatpush2.msra.mxu0 %v354
    %3258 = vmatprep.subr.mxu0 0.0
    %3259 = vmatpush2.msra.mxu0 %v353
    %3260 = vmatprep.subr.mxu0 0.0
    %3261 = vmatpush2.msra.mxu0 %v352
    %3262 = vmatprep.subr.mxu0 0.0
    %3263 = vmatpush2.msra.mxu0 %v351
    %3264 = vmatprep.mubr.f32.mxu0 %v1893
    %3265 = vmatmul.mubr.f32.gmra.mxu0 %v1892
    %v3266 = vpop.f32.mrf.mxu0
    %v3267 = vadd.f32 %v3197, %v3266
    %v3268 = vpop.f32.mrf.mxu0
    %3269 = vdwg.mxu0
    %3270 = vmatprep.subr.mxu0 0.0
    %3271 = vmatpush1.msra.mxu0 %v382
    %3272 = vmatprep.subr.mxu0 0.0
    %3273 = vmatpush1.msra.mxu0 %v381
    %3274 = vmatprep.subr.mxu0 0.0
    %3275 = vmatpush1.msra.mxu0 %v380
    %3276 = vmatprep.subr.mxu0 0.0
    %3277 = vmatpush1.msra.mxu0 %v379
    %3278 = vmatprep.subr.mxu0 0.0
    %3279 = vmatpush1.msra.mxu0 %v378
    %3280 = vmatprep.subr.mxu0 0.0
    %3281 = vmatpush1.msra.mxu0 %v377
    %3282 = vmatprep.subr.mxu0 0.0
    %3283 = vmatpush1.msra.mxu0 %v376
    %3284 = vmatprep.subr.mxu0 0.0
    %3285 = vmatpush1.msra.mxu0 %v375
    %3286 = vmatprep.subr.mxu0 0.0
    %3287 = vmatpush1.msra.mxu0 %v374
    %3288 = vmatprep.subr.mxu0 0.0
    %3289 = vmatpush1.msra.mxu0 %v373
    %3290 = vmatprep.subr.mxu0 0.0
    %3291 = vmatpush1.msra.mxu0 %v372
    %3292 = vmatprep.subr.mxu0 0.0
    %3293 = vmatpush1.msra.mxu0 %v371
    %3294 = vmatprep.subr.mxu0 0.0
    %3295 = vmatpush1.msra.mxu0 %v370
    %3296 = vmatprep.subr.mxu0 0.0
    %3297 = vmatpush1.msra.mxu0 %v369
    %3298 = vmatprep.subr.mxu0 0.0
    %3299 = vmatpush1.msra.mxu0 %v368
    %3300 = vmatprep.subr.mxu0 0.0
    %3301 = vmatpush1.msra.mxu0 %v367
    %3302 = vmatprep.subr.mxu0 0.0
    %3303 = vmatpush2.msra.mxu0 %v398
    %3304 = vmatprep.subr.mxu0 0.0
    %3305 = vmatpush2.msra.mxu0 %v397
    %3306 = vmatprep.subr.mxu0 0.0
    %3307 = vmatpush2.msra.mxu0 %v396
    %3308 = vmatprep.subr.mxu0 0.0
    %3309 = vmatpush2.msra.mxu0 %v395
    %3310 = vmatprep.subr.mxu0 0.0
    %3311 = vmatpush2.msra.mxu0 %v394
    %3312 = vmatprep.subr.mxu0 0.0
    %3313 = vmatpush2.msra.mxu0 %v393
    %3314 = vmatprep.subr.mxu0 0.0
    %3315 = vmatpush2.msra.mxu0 %v392
    %3316 = vmatprep.subr.mxu0 0.0
    %3317 = vmatpush2.msra.mxu0 %v391
    %3318 = vmatprep.subr.mxu0 0.0
    %3319 = vmatpush2.msra.mxu0 %v390
    %3320 = vmatprep.subr.mxu0 0.0
    %3321 = vmatpush2.msra.mxu0 %v389
    %3322 = vmatprep.subr.mxu0 0.0
    %3323 = vmatpush2.msra.mxu0 %v388
    %3324 = vmatprep.subr.mxu0 0.0
    %3325 = vmatpush2.msra.mxu0 %v387
    %3326 = vmatprep.subr.mxu0 0.0
    %3327 = vmatpush2.msra.mxu0 %v386
    %3328 = vmatprep.subr.mxu0 0.0
    %3329 = vmatpush2.msra.mxu0 %v385
    %3330 = vmatprep.subr.mxu0 0.0
    %3331 = vmatpush2.msra.mxu0 %v384
    %3332 = vmatprep.subr.mxu0 0.0
    %3333 = vmatpush2.msra.mxu0 %v383
    %3334 = vmatprep.mubr.f32.mxu0 %v1927
    %3335 = vmatmul.mubr.f32.gmra.mxu0 %v1926
    %v3336 = vpop.f32.mrf.mxu0
    %v3337 = vadd.f32 %v3267, %v3336
    %v3338 = vpop.f32.mrf.mxu0
    %3339 = vdwg.mxu0
    %3340 = vmatprep.subr.mxu0 0.0
    %3341 = vmatpush1.msra.mxu0 %v414
    %3342 = vmatprep.subr.mxu0 0.0
    %3343 = vmatpush1.msra.mxu0 %v413
    %3344 = vmatprep.subr.mxu0 0.0
    %3345 = vmatpush1.msra.mxu0 %v412
    %3346 = vmatprep.subr.mxu0 0.0
    %3347 = vmatpush1.msra.mxu0 %v411
    %3348 = vmatprep.subr.mxu0 0.0
    %3349 = vmatpush1.msra.mxu0 %v410
    %3350 = vmatprep.subr.mxu0 0.0
    %3351 = vmatpush1.msra.mxu0 %v409
    %3352 = vmatprep.subr.mxu0 0.0
    %3353 = vmatpush1.msra.mxu0 %v408
    %3354 = vmatprep.subr.mxu0 0.0
    %3355 = vmatpush1.msra.mxu0 %v407
    %3356 = vmatprep.subr.mxu0 0.0
    %3357 = vmatpush1.msra.mxu0 %v406
    %3358 = vmatprep.subr.mxu0 0.0
    %3359 = vmatpush1.msra.mxu0 %v405
    %3360 = vmatprep.subr.mxu0 0.0
    %3361 = vmatpush1.msra.mxu0 %v404
    %3362 = vmatprep.subr.mxu0 0.0
    %3363 = vmatpush1.msra.mxu0 %v403
    %3364 = vmatprep.subr.mxu0 0.0
    %3365 = vmatpush1.msra.mxu0 %v402
    %3366 = vmatprep.subr.mxu0 0.0
    %3367 = vmatpush1.msra.mxu0 %v401
    %3368 = vmatprep.subr.mxu0 0.0
    %3369 = vmatpush1.msra.mxu0 %v400
    %3370 = vmatprep.subr.mxu0 0.0
    %3371 = vmatpush1.msra.mxu0 %v399
    %3372 = vmatprep.subr.mxu0 0.0
    %3373 = vmatpush2.msra.mxu0 %v430
    %3374 = vmatprep.subr.mxu0 0.0
    %3375 = vmatpush2.msra.mxu0 %v429
    %3376 = vmatprep.subr.mxu0 0.0
    %3377 = vmatpush2.msra.mxu0 %v428
    %3378 = vmatprep.subr.mxu0 0.0
    %3379 = vmatpush2.msra.mxu0 %v427
    %3380 = vmatprep.subr.mxu0 0.0
    %3381 = vmatpush2.msra.mxu0 %v426
    %3382 = vmatprep.subr.mxu0 0.0
    %3383 = vmatpush2.msra.mxu0 %v425
    %3384 = vmatprep.subr.mxu0 0.0
    %3385 = vmatpush2.msra.mxu0 %v424
    %3386 = vmatprep.subr.mxu0 0.0
    %3387 = vmatpush2.msra.mxu0 %v423
    %3388 = vmatprep.subr.mxu0 0.0
    %3389 = vmatpush2.msra.mxu0 %v422
    %3390 = vmatprep.subr.mxu0 0.0
    %3391 = vmatpush2.msra.mxu0 %v421
    %3392 = vmatprep.subr.mxu0 0.0
    %3393 = vmatpush2.msra.mxu0 %v420
    %3394 = vmatprep.subr.mxu0 0.0
    %3395 = vmatpush2.msra.mxu0 %v419
    %3396 = vmatprep.subr.mxu0 0.0
    %3397 = vmatpush2.msra.mxu0 %v418
    %3398 = vmatprep.subr.mxu0 0.0
    %3399 = vmatpush2.msra.mxu0 %v417
    %3400 = vmatprep.subr.mxu0 0.0
    %3401 = vmatpush2.msra.mxu0 %v416
    %3402 = vmatprep.subr.mxu0 0.0
    %3403 = vmatpush2.msra.mxu0 %v415
    %3404 = vmatprep.mubr.f32.mxu0 %v1929
    %3405 = vmatmul.mubr.f32.gmra.mxu0 %v1928
    %v3406 = vpop.f32.mrf.mxu0
    %v3407 = vadd.f32 %v3337, %v3406
    %v3408 = vpop.f32.mrf.mxu0
    %3409 = vdwg.mxu0
    %3410 = vmatprep.subr.mxu0 0.0
    %3411 = vmatpush1.msra.mxu0 %v446
    %3412 = vmatprep.subr.mxu0 0.0
    %3413 = vmatpush1.msra.mxu0 %v445
    %3414 = vmatprep.subr.mxu0 0.0
    %3415 = vmatpush1.msra.mxu0 %v444
    %3416 = vmatprep.subr.mxu0 0.0
    %3417 = vmatpush1.msra.mxu0 %v443
    %3418 = vmatprep.subr.mxu0 0.0
    %3419 = vmatpush1.msra.mxu0 %v442
    %3420 = vmatprep.subr.mxu0 0.0
    %3421 = vmatpush1.msra.mxu0 %v441
    %3422 = vmatprep.subr.mxu0 0.0
    %3423 = vmatpush1.msra.mxu0 %v440
    %3424 = vmatprep.subr.mxu0 0.0
    %3425 = vmatpush1.msra.mxu0 %v439
    %3426 = vmatprep.subr.mxu0 0.0
    %3427 = vmatpush1.msra.mxu0 %v438
    %3428 = vmatprep.subr.mxu0 0.0
    %3429 = vmatpush1.msra.mxu0 %v437
    %3430 = vmatprep.subr.mxu0 0.0
    %3431 = vmatpush1.msra.mxu0 %v436
    %3432 = vmatprep.subr.mxu0 0.0
    %3433 = vmatpush1.msra.mxu0 %v435
    %3434 = vmatprep.subr.mxu0 0.0
    %3435 = vmatpush1.msra.mxu0 %v434
    %3436 = vmatprep.subr.mxu0 0.0
    %3437 = vmatpush1.msra.mxu0 %v433
    %3438 = vmatprep.subr.mxu0 0.0
    %3439 = vmatpush1.msra.mxu0 %v432
    %3440 = vmatprep.subr.mxu0 0.0
    %3441 = vmatpush1.msra.mxu0 %v431
    %3442 = vmatprep.subr.mxu0 0.0
    %3443 = vmatpush2.msra.mxu0 %v462
    %3444 = vmatprep.subr.mxu0 0.0
    %3445 = vmatpush2.msra.mxu0 %v461
    %3446 = vmatprep.subr.mxu0 0.0
    %3447 = vmatpush2.msra.mxu0 %v460
    %3448 = vmatprep.subr.mxu0 0.0
    %3449 = vmatpush2.msra.mxu0 %v459
    %3450 = vmatprep.subr.mxu0 0.0
    %3451 = vmatpush2.msra.mxu0 %v458
    %3452 = vmatprep.subr.mxu0 0.0
    %3453 = vmatpush2.msra.mxu0 %v457
    %3454 = vmatprep.subr.mxu0 0.0
    %3455 = vmatpush2.msra.mxu0 %v456
    %3456 = vmatprep.subr.mxu0 0.0
    %3457 = vmatpush2.msra.mxu0 %v455
    %3458 = vmatprep.subr.mxu0 0.0
    %3459 = vmatpush2.msra.mxu0 %v454
    %3460 = vmatprep.subr.mxu0 0.0
    %3461 = vmatpush2.msra.mxu0 %v453
    %3462 = vmatprep.subr.mxu0 0.0
    %3463 = vmatpush2.msra.mxu0 %v452
    %3464 = vmatprep.subr.mxu0 0.0
    %3465 = vmatpush2.msra.mxu0 %v451
    %3466 = vmatprep.subr.mxu0 0.0
    %3467 = vmatpush2.msra.mxu0 %v450
    %3468 = vmatprep.subr.mxu0 0.0
    %3469 = vmatpush2.msra.mxu0 %v449
    %3470 = vmatprep.subr.mxu0 0.0
    %3471 = vmatpush2.msra.mxu0 %v448
    %3472 = vmatprep.subr.mxu0 0.0
    %3473 = vmatpush2.msra.mxu0 %v447
    %3474 = vmatprep.mubr.f32.mxu0 %v1963
    %3475 = vmatmul.mubr.f32.gmra.mxu0 %v1962
    %v3476 = vpop.f32.mrf.mxu0
    %v3477 = vadd.f32 %v3407, %v3476
    %v3478 = vpop.f32.mrf.mxu0
    %3479 = vdwg.mxu0
    %3480 = vmatprep.subr.mxu0 0.0
    %3481 = vmatpush1.msra.mxu0 %v478
    %3482 = vmatprep.subr.mxu0 0.0
    %3483 = vmatpush1.msra.mxu0 %v477
    %3484 = vmatprep.subr.mxu0 0.0
    %3485 = vmatpush1.msra.mxu0 %v476
    %3486 = vmatprep.subr.mxu0 0.0
    %3487 = vmatpush1.msra.mxu0 %v475
    %3488 = vmatprep.subr.mxu0 0.0
    %3489 = vmatpush1.msra.mxu0 %v474
    %3490 = vmatprep.subr.mxu0 0.0
    %3491 = vmatpush1.msra.mxu0 %v473
    %3492 = vmatprep.subr.mxu0 0.0
    %3493 = vmatpush1.msra.mxu0 %v472
    %3494 = vmatprep.subr.mxu0 0.0
    %3495 = vmatpush1.msra.mxu0 %v471
    %3496 = vmatprep.subr.mxu0 0.0
    %3497 = vmatpush1.msra.mxu0 %v470
    %3498 = vmatprep.subr.mxu0 0.0
    %3499 = vmatpush1.msra.mxu0 %v469
    %3500 = vmatprep.subr.mxu0 0.0
    %3501 = vmatpush1.msra.mxu0 %v468
    %3502 = vmatprep.subr.mxu0 0.0
    %3503 = vmatpush1.msra.mxu0 %v467
    %3504 = vmatprep.subr.mxu0 0.0
    %3505 = vmatpush1.msra.mxu0 %v466
    %3506 = vmatprep.subr.mxu0 0.0
    %3507 = vmatpush1.msra.mxu0 %v465
    %3508 = vmatprep.subr.mxu0 0.0
    %3509 = vmatpush1.msra.mxu0 %v464
    %3510 = vmatprep.subr.mxu0 0.0
    %3511 = vmatpush1.msra.mxu0 %v463
    %3512 = vmatprep.subr.mxu0 0.0
    %3513 = vmatpush2.msra.mxu0 %v494
    %3514 = vmatprep.subr.mxu0 0.0
    %3515 = vmatpush2.msra.mxu0 %v493
    %3516 = vmatprep.subr.mxu0 0.0
    %3517 = vmatpush2.msra.mxu0 %v492
    %3518 = vmatprep.subr.mxu0 0.0
    %3519 = vmatpush2.msra.mxu0 %v491
    %3520 = vmatprep.subr.mxu0 0.0
    %3521 = vmatpush2.msra.mxu0 %v490
    %3522 = vmatprep.subr.mxu0 0.0
    %3523 = vmatpush2.msra.mxu0 %v489
    %3524 = vmatprep.subr.mxu0 0.0
    %3525 = vmatpush2.msra.mxu0 %v488
    %3526 = vmatprep.subr.mxu0 0.0
    %3527 = vmatpush2.msra.mxu0 %v487
    %3528 = vmatprep.subr.mxu0 0.0
    %3529 = vmatpush2.msra.mxu0 %v486
    %3530 = vmatprep.subr.mxu0 0.0
    %3531 = vmatpush2.msra.mxu0 %v485
    %3532 = vmatprep.subr.mxu0 0.0
    %3533 = vmatpush2.msra.mxu0 %v484
    %3534 = vmatprep.subr.mxu0 0.0
    %3535 = vmatpush2.msra.mxu0 %v483
    %3536 = vmatprep.subr.mxu0 0.0
    %3537 = vmatpush2.msra.mxu0 %v482
    %3538 = vmatprep.subr.mxu0 0.0
    %3539 = vmatpush2.msra.mxu0 %v481
    %3540 = vmatprep.subr.mxu0 0.0
    %3541 = vmatpush2.msra.mxu0 %v480
    %3542 = vmatprep.subr.mxu0 0.0
    %3543 = vmatpush2.msra.mxu0 %v479
    %3544 = vmatprep.mubr.f32.mxu0 %v1965
    %3545 = vmatmul.mubr.f32.gmra.mxu0 %v1964
    %v3546 = vpop.f32.mrf.mxu0
    %v3547 = vadd.f32 %v3477, %v3546
    %v3548 = vpop.f32.mrf.mxu0
    %3549 = vdwg.mxu0
    %3550 = vmatprep.subr.mxu0 0.0
    %3551 = vmatpush1.msra.mxu0 %v510
    %3552 = vmatprep.subr.mxu0 0.0
    %3553 = vmatpush1.msra.mxu0 %v509
    %3554 = vmatprep.subr.mxu0 0.0
    %3555 = vmatpush1.msra.mxu0 %v508
    %3556 = vmatprep.subr.mxu0 0.0
    %3557 = vmatpush1.msra.mxu0 %v507
    %3558 = vmatprep.subr.mxu0 0.0
    %3559 = vmatpush1.msra.mxu0 %v506
    %3560 = vmatprep.subr.mxu0 0.0
    %3561 = vmatpush1.msra.mxu0 %v505
    %3562 = vmatprep.subr.mxu0 0.0
    %3563 = vmatpush1.msra.mxu0 %v504
    %3564 = vmatprep.subr.mxu0 0.0
    %3565 = vmatpush1.msra.mxu0 %v503
    %3566 = vmatprep.subr.mxu0 0.0
    %3567 = vmatpush1.msra.mxu0 %v502
    %3568 = vmatprep.subr.mxu0 0.0
    %3569 = vmatpush1.msra.mxu0 %v501
    %3570 = vmatprep.subr.mxu0 0.0
    %3571 = vmatpush1.msra.mxu0 %v500
    %3572 = vmatprep.subr.mxu0 0.0
    %3573 = vmatpush1.msra.mxu0 %v499
    %3574 = vmatprep.subr.mxu0 0.0
    %3575 = vmatpush1.msra.mxu0 %v498
    %3576 = vmatprep.subr.mxu0 0.0
    %3577 = vmatpush1.msra.mxu0 %v497
    %3578 = vmatprep.subr.mxu0 0.0
    %3579 = vmatpush1.msra.mxu0 %v496
    %3580 = vmatprep.subr.mxu0 0.0
    %3581 = vmatpush1.msra.mxu0 %v495
    %3582 = vmatprep.subr.mxu0 0.0
    %3583 = vmatpush2.msra.mxu0 %v526
    %3584 = vmatprep.subr.mxu0 0.0
    %3585 = vmatpush2.msra.mxu0 %v525
    %3586 = vmatprep.subr.mxu0 0.0
    %3587 = vmatpush2.msra.mxu0 %v524
    %3588 = vmatprep.subr.mxu0 0.0
    %3589 = vmatpush2.msra.mxu0 %v523
    %3590 = vmatprep.subr.mxu0 0.0
    %3591 = vmatpush2.msra.mxu0 %v522
    %3592 = vmatprep.subr.mxu0 0.0
    %3593 = vmatpush2.msra.mxu0 %v521
    %3594 = vmatprep.subr.mxu0 0.0
    %3595 = vmatpush2.msra.mxu0 %v520
    %3596 = vmatprep.subr.mxu0 0.0
    %3597 = vmatpush2.msra.mxu0 %v519
    %3598 = vmatprep.subr.mxu0 0.0
    %3599 = vmatpush2.msra.mxu0 %v518
    %3600 = vmatprep.subr.mxu0 0.0
    %3601 = vmatpush2.msra.mxu0 %v517
    %3602 = vmatprep.subr.mxu0 0.0
    %3603 = vmatpush2.msra.mxu0 %v516
    %3604 = vmatprep.subr.mxu0 0.0
    %3605 = vmatpush2.msra.mxu0 %v515
    %3606 = vmatprep.subr.mxu0 0.0
    %3607 = vmatpush2.msra.mxu0 %v514
    %3608 = vmatprep.subr.mxu0 0.0
    %3609 = vmatpush2.msra.mxu0 %v513
    %3610 = vmatprep.subr.mxu0 0.0
    %3611 = vmatpush2.msra.mxu0 %v512
    %3612 = vmatprep.subr.mxu0 0.0
    %3613 = vmatpush2.msra.mxu0 %v511
    %3614 = vmatprep.mubr.f32.mxu0 %v1999
    %3615 = vmatmul.mubr.f32.gmra.mxu0 %v1998
    %v3616 = vpop.f32.mrf.mxu0
    %v3617 = vadd.f32 %v3547, %v3616
    %v3618 = vpop.f32.mrf.mxu0
    %3619 = vdwg.mxu0
    %3620 = vmatprep.subr.mxu0 0.0
    %3621 = vmatpush1.msra.mxu0 %v542
    %3622 = vmatprep.subr.mxu0 0.0
    %3623 = vmatpush1.msra.mxu0 %v541
    %3624 = vmatprep.subr.mxu0 0.0
    %3625 = vmatpush1.msra.mxu0 %v540
    %3626 = vmatprep.subr.mxu0 0.0
    %3627 = vmatpush1.msra.mxu0 %v539
    %3628 = vmatprep.subr.mxu0 0.0
    %3629 = vmatpush1.msra.mxu0 %v538
    %3630 = vmatprep.subr.mxu0 0.0
    %3631 = vmatpush1.msra.mxu0 %v537
    %3632 = vmatprep.subr.mxu0 0.0
    %3633 = vmatpush1.msra.mxu0 %v536
    %3634 = vmatprep.subr.mxu0 0.0
    %3635 = vmatpush1.msra.mxu0 %v535
    %3636 = vmatprep.subr.mxu0 0.0
    %3637 = vmatpush1.msra.mxu0 %v534
    %3638 = vmatprep.subr.mxu0 0.0
    %3639 = vmatpush1.msra.mxu0 %v533
    %3640 = vmatprep.subr.mxu0 0.0
    %3641 = vmatpush1.msra.mxu0 %v532
    %3642 = vmatprep.subr.mxu0 0.0
    %3643 = vmatpush1.msra.mxu0 %v531
    %3644 = vmatprep.subr.mxu0 0.0
    %3645 = vmatpush1.msra.mxu0 %v530
    %3646 = vmatprep.subr.mxu0 0.0
    %3647 = vmatpush1.msra.mxu0 %v529
    %3648 = vmatprep.subr.mxu0 0.0
    %3649 = vmatpush1.msra.mxu0 %v528
    %3650 = vmatprep.subr.mxu0 0.0
    %3651 = vmatpush1.msra.mxu0 %v527
    %3652 = vmatprep.subr.mxu0 0.0
    %3653 = vmatpush2.msra.mxu0 %v558
    %3654 = vmatprep.subr.mxu0 0.0
    %3655 = vmatpush2.msra.mxu0 %v557
    %3656 = vmatprep.subr.mxu0 0.0
    %3657 = vmatpush2.msra.mxu0 %v556
    %3658 = vmatprep.subr.mxu0 0.0
    %3659 = vmatpush2.msra.mxu0 %v555
    %3660 = vmatprep.subr.mxu0 0.0
    %3661 = vmatpush2.msra.mxu0 %v554
    %3662 = vmatprep.subr.mxu0 0.0
    %3663 = vmatpush2.msra.mxu0 %v553
    %3664 = vmatprep.subr.mxu0 0.0
    %3665 = vmatpush2.msra.mxu0 %v552
    %3666 = vmatprep.subr.mxu0 0.0
    %3667 = vmatpush2.msra.mxu0 %v551
    %3668 = vmatprep.subr.mxu0 0.0
    %3669 = vmatpush2.msra.mxu0 %v550
    %3670 = vmatprep.subr.mxu0 0.0
    %3671 = vmatpush2.msra.mxu0 %v549
    %3672 = vmatprep.subr.mxu0 0.0
    %3673 = vmatpush2.msra.mxu0 %v548
    %3674 = vmatprep.subr.mxu0 0.0
    %3675 = vmatpush2.msra.mxu0 %v547
    %3676 = vmatprep.subr.mxu0 0.0
    %3677 = vmatpush2.msra.mxu0 %v546
    %3678 = vmatprep.subr.mxu0 0.0
    %3679 = vmatpush2.msra.mxu0 %v545
    %3680 = vmatprep.subr.mxu0 0.0
    %3681 = vmatpush2.msra.mxu0 %v544
    %3682 = vmatprep.subr.mxu0 0.0
    %3683 = vmatpush2.msra.mxu0 %v543
    %3684 = vmatprep.mubr.f32.mxu0 %v2001
    %3685 = vmatmul.mubr.f32.gmra.mxu0 %v2000
    %v3686 = vpop.f32.mrf.mxu0
    %v3687 = vadd.f32 %v3617, %v3686
    %v3688 = vpop.f32.mrf.mxu0
    %3689 = vdwg.mxu0
    %3690 = vmatprep.subr.mxu0 0.0
    %3691 = vmatpush1.msra.mxu0 %v574
    %3692 = vmatprep.subr.mxu0 0.0
    %3693 = vmatpush1.msra.mxu0 %v573
    %3694 = vmatprep.subr.mxu0 0.0
    %3695 = vmatpush1.msra.mxu0 %v572
    %3696 = vmatprep.subr.mxu0 0.0
    %3697 = vmatpush1.msra.mxu0 %v571
    %3698 = vmatprep.subr.mxu0 0.0
    %3699 = vmatpush1.msra.mxu0 %v570
    %3700 = vmatprep.subr.mxu0 0.0
    %3701 = vmatpush1.msra.mxu0 %v569
    %3702 = vmatprep.subr.mxu0 0.0
    %3703 = vmatpush1.msra.mxu0 %v568
    %3704 = vmatprep.subr.mxu0 0.0
    %3705 = vmatpush1.msra.mxu0 %v567
    %3706 = vmatprep.subr.mxu0 0.0
    %3707 = vmatpush1.msra.mxu0 %v566
    %3708 = vmatprep.subr.mxu0 0.0
    %3709 = vmatpush1.msra.mxu0 %v565
    %3710 = vmatprep.subr.mxu0 0.0
    %3711 = vmatpush1.msra.mxu0 %v564
    %3712 = vmatprep.subr.mxu0 0.0
    %3713 = vmatpush1.msra.mxu0 %v563
    %3714 = vmatprep.subr.mxu0 0.0
    %3715 = vmatpush1.msra.mxu0 %v562
    %3716 = vmatprep.subr.mxu0 0.0
    %3717 = vmatpush1.msra.mxu0 %v561
    %3718 = vmatprep.subr.mxu0 0.0
    %3719 = vmatpush1.msra.mxu0 %v560
    %3720 = vmatprep.subr.mxu0 0.0
    %3721 = vmatpush1.msra.mxu0 %v559
    %3722 = vmatprep.subr.mxu0 0.0
    %3723 = vmatpush2.msra.mxu0 %v590
    %3724 = vmatprep.subr.mxu0 0.0
    %3725 = vmatpush2.msra.mxu0 %v589
    %3726 = vmatprep.subr.mxu0 0.0
    %3727 = vmatpush2.msra.mxu0 %v588
    %3728 = vmatprep.subr.mxu0 0.0
    %3729 = vmatpush2.msra.mxu0 %v587
    %3730 = vmatprep.subr.mxu0 0.0
    %3731 = vmatpush2.msra.mxu0 %v586
    %3732 = vmatprep.subr.mxu0 0.0
    %3733 = vmatpush2.msra.mxu0 %v585
    %3734 = vmatprep.subr.mxu0 0.0
    %3735 = vmatpush2.msra.mxu0 %v584
    %3736 = vmatprep.subr.mxu0 0.0
    %3737 = vmatpush2.msra.mxu0 %v583
    %3738 = vmatprep.subr.mxu0 0.0
    %3739 = vmatpush2.msra.mxu0 %v582
    %3740 = vmatprep.subr.mxu0 0.0
    %3741 = vmatpush2.msra.mxu0 %v581
    %3742 = vmatprep.subr.mxu0 0.0
    %3743 = vmatpush2.msra.mxu0 %v580
    %3744 = vmatprep.subr.mxu0 0.0
    %3745 = vmatpush2.msra.mxu0 %v579
    %3746 = vmatprep.subr.mxu0 0.0
    %3747 = vmatpush2.msra.mxu0 %v578
    %3748 = vmatprep.subr.mxu0 0.0
    %3749 = vmatpush2.msra.mxu0 %v577
    %3750 = vmatprep.subr.mxu0 0.0
    %3751 = vmatpush2.msra.mxu0 %v576
    %3752 = vmatprep.subr.mxu0 0.0
    %3753 = vmatpush2.msra.mxu0 %v575
    %3754 = vmatprep.mubr.f32.mxu0 %v2035
    %3755 = vmatmul.mubr.f32.gmra.mxu0 %v2034
    %v3756 = vpop.f32.mrf.mxu0
    %v3757 = vadd.f32 %v3687, %v3756
    %v3758 = vpop.f32.mrf.mxu0
    %3759 = vdwg.mxu0
    %3760 = vmatprep.subr.mxu0 0.0
    %3761 = vmatpush1.msra.mxu0 %v606
    %3762 = vmatprep.subr.mxu0 0.0
    %3763 = vmatpush1.msra.mxu0 %v605
    %3764 = vmatprep.subr.mxu0 0.0
    %3765 = vmatpush1.msra.mxu0 %v604
    %3766 = vmatprep.subr.mxu0 0.0
    %3767 = vmatpush1.msra.mxu0 %v603
    %3768 = vmatprep.subr.mxu0 0.0
    %3769 = vmatpush1.msra.mxu0 %v602
    %3770 = vmatprep.subr.mxu0 0.0
    %3771 = vmatpush1.msra.mxu0 %v601
    %3772 = vmatprep.subr.mxu0 0.0
    %3773 = vmatpush1.msra.mxu0 %v600
    %3774 = vmatprep.subr.mxu0 0.0
    %3775 = vmatpush1.msra.mxu0 %v599
    %3776 = vmatprep.subr.mxu0 0.0
    %3777 = vmatpush1.msra.mxu0 %v598
    %3778 = vmatprep.subr.mxu0 0.0
    %3779 = vmatpush1.msra.mxu0 %v597
    %3780 = vmatprep.subr.mxu0 0.0
    %3781 = vmatpush1.msra.mxu0 %v596
    %3782 = vmatprep.subr.mxu0 0.0
    %3783 = vmatpush1.msra.mxu0 %v595
    %3784 = vmatprep.subr.mxu0 0.0
    %3785 = vmatpush1.msra.mxu0 %v594
    %3786 = vmatprep.subr.mxu0 0.0
    %3787 = vmatpush1.msra.mxu0 %v593
    %3788 = vmatprep.subr.mxu0 0.0
    %3789 = vmatpush1.msra.mxu0 %v592
    %3790 = vmatprep.subr.mxu0 0.0
    %3791 = vmatpush1.msra.mxu0 %v591
    %3792 = vmatprep.subr.mxu0 0.0
    %3793 = vmatpush2.msra.mxu0 %v622
    %3794 = vmatprep.subr.mxu0 0.0
    %3795 = vmatpush2.msra.mxu0 %v621
    %3796 = vmatprep.subr.mxu0 0.0
    %3797 = vmatpush2.msra.mxu0 %v620
    %3798 = vmatprep.subr.mxu0 0.0
    %3799 = vmatpush2.msra.mxu0 %v619
    %3800 = vmatprep.subr.mxu0 0.0
    %3801 = vmatpush2.msra.mxu0 %v618
    %3802 = vmatprep.subr.mxu0 0.0
    %3803 = vmatpush2.msra.mxu0 %v617
    %3804 = vmatprep.subr.mxu0 0.0
    %3805 = vmatpush2.msra.mxu0 %v616
    %3806 = vmatprep.subr.mxu0 0.0
    %3807 = vmatpush2.msra.mxu0 %v615
    %3808 = vmatprep.subr.mxu0 0.0
    %3809 = vmatpush2.msra.mxu0 %v614
    %3810 = vmatprep.subr.mxu0 0.0
    %3811 = vmatpush2.msra.mxu0 %v613
    %3812 = vmatprep.subr.mxu0 0.0
    %3813 = vmatpush2.msra.mxu0 %v612
    %3814 = vmatprep.subr.mxu0 0.0
    %3815 = vmatpush2.msra.mxu0 %v611
    %3816 = vmatprep.subr.mxu0 0.0
    %3817 = vmatpush2.msra.mxu0 %v610
    %3818 = vmatprep.subr.mxu0 0.0
    %3819 = vmatpush2.msra.mxu0 %v609
    %3820 = vmatprep.subr.mxu0 0.0
    %3821 = vmatpush2.msra.mxu0 %v608
    %3822 = vmatprep.subr.mxu0 0.0
    %3823 = vmatpush2.msra.mxu0 %v607
    %3824 = vmatprep.mubr.f32.mxu0 %v2037
    %3825 = vmatmul.mubr.f32.gmra.mxu0 %v2036
    %v3826 = vpop.f32.mrf.mxu0
    %v3827 = vadd.f32 %v3757, %v3826
    %v3828 = vpop.f32.mrf.mxu0
    %3829 = vdwg.mxu0
    %3830 = vmatprep.subr.mxu0 0.0
    %3831 = vmatpush1.msra.mxu0 %v638
    %3832 = vmatprep.subr.mxu0 0.0
    %3833 = vmatpush1.msra.mxu0 %v637
    %3834 = vmatprep.subr.mxu0 0.0
    %3835 = vmatpush1.msra.mxu0 %v636
    %3836 = vmatprep.subr.mxu0 0.0
    %3837 = vmatpush1.msra.mxu0 %v635
    %3838 = vmatprep.subr.mxu0 0.0
    %3839 = vmatpush1.msra.mxu0 %v634
    %3840 = vmatprep.subr.mxu0 0.0
    %3841 = vmatpush1.msra.mxu0 %v633
    %3842 = vmatprep.subr.mxu0 0.0
    %3843 = vmatpush1.msra.mxu0 %v632
    %3844 = vmatprep.subr.mxu0 0.0
    %3845 = vmatpush1.msra.mxu0 %v631
    %3846 = vmatprep.subr.mxu0 0.0
    %3847 = vmatpush1.msra.mxu0 %v630
    %3848 = vmatprep.subr.mxu0 0.0
    %3849 = vmatpush1.msra.mxu0 %v629
    %3850 = vmatprep.subr.mxu0 0.0
    %3851 = vmatpush1.msra.mxu0 %v628
    %3852 = vmatprep.subr.mxu0 0.0
    %3853 = vmatpush1.msra.mxu0 %v627
    %3854 = vmatprep.subr.mxu0 0.0
    %3855 = vmatpush1.msra.mxu0 %v626
    %3856 = vmatprep.subr.mxu0 0.0
    %3857 = vmatpush1.msra.mxu0 %v625
    %3858 = vmatprep.subr.mxu0 0.0
    %3859 = vmatpush1.msra.mxu0 %v624
    %3860 = vmatprep.subr.mxu0 0.0
    %3861 = vmatpush1.msra.mxu0 %v623
    %3862 = vmatprep.subr.mxu0 0.0
    %3863 = vmatpush2.msra.mxu0 %v654
    %3864 = vmatprep.subr.mxu0 0.0
    %3865 = vmatpush2.msra.mxu0 %v653
    %3866 = vmatprep.subr.mxu0 0.0
    %3867 = vmatpush2.msra.mxu0 %v652
    %3868 = vmatprep.subr.mxu0 0.0
    %3869 = vmatpush2.msra.mxu0 %v651
    %3870 = vmatprep.subr.mxu0 0.0
    %3871 = vmatpush2.msra.mxu0 %v650
    %3872 = vmatprep.subr.mxu0 0.0
    %3873 = vmatpush2.msra.mxu0 %v649
    %3874 = vmatprep.subr.mxu0 0.0
    %3875 = vmatpush2.msra.mxu0 %v648
    %3876 = vmatprep.subr.mxu0 0.0
    %3877 = vmatpush2.msra.mxu0 %v647
    %3878 = vmatprep.subr.mxu0 0.0
    %3879 = vmatpush2.msra.mxu0 %v646
    %3880 = vmatprep.subr.mxu0 0.0
    %3881 = vmatpush2.msra.mxu0 %v645
    %3882 = vmatprep.subr.mxu0 0.0
    %3883 = vmatpush2.msra.mxu0 %v644
    %3884 = vmatprep.subr.mxu0 0.0
    %3885 = vmatpush2.msra.mxu0 %v643
    %3886 = vmatprep.subr.mxu0 0.0
    %3887 = vmatpush2.msra.mxu0 %v642
    %3888 = vmatprep.subr.mxu0 0.0
    %3889 = vmatpush2.msra.mxu0 %v641
    %3890 = vmatprep.subr.mxu0 0.0
    %3891 = vmatpush2.msra.mxu0 %v640
    %3892 = vmatprep.subr.mxu0 0.0
    %3893 = vmatpush2.msra.mxu0 %v639
    %3894 = vmatprep.mubr.f32.mxu0 %v2071
    %3895 = vmatmul.mubr.f32.gmra.mxu0 %v2070
    %v3896 = vpop.f32.mrf.mxu0
    %v3897 = vadd.f32 %v3827, %v3896
    %v3898 = vpop.f32.mrf.mxu0
    %3899 = vdwg.mxu0
    %3900 = vmatprep.subr.mxu0 0.0
    %3901 = vmatpush1.msra.mxu0 %v670
    %3902 = vmatprep.subr.mxu0 0.0
    %3903 = vmatpush1.msra.mxu0 %v669
    %3904 = vmatprep.subr.mxu0 0.0
    %3905 = vmatpush1.msra.mxu0 %v668
    %3906 = vmatprep.subr.mxu0 0.0
    %3907 = vmatpush1.msra.mxu0 %v667
    %3908 = vmatprep.subr.mxu0 0.0
    %3909 = vmatpush1.msra.mxu0 %v666
    %3910 = vmatprep.subr.mxu0 0.0
    %3911 = vmatpush1.msra.mxu0 %v665
    %3912 = vmatprep.subr.mxu0 0.0
    %3913 = vmatpush1.msra.mxu0 %v664
    %3914 = vmatprep.subr.mxu0 0.0
    %3915 = vmatpush1.msra.mxu0 %v663
    %3916 = vmatprep.subr.mxu0 0.0
    %3917 = vmatpush1.msra.mxu0 %v662
    %3918 = vmatprep.subr.mxu0 0.0
    %3919 = vmatpush1.msra.mxu0 %v661
    %3920 = vmatprep.subr.mxu0 0.0
    %3921 = vmatpush1.msra.mxu0 %v660
    %3922 = vmatprep.subr.mxu0 0.0
    %3923 = vmatpush1.msra.mxu0 %v659
    %3924 = vmatprep.subr.mxu0 0.0
    %3925 = vmatpush1.msra.mxu0 %v658
    %3926 = vmatprep.subr.mxu0 0.0
    %3927 = vmatpush1.msra.mxu0 %v657
    %3928 = vmatprep.subr.mxu0 0.0
    %3929 = vmatpush1.msra.mxu0 %v656
    %3930 = vmatprep.subr.mxu0 0.0
    %3931 = vmatpush1.msra.mxu0 %v655
    %3932 = vmatprep.subr.mxu0 0.0
    %3933 = vmatpush2.msra.mxu0 %v686
    %3934 = vmatprep.subr.mxu0 0.0
    %3935 = vmatpush2.msra.mxu0 %v685
    %3936 = vmatprep.subr.mxu0 0.0
    %3937 = vmatpush2.msra.mxu0 %v684
    %3938 = vmatprep.subr.mxu0 0.0
    %3939 = vmatpush2.msra.mxu0 %v683
    %3940 = vmatprep.subr.mxu0 0.0
    %3941 = vmatpush2.msra.mxu0 %v682
    %3942 = vmatprep.subr.mxu0 0.0
    %3943 = vmatpush2.msra.mxu0 %v681
    %3944 = vmatprep.subr.mxu0 0.0
    %3945 = vmatpush2.msra.mxu0 %v680
    %3946 = vmatprep.subr.mxu0 0.0
    %3947 = vmatpush2.msra.mxu0 %v679
    %3948 = vmatprep.subr.mxu0 0.0
    %3949 = vmatpush2.msra.mxu0 %v678
    %3950 = vmatprep.subr.mxu0 0.0
    %3951 = vmatpush2.msra.mxu0 %v677
    %3952 = vmatprep.subr.mxu0 0.0
    %3953 = vmatpush2.msra.mxu0 %v676
    %3954 = vmatprep.subr.mxu0 0.0
    %3955 = vmatpush2.msra.mxu0 %v675
    %3956 = vmatprep.subr.mxu0 0.0
    %3957 = vmatpush2.msra.mxu0 %v674
    %3958 = vmatprep.subr.mxu0 0.0
    %3959 = vmatpush2.msra.mxu0 %v673
    %3960 = vmatprep.subr.mxu0 0.0
    %3961 = vmatpush2.msra.mxu0 %v672
    %3962 = vmatprep.subr.mxu0 0.0
    %3963 = vmatpush2.msra.mxu0 %v671
    %3964 = vmatprep.mubr.f32.mxu0 %v2073
    %3965 = vmatmul.mubr.f32.gmra.mxu0 %v2072
    %v3966 = vpop.f32.mrf.mxu0
    %v3967 = vadd.f32 %v3897, %v3966
    %v3968 = vpop.f32.mrf.mxu0
    %3969 = vdwg.mxu0
    %3970 = vmatprep.subr.mxu0 0.0
    %3971 = vmatpush1.msra.mxu0 %v702
    %3972 = vmatprep.subr.mxu0 0.0
    %3973 = vmatpush1.msra.mxu0 %v701
    %3974 = vmatprep.subr.mxu0 0.0
    %3975 = vmatpush1.msra.mxu0 %v700
    %3976 = vmatprep.subr.mxu0 0.0
    %3977 = vmatpush1.msra.mxu0 %v699
    %3978 = vmatprep.subr.mxu0 0.0
    %3979 = vmatpush1.msra.mxu0 %v698
    %3980 = vmatprep.subr.mxu0 0.0
    %3981 = vmatpush1.msra.mxu0 %v697
    %3982 = vmatprep.subr.mxu0 0.0
    %3983 = vmatpush1.msra.mxu0 %v696
    %3984 = vmatprep.subr.mxu0 0.0
    %3985 = vmatpush1.msra.mxu0 %v695
    %3986 = vmatprep.subr.mxu0 0.0
    %3987 = vmatpush1.msra.mxu0 %v694
    %3988 = vmatprep.subr.mxu0 0.0
    %3989 = vmatpush1.msra.mxu0 %v693
    %3990 = vmatprep.subr.mxu0 0.0
    %3991 = vmatpush1.msra.mxu0 %v692
    %3992 = vmatprep.subr.mxu0 0.0
    %3993 = vmatpush1.msra.mxu0 %v691
    %3994 = vmatprep.subr.mxu0 0.0
    %3995 = vmatpush1.msra.mxu0 %v690
    %3996 = vmatprep.subr.mxu0 0.0
    %3997 = vmatpush1.msra.mxu0 %v689
    %3998 = vmatprep.subr.mxu0 0.0
    %3999 = vmatpush1.msra.mxu0 %v688
    %4000 = vmatprep.subr.mxu0 0.0
    %4001 = vmatpush1.msra.mxu0 %v687
    %4002 = vmatprep.subr.mxu0 0.0
    %4003 = vmatpush2.msra.mxu0 %v718
    %4004 = vmatprep.subr.mxu0 0.0
    %4005 = vmatpush2.msra.mxu0 %v717
    %4006 = vmatprep.subr.mxu0 0.0
    %4007 = vmatpush2.msra.mxu0 %v716
    %4008 = vmatprep.subr.mxu0 0.0
    %4009 = vmatpush2.msra.mxu0 %v715
    %4010 = vmatprep.subr.mxu0 0.0
    %4011 = vmatpush2.msra.mxu0 %v714
    %4012 = vmatprep.subr.mxu0 0.0
    %4013 = vmatpush2.msra.mxu0 %v713
    %4014 = vmatprep.subr.mxu0 0.0
    %4015 = vmatpush2.msra.mxu0 %v712
    %4016 = vmatprep.subr.mxu0 0.0
    %4017 = vmatpush2.msra.mxu0 %v711
    %4018 = vmatprep.subr.mxu0 0.0
    %4019 = vmatpush2.msra.mxu0 %v710
    %4020 = vmatprep.subr.mxu0 0.0
    %4021 = vmatpush2.msra.mxu0 %v709
    %4022 = vmatprep.subr.mxu0 0.0
    %4023 = vmatpush2.msra.mxu0 %v708
    %4024 = vmatprep.subr.mxu0 0.0
    %4025 = vmatpush2.msra.mxu0 %v707
    %4026 = vmatprep.subr.mxu0 0.0
    %4027 = vmatpush2.msra.mxu0 %v706
    %4028 = vmatprep.subr.mxu0 0.0
    %4029 = vmatpush2.msra.mxu0 %v705
    %4030 = vmatprep.subr.mxu0 0.0
    %4031 = vmatpush2.msra.mxu0 %v704
    %4032 = vmatprep.subr.mxu0 0.0
    %4033 = vmatpush2.msra.mxu0 %v703
    %4034 = vmatprep.mubr.f32.mxu0 %v2107
    %4035 = vmatmul.mubr.f32.gmra.mxu0 %v2106
    %v4036 = vpop.f32.mrf.mxu0
    %v4037 = vadd.f32 %v3967, %v4036
    %v4038 = vpop.f32.mrf.mxu0
    %4039 = vdwg.mxu0
    %4040 = vmatprep.subr.mxu0 0.0
    %4041 = vmatpush1.msra.mxu0 %v734
    %4042 = vmatprep.subr.mxu0 0.0
    %4043 = vmatpush1.msra.mxu0 %v733
    %4044 = vmatprep.subr.mxu0 0.0
    %4045 = vmatpush1.msra.mxu0 %v732
    %4046 = vmatprep.subr.mxu0 0.0
    %4047 = vmatpush1.msra.mxu0 %v731
    %4048 = vmatprep.subr.mxu0 0.0
    %4049 = vmatpush1.msra.mxu0 %v730
    %4050 = vmatprep.subr.mxu0 0.0
    %4051 = vmatpush1.msra.mxu0 %v729
    %4052 = vmatprep.subr.mxu0 0.0
    %4053 = vmatpush1.msra.mxu0 %v728
    %4054 = vmatprep.subr.mxu0 0.0
    %4055 = vmatpush1.msra.mxu0 %v727
    %4056 = vmatprep.subr.mxu0 0.0
    %4057 = vmatpush1.msra.mxu0 %v726
    %4058 = vmatprep.subr.mxu0 0.0
    %4059 = vmatpush1.msra.mxu0 %v725
    %4060 = vmatprep.subr.mxu0 0.0
    %4061 = vmatpush1.msra.mxu0 %v724
    %4062 = vmatprep.subr.mxu0 0.0
    %4063 = vmatpush1.msra.mxu0 %v723
    %4064 = vmatprep.subr.mxu0 0.0
    %4065 = vmatpush1.msra.mxu0 %v722
    %4066 = vmatprep.subr.mxu0 0.0
    %4067 = vmatpush1.msra.mxu0 %v721
    %4068 = vmatprep.subr.mxu0 0.0
    %4069 = vmatpush1.msra.mxu0 %v720
    %4070 = vmatprep.subr.mxu0 0.0
    %4071 = vmatpush1.msra.mxu0 %v719
    %4072 = vmatprep.subr.mxu0 0.0
    %4073 = vmatpush2.msra.mxu0 %v750
    %4074 = vmatprep.subr.mxu0 0.0
    %4075 = vmatpush2.msra.mxu0 %v749
    %4076 = vmatprep.subr.mxu0 0.0
    %4077 = vmatpush2.msra.mxu0 %v748
    %4078 = vmatprep.subr.mxu0 0.0
    %4079 = vmatpush2.msra.mxu0 %v747
    %4080 = vmatprep.subr.mxu0 0.0
    %4081 = vmatpush2.msra.mxu0 %v746
    %4082 = vmatprep.subr.mxu0 0.0
    %4083 = vmatpush2.msra.mxu0 %v745
    %4084 = vmatprep.subr.mxu0 0.0
    %4085 = vmatpush2.msra.mxu0 %v744
    %4086 = vmatprep.subr.mxu0 0.0
    %4087 = vmatpush2.msra.mxu0 %v743
    %4088 = vmatprep.subr.mxu0 0.0
    %4089 = vmatpush2.msra.mxu0 %v742
    %4090 = vmatprep.subr.mxu0 0.0
    %4091 = vmatpush2.msra.mxu0 %v741
    %4092 = vmatprep.subr.mxu0 0.0
    %4093 = vmatpush2.msra.mxu0 %v740
    %4094 = vmatprep.subr.mxu0 0.0
    %4095 = vmatpush2.msra.mxu0 %v739
    %4096 = vmatprep.subr.mxu0 0.0
    %4097 = vmatpush2.msra.mxu0 %v738
    %4098 = vmatprep.subr.mxu0 0.0
    %4099 = vmatpush2.msra.mxu0 %v737
    %4100 = vmatprep.subr.mxu0 0.0
    %4101 = vmatpush2.msra.mxu0 %v736
    %4102 = vmatprep.subr.mxu0 0.0
    %4103 = vmatpush2.msra.mxu0 %v735
    %4104 = vmatprep.mubr.f32.mxu0 %v2109
    %4105 = vmatmul.mubr.f32.gmra.mxu0 %v2108
    %v4106 = vpop.f32.mrf.mxu0
    %v4107 = vadd.f32 %v4037, %v4106
    %v4108 = vpop.f32.mrf.mxu0
    %4109 = vdwg.mxu0
    %4110 = vmatprep.subr.mxu0 0.0
    %4111 = vmatpush1.msra.mxu0 %v766
    %4112 = vmatprep.subr.mxu0 0.0
    %4113 = vmatpush1.msra.mxu0 %v765
    %4114 = vmatprep.subr.mxu0 0.0
    %4115 = vmatpush1.msra.mxu0 %v764
    %4116 = vmatprep.subr.mxu0 0.0
    %4117 = vmatpush1.msra.mxu0 %v763
    %4118 = vmatprep.subr.mxu0 0.0
    %4119 = vmatpush1.msra.mxu0 %v762
    %4120 = vmatprep.subr.mxu0 0.0
    %4121 = vmatpush1.msra.mxu0 %v761
    %4122 = vmatprep.subr.mxu0 0.0
    %4123 = vmatpush1.msra.mxu0 %v760
    %4124 = vmatprep.subr.mxu0 0.0
    %4125 = vmatpush1.msra.mxu0 %v759
    %4126 = vmatprep.subr.mxu0 0.0
    %4127 = vmatpush1.msra.mxu0 %v758
    %4128 = vmatprep.subr.mxu0 0.0
    %4129 = vmatpush1.msra.mxu0 %v757
    %4130 = vmatprep.subr.mxu0 0.0
    %4131 = vmatpush1.msra.mxu0 %v756
    %4132 = vmatprep.subr.mxu0 0.0
    %4133 = vmatpush1.msra.mxu0 %v755
    %4134 = vmatprep.subr.mxu0 0.0
    %4135 = vmatpush1.msra.mxu0 %v754
    %4136 = vmatprep.subr.mxu0 0.0
    %4137 = vmatpush1.msra.mxu0 %v753
    %4138 = vmatprep.subr.mxu0 0.0
    %4139 = vmatpush1.msra.mxu0 %v752
    %4140 = vmatprep.subr.mxu0 0.0
    %4141 = vmatpush1.msra.mxu0 %v751
    %4142 = vmatprep.subr.mxu0 0.0
    %4143 = vmatpush2.msra.mxu0 %v782
    %4144 = vmatprep.subr.mxu0 0.0
    %4145 = vmatpush2.msra.mxu0 %v781
    %4146 = vmatprep.subr.mxu0 0.0
    %4147 = vmatpush2.msra.mxu0 %v780
    %4148 = vmatprep.subr.mxu0 0.0
    %4149 = vmatpush2.msra.mxu0 %v779
    %4150 = vmatprep.subr.mxu0 0.0
    %4151 = vmatpush2.msra.mxu0 %v778
    %4152 = vmatprep.subr.mxu0 0.0
    %4153 = vmatpush2.msra.mxu0 %v777
    %4154 = vmatprep.subr.mxu0 0.0
    %4155 = vmatpush2.msra.mxu0 %v776
    %4156 = vmatprep.subr.mxu0 0.0
    %4157 = vmatpush2.msra.mxu0 %v775
    %4158 = vmatprep.subr.mxu0 0.0
    %4159 = vmatpush2.msra.mxu0 %v774
    %4160 = vmatprep.subr.mxu0 0.0
    %4161 = vmatpush2.msra.mxu0 %v773
    %4162 = vmatprep.subr.mxu0 0.0
    %4163 = vmatpush2.msra.mxu0 %v772
    %4164 = vmatprep.subr.mxu0 0.0
    %4165 = vmatpush2.msra.mxu0 %v771
    %4166 = vmatprep.subr.mxu0 0.0
    %4167 = vmatpush2.msra.mxu0 %v770
    %4168 = vmatprep.subr.mxu0 0.0
    %4169 = vmatpush2.msra.mxu0 %v769
    %4170 = vmatprep.subr.mxu0 0.0
    %4171 = vmatpush2.msra.mxu0 %v768
    %4172 = vmatprep.subr.mxu0 0.0
    %4173 = vmatpush2.msra.mxu0 %v767
    %4174 = vmatprep.mubr.f32.mxu0 %v2143
    %4175 = vmatmul.mubr.f32.gmra.mxu0 %v2142
    %v4176 = vpop.f32.mrf.mxu0
    %v4177 = vadd.f32 %v4107, %v4176
    %v4178 = vpop.f32.mrf.mxu0
    %4179 = vdwg.mxu0
    %4180 = vmatprep.subr.mxu0 0.0
    %4181 = vmatpush1.msra.mxu0 %v798
    %4182 = vmatprep.subr.mxu0 0.0
    %4183 = vmatpush1.msra.mxu0 %v797
    %4184 = vmatprep.subr.mxu0 0.0
    %4185 = vmatpush1.msra.mxu0 %v796
    %4186 = vmatprep.subr.mxu0 0.0
    %4187 = vmatpush1.msra.mxu0 %v795
    %4188 = vmatprep.subr.mxu0 0.0
    %4189 = vmatpush1.msra.mxu0 %v794
    %4190 = vmatprep.subr.mxu0 0.0
    %4191 = vmatpush1.msra.mxu0 %v793
    %4192 = vmatprep.subr.mxu0 0.0
    %4193 = vmatpush1.msra.mxu0 %v792
    %4194 = vmatprep.subr.mxu0 0.0
    %4195 = vmatpush1.msra.mxu0 %v791
    %4196 = vmatprep.subr.mxu0 0.0
    %4197 = vmatpush1.msra.mxu0 %v790
    %4198 = vmatprep.subr.mxu0 0.0
    %4199 = vmatpush1.msra.mxu0 %v789
    %4200 = vmatprep.subr.mxu0 0.0
    %4201 = vmatpush1.msra.mxu0 %v788
    %4202 = vmatprep.subr.mxu0 0.0
    %4203 = vmatpush1.msra.mxu0 %v787
    %4204 = vmatprep.subr.mxu0 0.0
    %4205 = vmatpush1.msra.mxu0 %v786
    %4206 = vmatprep.subr.mxu0 0.0
    %4207 = vmatpush1.msra.mxu0 %v785
    %4208 = vmatprep.subr.mxu0 0.0
    %4209 = vmatpush1.msra.mxu0 %v784
    %4210 = vmatprep.subr.mxu0 0.0
    %4211 = vmatpush1.msra.mxu0 %v783
    %4212 = vmatprep.subr.mxu0 0.0
    %4213 = vmatpush2.msra.mxu0 %v814
    %4214 = vmatprep.subr.mxu0 0.0
    %4215 = vmatpush2.msra.mxu0 %v813
    %4216 = vmatprep.subr.mxu0 0.0
    %4217 = vmatpush2.msra.mxu0 %v812
    %4218 = vmatprep.subr.mxu0 0.0
    %4219 = vmatpush2.msra.mxu0 %v811
    %4220 = vmatprep.subr.mxu0 0.0
    %4221 = vmatpush2.msra.mxu0 %v810
    %4222 = vmatprep.subr.mxu0 0.0
    %4223 = vmatpush2.msra.mxu0 %v809
    %4224 = vmatprep.subr.mxu0 0.0
    %4225 = vmatpush2.msra.mxu0 %v808
    %4226 = vmatprep.subr.mxu0 0.0
    %4227 = vmatpush2.msra.mxu0 %v807
    %4228 = vmatprep.subr.mxu0 0.0
    %4229 = vmatpush2.msra.mxu0 %v806
    %4230 = vmatprep.subr.mxu0 0.0
    %4231 = vmatpush2.msra.mxu0 %v805
    %4232 = vmatprep.subr.mxu0 0.0
    %4233 = vmatpush2.msra.mxu0 %v804
    %4234 = vmatprep.subr.mxu0 0.0
    %4235 = vmatpush2.msra.mxu0 %v803
    %4236 = vmatprep.subr.mxu0 0.0
    %4237 = vmatpush2.msra.mxu0 %v802
    %4238 = vmatprep.subr.mxu0 0.0
    %4239 = vmatpush2.msra.mxu0 %v801
    %4240 = vmatprep.subr.mxu0 0.0
    %4241 = vmatpush2.msra.mxu0 %v800
    %4242 = vmatprep.subr.mxu0 0.0
    %4243 = vmatpush2.msra.mxu0 %v799
    %4244 = vmatprep.mubr.f32.mxu0 %v2145
    %4245 = vmatmul.mubr.f32.gmra.mxu0 %v2144
    %v4246 = vpop.f32.mrf.mxu0
    %v4247 = vadd.f32 %v4177, %v4246
    %v4248 = vpop.f32.mrf.mxu0
    %4249 = vdwg.mxu0
    %4250 = vmatprep.subr.mxu0 0.0
    %4251 = vmatpush1.msra.mxu0 %v830
    %4252 = vmatprep.subr.mxu0 0.0
    %4253 = vmatpush1.msra.mxu0 %v829
    %4254 = vmatprep.subr.mxu0 0.0
    %4255 = vmatpush1.msra.mxu0 %v828
    %4256 = vmatprep.subr.mxu0 0.0
    %4257 = vmatpush1.msra.mxu0 %v827
    %4258 = vmatprep.subr.mxu0 0.0
    %4259 = vmatpush1.msra.mxu0 %v826
    %4260 = vmatprep.subr.mxu0 0.0
    %4261 = vmatpush1.msra.mxu0 %v825
    %4262 = vmatprep.subr.mxu0 0.0
    %4263 = vmatpush1.msra.mxu0 %v824
    %4264 = vmatprep.subr.mxu0 0.0
    %4265 = vmatpush1.msra.mxu0 %v823
    %4266 = vmatprep.subr.mxu0 0.0
    %4267 = vmatpush1.msra.mxu0 %v822
    %4268 = vmatprep.subr.mxu0 0.0
    %4269 = vmatpush1.msra.mxu0 %v821
    %4270 = vmatprep.subr.mxu0 0.0
    %4271 = vmatpush1.msra.mxu0 %v820
    %4272 = vmatprep.subr.mxu0 0.0
    %4273 = vmatpush1.msra.mxu0 %v819
    %4274 = vmatprep.subr.mxu0 0.0
    %4275 = vmatpush1.msra.mxu0 %v818
    %4276 = vmatprep.subr.mxu0 0.0
    %4277 = vmatpush1.msra.mxu0 %v817
    %4278 = vmatprep.subr.mxu0 0.0
    %4279 = vmatpush1.msra.mxu0 %v816
    %4280 = vmatprep.subr.mxu0 0.0
    %4281 = vmatpush1.msra.mxu0 %v815
    %4282 = vmatprep.subr.mxu0 0.0
    %4283 = vmatpush2.msra.mxu0 %v846
    %4284 = vmatprep.subr.mxu0 0.0
    %4285 = vmatpush2.msra.mxu0 %v845
    %4286 = vmatprep.subr.mxu0 0.0
    %4287 = vmatpush2.msra.mxu0 %v844
    %4288 = vmatprep.subr.mxu0 0.0
    %4289 = vmatpush2.msra.mxu0 %v843
    %4290 = vmatprep.subr.mxu0 0.0
    %4291 = vmatpush2.msra.mxu0 %v842
    %4292 = vmatprep.subr.mxu0 0.0
    %4293 = vmatpush2.msra.mxu0 %v841
    %4294 = vmatprep.subr.mxu0 0.0
    %4295 = vmatpush2.msra.mxu0 %v840
    %4296 = vmatprep.subr.mxu0 0.0
    %4297 = vmatpush2.msra.mxu0 %v839
    %4298 = vmatprep.subr.mxu0 0.0
    %4299 = vmatpush2.msra.mxu0 %v838
    %4300 = vmatprep.subr.mxu0 0.0
    %4301 = vmatpush2.msra.mxu0 %v837
    %4302 = vmatprep.subr.mxu0 0.0
    %4303 = vmatpush2.msra.mxu0 %v836
    %4304 = vmatprep.subr.mxu0 0.0
    %4305 = vmatpush2.msra.mxu0 %v835
    %4306 = vmatprep.subr.mxu0 0.0
    %4307 = vmatpush2.msra.mxu0 %v834
    %4308 = vmatprep.subr.mxu0 0.0
    %4309 = vmatpush2.msra.mxu0 %v833
    %4310 = vmatprep.subr.mxu0 0.0
    %4311 = vmatpush2.msra.mxu0 %v832
    %4312 = vmatprep.subr.mxu0 0.0
    %4313 = vmatpush2.msra.mxu0 %v831
    %4314 = vmatprep.mubr.f32.mxu0 %v2179
    %4315 = vmatmul.mubr.f32.gmra.mxu0 %v2178
    %v4316 = vpop.f32.mrf.mxu0
    %v4317 = vadd.f32 %v4247, %v4316
    %v4318 = vpop.f32.mrf.mxu0
    %4319 = vdwg.mxu0
    %4320 = vmatprep.subr.mxu0 0.0
    %4321 = vmatpush1.msra.mxu0 %v862
    %4322 = vmatprep.subr.mxu0 0.0
    %4323 = vmatpush1.msra.mxu0 %v861
    %4324 = vmatprep.subr.mxu0 0.0
    %4325 = vmatpush1.msra.mxu0 %v860
    %4326 = vmatprep.subr.mxu0 0.0
    %4327 = vmatpush1.msra.mxu0 %v859
    %4328 = vmatprep.subr.mxu0 0.0
    %4329 = vmatpush1.msra.mxu0 %v858
    %4330 = vmatprep.subr.mxu0 0.0
    %4331 = vmatpush1.msra.mxu0 %v857
    %4332 = vmatprep.subr.mxu0 0.0
    %4333 = vmatpush1.msra.mxu0 %v856
    %4334 = vmatprep.subr.mxu0 0.0
    %4335 = vmatpush1.msra.mxu0 %v855
    %4336 = vmatprep.subr.mxu0 0.0
    %4337 = vmatpush1.msra.mxu0 %v854
    %4338 = vmatprep.subr.mxu0 0.0
    %4339 = vmatpush1.msra.mxu0 %v853
    %4340 = vmatprep.subr.mxu0 0.0
    %4341 = vmatpush1.msra.mxu0 %v852
    %4342 = vmatprep.subr.mxu0 0.0
    %4343 = vmatpush1.msra.mxu0 %v851
    %4344 = vmatprep.subr.mxu0 0.0
    %4345 = vmatpush1.msra.mxu0 %v850
    %4346 = vmatprep.subr.mxu0 0.0
    %4347 = vmatpush1.msra.mxu0 %v849
    %4348 = vmatprep.subr.mxu0 0.0
    %4349 = vmatpush1.msra.mxu0 %v848
    %4350 = vmatprep.subr.mxu0 0.0
    %4351 = vmatpush1.msra.mxu0 %v847
    %4352 = vmatprep.subr.mxu0 0.0
    %4353 = vmatpush2.msra.mxu0 %v878
    %4354 = vmatprep.subr.mxu0 0.0
    %4355 = vmatpush2.msra.mxu0 %v877
    %4356 = vmatprep.subr.mxu0 0.0
    %4357 = vmatpush2.msra.mxu0 %v876
    %4358 = vmatprep.subr.mxu0 0.0
    %4359 = vmatpush2.msra.mxu0 %v875
    %4360 = vmatprep.subr.mxu0 0.0
    %4361 = vmatpush2.msra.mxu0 %v874
    %4362 = vmatprep.subr.mxu0 0.0
    %4363 = vmatpush2.msra.mxu0 %v873
    %4364 = vmatprep.subr.mxu0 0.0
    %4365 = vmatpush2.msra.mxu0 %v872
    %4366 = vmatprep.subr.mxu0 0.0
    %4367 = vmatpush2.msra.mxu0 %v871
    %4368 = vmatprep.subr.mxu0 0.0
    %4369 = vmatpush2.msra.mxu0 %v870
    %4370 = vmatprep.subr.mxu0 0.0
    %4371 = vmatpush2.msra.mxu0 %v869
    %4372 = vmatprep.subr.mxu0 0.0
    %4373 = vmatpush2.msra.mxu0 %v868
    %4374 = vmatprep.subr.mxu0 0.0
    %4375 = vmatpush2.msra.mxu0 %v867
    %4376 = vmatprep.subr.mxu0 0.0
    %4377 = vmatpush2.msra.mxu0 %v866
    %4378 = vmatprep.subr.mxu0 0.0
    %4379 = vmatpush2.msra.mxu0 %v865
    %4380 = vmatprep.subr.mxu0 0.0
    %4381 = vmatpush2.msra.mxu0 %v864
    %4382 = vmatprep.subr.mxu0 0.0
    %4383 = vmatpush2.msra.mxu0 %v863
    %4384 = vmatprep.mubr.f32.mxu0 %v2181
    %4385 = vmatmul.mubr.f32.gmra.mxu0 %v2180
    %v4386 = vpop.f32.mrf.mxu0
    %v4387 = vadd.f32 %v4317, %v4386
    %v4388 = vpop.f32.mrf.mxu0
    %4389 = vdwg.mxu0
    %4390 = vmatprep.subr.mxu0 0.0
    %4391 = vmatpush1.msra.mxu0 %v894
    %4392 = vmatprep.subr.mxu0 0.0
    %4393 = vmatpush1.msra.mxu0 %v893
    %4394 = vmatprep.subr.mxu0 0.0
    %4395 = vmatpush1.msra.mxu0 %v892
    %4396 = vmatprep.subr.mxu0 0.0
    %4397 = vmatpush1.msra.mxu0 %v891
    %4398 = vmatprep.subr.mxu0 0.0
    %4399 = vmatpush1.msra.mxu0 %v890
    %4400 = vmatprep.subr.mxu0 0.0
    %4401 = vmatpush1.msra.mxu0 %v889
    %4402 = vmatprep.subr.mxu0 0.0
    %4403 = vmatpush1.msra.mxu0 %v888
    %4404 = vmatprep.subr.mxu0 0.0
    %4405 = vmatpush1.msra.mxu0 %v887
    %4406 = vmatprep.subr.mxu0 0.0
    %4407 = vmatpush1.msra.mxu0 %v886
    %4408 = vmatprep.subr.mxu0 0.0
    %4409 = vmatpush1.msra.mxu0 %v885
    %4410 = vmatprep.subr.mxu0 0.0
    %4411 = vmatpush1.msra.mxu0 %v884
    %4412 = vmatprep.subr.mxu0 0.0
    %4413 = vmatpush1.msra.mxu0 %v883
    %4414 = vmatprep.subr.mxu0 0.0
    %4415 = vmatpush1.msra.mxu0 %v882
    %4416 = vmatprep.subr.mxu0 0.0
    %4417 = vmatpush1.msra.mxu0 %v881
    %4418 = vmatprep.subr.mxu0 0.0
    %4419 = vmatpush1.msra.mxu0 %v880
    %4420 = vmatprep.subr.mxu0 0.0
    %4421 = vmatpush1.msra.mxu0 %v879
    %4422 = vmatprep.subr.mxu0 0.0
    %4423 = vmatpush2.msra.mxu0 %v910
    %4424 = vmatprep.subr.mxu0 0.0
    %4425 = vmatpush2.msra.mxu0 %v909
    %4426 = vmatprep.subr.mxu0 0.0
    %4427 = vmatpush2.msra.mxu0 %v908
    %4428 = vmatprep.subr.mxu0 0.0
    %4429 = vmatpush2.msra.mxu0 %v907
    %4430 = vmatprep.subr.mxu0 0.0
    %4431 = vmatpush2.msra.mxu0 %v906
    %4432 = vmatprep.subr.mxu0 0.0
    %4433 = vmatpush2.msra.mxu0 %v905
    %4434 = vmatprep.subr.mxu0 0.0
    %4435 = vmatpush2.msra.mxu0 %v904
    %4436 = vmatprep.subr.mxu0 0.0
    %4437 = vmatpush2.msra.mxu0 %v903
    %4438 = vmatprep.subr.mxu0 0.0
    %4439 = vmatpush2.msra.mxu0 %v902
    %4440 = vmatprep.subr.mxu0 0.0
    %4441 = vmatpush2.msra.mxu0 %v901
    %4442 = vmatprep.subr.mxu0 0.0
    %4443 = vmatpush2.msra.mxu0 %v900
    %4444 = vmatprep.subr.mxu0 0.0
    %4445 = vmatpush2.msra.mxu0 %v899
    %4446 = vmatprep.subr.mxu0 0.0
    %4447 = vmatpush2.msra.mxu0 %v898
    %4448 = vmatprep.subr.mxu0 0.0
    %4449 = vmatpush2.msra.mxu0 %v897
    %4450 = vmatprep.subr.mxu0 0.0
    %4451 = vmatpush2.msra.mxu0 %v896
    %4452 = vmatprep.subr.mxu0 0.0
    %4453 = vmatpush2.msra.mxu0 %v895
    %4454 = vmatprep.mubr.f32.mxu0 %v2215
    %4455 = vmatmul.mubr.f32.gmra.mxu0 %v2214
    %v4456 = vpop.f32.mrf.mxu0
    %v4457 = vadd.f32 %v4387, %v4456
    %v4458 = vpop.f32.mrf.mxu0
    %4459 = vdwg.mxu0
    %4460 = vmatprep.subr.mxu0 0.0
    %4461 = vmatpush1.msra.mxu0 %v926
    %4462 = vmatprep.subr.mxu0 0.0
    %4463 = vmatpush1.msra.mxu0 %v925
    %4464 = vmatprep.subr.mxu0 0.0
    %4465 = vmatpush1.msra.mxu0 %v924
    %4466 = vmatprep.subr.mxu0 0.0
    %4467 = vmatpush1.msra.mxu0 %v923
    %4468 = vmatprep.subr.mxu0 0.0
    %4469 = vmatpush1.msra.mxu0 %v922
    %4470 = vmatprep.subr.mxu0 0.0
    %4471 = vmatpush1.msra.mxu0 %v921
    %4472 = vmatprep.subr.mxu0 0.0
    %4473 = vmatpush1.msra.mxu0 %v920
    %4474 = vmatprep.subr.mxu0 0.0
    %4475 = vmatpush1.msra.mxu0 %v919
    %4476 = vmatprep.subr.mxu0 0.0
    %4477 = vmatpush1.msra.mxu0 %v918
    %4478 = vmatprep.subr.mxu0 0.0
    %4479 = vmatpush1.msra.mxu0 %v917
    %4480 = vmatprep.subr.mxu0 0.0
    %4481 = vmatpush1.msra.mxu0 %v916
    %4482 = vmatprep.subr.mxu0 0.0
    %4483 = vmatpush1.msra.mxu0 %v915
    %4484 = vmatprep.subr.mxu0 0.0
    %4485 = vmatpush1.msra.mxu0 %v914
    %4486 = vmatprep.subr.mxu0 0.0
    %4487 = vmatpush1.msra.mxu0 %v913
    %4488 = vmatprep.subr.mxu0 0.0
    %4489 = vmatpush1.msra.mxu0 %v912
    %4490 = vmatprep.subr.mxu0 0.0
    %4491 = vmatpush1.msra.mxu0 %v911
    %4492 = vmatprep.subr.mxu0 0.0
    %4493 = vmatpush2.msra.mxu0 %v942
    %4494 = vmatprep.subr.mxu0 0.0
    %4495 = vmatpush2.msra.mxu0 %v941
    %4496 = vmatprep.subr.mxu0 0.0
    %4497 = vmatpush2.msra.mxu0 %v940
    %4498 = vmatprep.subr.mxu0 0.0
    %4499 = vmatpush2.msra.mxu0 %v939
    %4500 = vmatprep.subr.mxu0 0.0
    %4501 = vmatpush2.msra.mxu0 %v938
    %4502 = vmatprep.subr.mxu0 0.0
    %4503 = vmatpush2.msra.mxu0 %v937
    %4504 = vmatprep.subr.mxu0 0.0
    %4505 = vmatpush2.msra.mxu0 %v936
    %4506 = vmatprep.subr.mxu0 0.0
    %4507 = vmatpush2.msra.mxu0 %v935
    %4508 = vmatprep.subr.mxu0 0.0
    %4509 = vmatpush2.msra.mxu0 %v934
    %4510 = vmatprep.subr.mxu0 0.0
    %4511 = vmatpush2.msra.mxu0 %v933
    %4512 = vmatprep.subr.mxu0 0.0
    %4513 = vmatpush2.msra.mxu0 %v932
    %4514 = vmatprep.subr.mxu0 0.0
    %4515 = vmatpush2.msra.mxu0 %v931
    %4516 = vmatprep.subr.mxu0 0.0
    %4517 = vmatpush2.msra.mxu0 %v930
    %4518 = vmatprep.subr.mxu0 0.0
    %4519 = vmatpush2.msra.mxu0 %v929
    %4520 = vmatprep.subr.mxu0 0.0
    %4521 = vmatpush2.msra.mxu0 %v928
    %4522 = vmatprep.subr.mxu0 0.0
    %4523 = vmatpush2.msra.mxu0 %v927
    %4524 = vmatprep.mubr.f32.mxu0 %v2217
    %4525 = vmatmul.mubr.f32.gmra.mxu0 %v2216
    %v4526 = vpop.f32.mrf.mxu0
    %v4527 = vadd.f32 %v4457, %v4526
    %v4528 = vpop.f32.mrf.mxu0
    %4529 = vdwg.mxu0
    %4530 = vmatprep.subr.mxu0 0.0
    %4531 = vmatpush1.msra.mxu0 %v958
    %4532 = vmatprep.subr.mxu0 0.0
    %4533 = vmatpush1.msra.mxu0 %v957
    %4534 = vmatprep.subr.mxu0 0.0
    %4535 = vmatpush1.msra.mxu0 %v956
    %4536 = vmatprep.subr.mxu0 0.0
    %4537 = vmatpush1.msra.mxu0 %v955
    %4538 = vmatprep.subr.mxu0 0.0
    %4539 = vmatpush1.msra.mxu0 %v954
    %4540 = vmatprep.subr.mxu0 0.0
    %4541 = vmatpush1.msra.mxu0 %v953
    %4542 = vmatprep.subr.mxu0 0.0
    %4543 = vmatpush1.msra.mxu0 %v952
    %4544 = vmatprep.subr.mxu0 0.0
    %4545 = vmatpush1.msra.mxu0 %v951
    %4546 = vmatprep.subr.mxu0 0.0
    %4547 = vmatpush1.msra.mxu0 %v950
    %4548 = vmatprep.subr.mxu0 0.0
    %4549 = vmatpush1.msra.mxu0 %v949
    %4550 = vmatprep.subr.mxu0 0.0
    %4551 = vmatpush1.msra.mxu0 %v948
    %4552 = vmatprep.subr.mxu0 0.0
    %4553 = vmatpush1.msra.mxu0 %v947
    %4554 = vmatprep.subr.mxu0 0.0
    %4555 = vmatpush1.msra.mxu0 %v946
    %4556 = vmatprep.subr.mxu0 0.0
    %4557 = vmatpush1.msra.mxu0 %v945
    %4558 = vmatprep.subr.mxu0 0.0
    %4559 = vmatpush1.msra.mxu0 %v944
    %4560 = vmatprep.subr.mxu0 0.0
    %4561 = vmatpush1.msra.mxu0 %v943
    %4562 = vmatprep.subr.mxu0 0.0
    %4563 = vmatpush2.msra.mxu0 %v974
    %4564 = vmatprep.subr.mxu0 0.0
    %4565 = vmatpush2.msra.mxu0 %v973
    %4566 = vmatprep.subr.mxu0 0.0
    %4567 = vmatpush2.msra.mxu0 %v972
    %4568 = vmatprep.subr.mxu0 0.0
    %4569 = vmatpush2.msra.mxu0 %v971
    %4570 = vmatprep.subr.mxu0 0.0
    %4571 = vmatpush2.msra.mxu0 %v970
    %4572 = vmatprep.subr.mxu0 0.0
    %4573 = vmatpush2.msra.mxu0 %v969
    %4574 = vmatprep.subr.mxu0 0.0
    %4575 = vmatpush2.msra.mxu0 %v968
    %4576 = vmatprep.subr.mxu0 0.0
    %4577 = vmatpush2.msra.mxu0 %v967
    %4578 = vmatprep.subr.mxu0 0.0
    %4579 = vmatpush2.msra.mxu0 %v966
    %4580 = vmatprep.subr.mxu0 0.0
    %4581 = vmatpush2.msra.mxu0 %v965
    %4582 = vmatprep.subr.mxu0 0.0
    %4583 = vmatpush2.msra.mxu0 %v964
    %4584 = vmatprep.subr.mxu0 0.0
    %4585 = vmatpush2.msra.mxu0 %v963
    %4586 = vmatprep.subr.mxu0 0.0
    %4587 = vmatpush2.msra.mxu0 %v962
    %4588 = vmatprep.subr.mxu0 0.0
    %4589 = vmatpush2.msra.mxu0 %v961
    %4590 = vmatprep.subr.mxu0 0.0
    %4591 = vmatpush2.msra.mxu0 %v960
    %4592 = vmatprep.subr.mxu0 0.0
    %4593 = vmatpush2.msra.mxu0 %v959
    %4594 = vmatprep.mubr.f32.mxu0 %v2251
    %4595 = vmatmul.mubr.f32.gmra.mxu0 %v2250
    %v4596 = vpop.f32.mrf.mxu0
    %v4597 = vadd.f32 %v4527, %v4596
    %v4598 = vpop.f32.mrf.mxu0
    %4599 = vdwg.mxu0
    %4600 = vmatprep.subr.mxu0 0.0
    %4601 = vmatpush1.msra.mxu0 %v990
    %4602 = vmatprep.subr.mxu0 0.0
    %4603 = vmatpush1.msra.mxu0 %v989
    %4604 = vmatprep.subr.mxu0 0.0
    %4605 = vmatpush1.msra.mxu0 %v988
    %4606 = vmatprep.subr.mxu0 0.0
    %4607 = vmatpush1.msra.mxu0 %v987
    %4608 = vmatprep.subr.mxu0 0.0
    %4609 = vmatpush1.msra.mxu0 %v986
    %4610 = vmatprep.subr.mxu0 0.0
    %4611 = vmatpush1.msra.mxu0 %v985
    %4612 = vmatprep.subr.mxu0 0.0
    %4613 = vmatpush1.msra.mxu0 %v984
    %4614 = vmatprep.subr.mxu0 0.0
    %4615 = vmatpush1.msra.mxu0 %v983
    %4616 = vmatprep.subr.mxu0 0.0
    %4617 = vmatpush1.msra.mxu0 %v982
    %4618 = vmatprep.subr.mxu0 0.0
    %4619 = vmatpush1.msra.mxu0 %v981
    %4620 = vmatprep.subr.mxu0 0.0
    %4621 = vmatpush1.msra.mxu0 %v980
    %4622 = vmatprep.subr.mxu0 0.0
    %4623 = vmatpush1.msra.mxu0 %v979
    %4624 = vmatprep.subr.mxu0 0.0
    %4625 = vmatpush1.msra.mxu0 %v978
    %4626 = vmatprep.subr.mxu0 0.0
    %4627 = vmatpush1.msra.mxu0 %v977
    %4628 = vmatprep.subr.mxu0 0.0
    %4629 = vmatpush1.msra.mxu0 %v976
    %4630 = vmatprep.subr.mxu0 0.0
    %4631 = vmatpush1.msra.mxu0 %v975
    %4632 = vmatprep.subr.mxu0 0.0
    %4633 = vmatpush2.msra.mxu0 %v1006
    %4634 = vmatprep.subr.mxu0 0.0
    %4635 = vmatpush2.msra.mxu0 %v1005
    %4636 = vmatprep.subr.mxu0 0.0
    %4637 = vmatpush2.msra.mxu0 %v1004
    %4638 = vmatprep.subr.mxu0 0.0
    %4639 = vmatpush2.msra.mxu0 %v1003
    %4640 = vmatprep.subr.mxu0 0.0
    %4641 = vmatpush2.msra.mxu0 %v1002
    %4642 = vmatprep.subr.mxu0 0.0
    %4643 = vmatpush2.msra.mxu0 %v1001
    %4644 = vmatprep.subr.mxu0 0.0
    %4645 = vmatpush2.msra.mxu0 %v1000
    %4646 = vmatprep.subr.mxu0 0.0
    %4647 = vmatpush2.msra.mxu0 %v999
    %4648 = vmatprep.subr.mxu0 0.0
    %4649 = vmatpush2.msra.mxu0 %v998
    %4650 = vmatprep.subr.mxu0 0.0
    %4651 = vmatpush2.msra.mxu0 %v997
    %4652 = vmatprep.subr.mxu0 0.0
    %4653 = vmatpush2.msra.mxu0 %v996
    %4654 = vmatprep.subr.mxu0 0.0
    %4655 = vmatpush2.msra.mxu0 %v995
    %4656 = vmatprep.subr.mxu0 0.0
    %4657 = vmatpush2.msra.mxu0 %v994
    %4658 = vmatprep.subr.mxu0 0.0
    %4659 = vmatpush2.msra.mxu0 %v993
    %4660 = vmatprep.subr.mxu0 0.0
    %4661 = vmatpush2.msra.mxu0 %v992
    %4662 = vmatprep.subr.mxu0 0.0
    %4663 = vmatpush2.msra.mxu0 %v991
    %4664 = vmatprep.mubr.f32.mxu0 %v2253
    %4665 = vmatmul.mubr.f32.gmra.mxu0 %v2252
    %v4666 = vpop.f32.mrf.mxu0
    %v4667 = vadd.f32 %v4597, %v4666
    %v4668 = vpop.f32.mrf.mxu0
    %4669 = vdwg.mxu0
    %4670 = vmatprep.subr.mxu0 0.0
    %4671 = vmatpush1.msra.mxu0 %v1022
    %4672 = vmatprep.subr.mxu0 0.0
    %4673 = vmatpush1.msra.mxu0 %v1021
    %4674 = vmatprep.subr.mxu0 0.0
    %4675 = vmatpush1.msra.mxu0 %v1020
    %4676 = vmatprep.subr.mxu0 0.0
    %4677 = vmatpush1.msra.mxu0 %v1019
    %4678 = vmatprep.subr.mxu0 0.0
    %4679 = vmatpush1.msra.mxu0 %v1018
    %4680 = vmatprep.subr.mxu0 0.0
    %4681 = vmatpush1.msra.mxu0 %v1017
    %4682 = vmatprep.subr.mxu0 0.0
    %4683 = vmatpush1.msra.mxu0 %v1016
    %4684 = vmatprep.subr.mxu0 0.0
    %4685 = vmatpush1.msra.mxu0 %v1015
    %4686 = vmatprep.subr.mxu0 0.0
    %4687 = vmatpush1.msra.mxu0 %v1014
    %4688 = vmatprep.subr.mxu0 0.0
    %4689 = vmatpush1.msra.mxu0 %v1013
    %4690 = vmatprep.subr.mxu0 0.0
    %4691 = vmatpush1.msra.mxu0 %v1012
    %4692 = vmatprep.subr.mxu0 0.0
    %4693 = vmatpush1.msra.mxu0 %v1011
    %4694 = vmatprep.subr.mxu0 0.0
    %4695 = vmatpush1.msra.mxu0 %v1010
    %4696 = vmatprep.subr.mxu0 0.0
    %4697 = vmatpush1.msra.mxu0 %v1009
    %4698 = vmatprep.subr.mxu0 0.0
    %4699 = vmatpush1.msra.mxu0 %v1008
    %4700 = vmatprep.subr.mxu0 0.0
    %4701 = vmatpush1.msra.mxu0 %v1007
    %4702 = vmatprep.subr.mxu0 0.0
    %4703 = vmatpush2.msra.mxu0 %v1038
    %4704 = vmatprep.subr.mxu0 0.0
    %4705 = vmatpush2.msra.mxu0 %v1037
    %4706 = vmatprep.subr.mxu0 0.0
    %4707 = vmatpush2.msra.mxu0 %v1036
    %4708 = vmatprep.subr.mxu0 0.0
    %4709 = vmatpush2.msra.mxu0 %v1035
    %4710 = vmatprep.subr.mxu0 0.0
    %4711 = vmatpush2.msra.mxu0 %v1034
    %4712 = vmatprep.subr.mxu0 0.0
    %4713 = vmatpush2.msra.mxu0 %v1033
    %4714 = vmatprep.subr.mxu0 0.0
    %4715 = vmatpush2.msra.mxu0 %v1032
    %4716 = vmatprep.subr.mxu0 0.0
    %4717 = vmatpush2.msra.mxu0 %v1031
    %4718 = vmatprep.subr.mxu0 0.0
    %4719 = vmatpush2.msra.mxu0 %v1030
    %4720 = vmatprep.subr.mxu0 0.0
    %4721 = vmatpush2.msra.mxu0 %v1029
    %4722 = vmatprep.subr.mxu0 0.0
    %4723 = vmatpush2.msra.mxu0 %v1028
    %4724 = vmatprep.subr.mxu0 0.0
    %4725 = vmatpush2.msra.mxu0 %v1027
    %4726 = vmatprep.subr.mxu0 0.0
    %4727 = vmatpush2.msra.mxu0 %v1026
    %4728 = vmatprep.subr.mxu0 0.0
    %4729 = vmatpush2.msra.mxu0 %v1025
    %4730 = vmatprep.subr.mxu0 0.0
    %4731 = vmatpush2.msra.mxu0 %v1024
    %4732 = vmatprep.subr.mxu0 0.0
    %4733 = vmatpush2.msra.mxu0 %v1023
    %4734 = vmatprep.mubr.f32.mxu0 %v2287
    %4735 = vmatmul.mubr.f32.gmra.mxu0 %v2286
    %v4736 = vpop.f32.mrf.mxu0
    %v4737 = vadd.f32 %v4667, %v4736
    %v4738 = vpop.f32.mrf.mxu0
    %4739 = vdwg.mxu0
    %4740 = vmatprep.subr.mxu0 0.0
    %4741 = vmatpush1.msra.mxu0 %v1054
    %4742 = vmatprep.subr.mxu0 0.0
    %4743 = vmatpush1.msra.mxu0 %v1053
    %4744 = vmatprep.subr.mxu0 0.0
    %4745 = vmatpush1.msra.mxu0 %v1052
    %4746 = vmatprep.subr.mxu0 0.0
    %4747 = vmatpush1.msra.mxu0 %v1051
    %4748 = vmatprep.subr.mxu0 0.0
    %4749 = vmatpush1.msra.mxu0 %v1050
    %4750 = vmatprep.subr.mxu0 0.0
    %4751 = vmatpush1.msra.mxu0 %v1049
    %4752 = vmatprep.subr.mxu0 0.0
    %4753 = vmatpush1.msra.mxu0 %v1048
    %4754 = vmatprep.subr.mxu0 0.0
    %4755 = vmatpush1.msra.mxu0 %v1047
    %4756 = vmatprep.subr.mxu0 0.0
    %4757 = vmatpush1.msra.mxu0 %v1046
    %4758 = vmatprep.subr.mxu0 0.0
    %4759 = vmatpush1.msra.mxu0 %v1045
    %4760 = vmatprep.subr.mxu0 0.0
    %4761 = vmatpush1.msra.mxu0 %v1044
    %4762 = vmatprep.subr.mxu0 0.0
    %4763 = vmatpush1.msra.mxu0 %v1043
    %4764 = vmatprep.subr.mxu0 0.0
    %4765 = vmatpush1.msra.mxu0 %v1042
    %4766 = vmatprep.subr.mxu0 0.0
    %4767 = vmatpush1.msra.mxu0 %v1041
    %4768 = vmatprep.subr.mxu0 0.0
    %4769 = vmatpush1.msra.mxu0 %v1040
    %4770 = vmatprep.subr.mxu0 0.0
    %4771 = vmatpush1.msra.mxu0 %v1039
    %4772 = vmatprep.subr.mxu0 0.0
    %4773 = vmatpush2.msra.mxu0 %v1070
    %4774 = vmatprep.subr.mxu0 0.0
    %4775 = vmatpush2.msra.mxu0 %v1069
    %4776 = vmatprep.subr.mxu0 0.0
    %4777 = vmatpush2.msra.mxu0 %v1068
    %4778 = vmatprep.subr.mxu0 0.0
    %4779 = vmatpush2.msra.mxu0 %v1067
    %4780 = vmatprep.subr.mxu0 0.0
    %4781 = vmatpush2.msra.mxu0 %v1066
    %4782 = vmatprep.subr.mxu0 0.0
    %4783 = vmatpush2.msra.mxu0 %v1065
    %4784 = vmatprep.subr.mxu0 0.0
    %4785 = vmatpush2.msra.mxu0 %v1064
    %4786 = vmatprep.subr.mxu0 0.0
    %4787 = vmatpush2.msra.mxu0 %v1063
    %4788 = vmatprep.subr.mxu0 0.0
    %4789 = vmatpush2.msra.mxu0 %v1062
    %4790 = vmatprep.subr.mxu0 0.0
    %4791 = vmatpush2.msra.mxu0 %v1061
    %4792 = vmatprep.subr.mxu0 0.0
    %4793 = vmatpush2.msra.mxu0 %v1060
    %4794 = vmatprep.subr.mxu0 0.0
    %4795 = vmatpush2.msra.mxu0 %v1059
    %4796 = vmatprep.subr.mxu0 0.0
    %4797 = vmatpush2.msra.mxu0 %v1058
    %4798 = vmatprep.subr.mxu0 0.0
    %4799 = vmatpush2.msra.mxu0 %v1057
    %4800 = vmatprep.subr.mxu0 0.0
    %4801 = vmatpush2.msra.mxu0 %v1056
    %4802 = vmatprep.subr.mxu0 0.0
    %4803 = vmatpush2.msra.mxu0 %v1055
    %4804 = vmatprep.mubr.f32.mxu0 %v2289
    %4805 = vmatmul.mubr.f32.gmra.mxu0 %v2288
    %v4806 = vpop.f32.mrf.mxu0
    %v4807 = vadd.f32 %v4737, %v4806
    %v4808 = vpop.f32.mrf.mxu0
    %4809 = vdwg.mxu0
    %4810 = vmatprep.subr.mxu0 0.0
    %4811 = vmatpush1.msra.mxu0 %v1086
    %4812 = vmatprep.subr.mxu0 0.0
    %4813 = vmatpush1.msra.mxu0 %v1085
    %4814 = vmatprep.subr.mxu0 0.0
    %4815 = vmatpush1.msra.mxu0 %v1084
    %4816 = vmatprep.subr.mxu0 0.0
    %4817 = vmatpush1.msra.mxu0 %v1083
    %4818 = vmatprep.subr.mxu0 0.0
    %4819 = vmatpush1.msra.mxu0 %v1082
    %4820 = vmatprep.subr.mxu0 0.0
    %4821 = vmatpush1.msra.mxu0 %v1081
    %4822 = vmatprep.subr.mxu0 0.0
    %4823 = vmatpush1.msra.mxu0 %v1080
    %4824 = vmatprep.subr.mxu0 0.0
    %4825 = vmatpush1.msra.mxu0 %v1079
    %4826 = vmatprep.subr.mxu0 0.0
    %4827 = vmatpush1.msra.mxu0 %v1078
    %4828 = vmatprep.subr.mxu0 0.0
    %4829 = vmatpush1.msra.mxu0 %v1077
    %4830 = vmatprep.subr.mxu0 0.0
    %4831 = vmatpush1.msra.mxu0 %v1076
    %4832 = vmatprep.subr.mxu0 0.0
    %4833 = vmatpush1.msra.mxu0 %v1075
    %4834 = vmatprep.subr.mxu0 0.0
    %4835 = vmatpush1.msra.mxu0 %v1074
    %4836 = vmatprep.subr.mxu0 0.0
    %4837 = vmatpush1.msra.mxu0 %v1073
    %4838 = vmatprep.subr.mxu0 0.0
    %4839 = vmatpush1.msra.mxu0 %v1072
    %4840 = vmatprep.subr.mxu0 0.0
    %4841 = vmatpush1.msra.mxu0 %v1071
    %4842 = vmatprep.subr.mxu0 0.0
    %4843 = vmatpush2.msra.mxu0 %v1102
    %4844 = vmatprep.subr.mxu0 0.0
    %4845 = vmatpush2.msra.mxu0 %v1101
    %4846 = vmatprep.subr.mxu0 0.0
    %4847 = vmatpush2.msra.mxu0 %v1100
    %4848 = vmatprep.subr.mxu0 0.0
    %4849 = vmatpush2.msra.mxu0 %v1099
    %4850 = vmatprep.subr.mxu0 0.0
    %4851 = vmatpush2.msra.mxu0 %v1098
    %4852 = vmatprep.subr.mxu0 0.0
    %4853 = vmatpush2.msra.mxu0 %v1097
    %4854 = vmatprep.subr.mxu0 0.0
    %4855 = vmatpush2.msra.mxu0 %v1096
    %4856 = vmatprep.subr.mxu0 0.0
    %4857 = vmatpush2.msra.mxu0 %v1095
    %4858 = vmatprep.subr.mxu0 0.0
    %4859 = vmatpush2.msra.mxu0 %v1094
    %4860 = vmatprep.subr.mxu0 0.0
    %4861 = vmatpush2.msra.mxu0 %v1093
    %4862 = vmatprep.subr.mxu0 0.0
    %4863 = vmatpush2.msra.mxu0 %v1092
    %4864 = vmatprep.subr.mxu0 0.0
    %4865 = vmatpush2.msra.mxu0 %v1091
    %4866 = vmatprep.subr.mxu0 0.0
    %4867 = vmatpush2.msra.mxu0 %v1090
    %4868 = vmatprep.subr.mxu0 0.0
    %4869 = vmatpush2.msra.mxu0 %v1089
    %4870 = vmatprep.subr.mxu0 0.0
    %4871 = vmatpush2.msra.mxu0 %v1088
    %4872 = vmatprep.subr.mxu0 0.0
    %4873 = vmatpush2.msra.mxu0 %v1087
    %4874 = vmatprep.mubr.f32.mxu0 %v2323
    %4875 = vmatmul.mubr.f32.gmra.mxu0 %v2322
    %v4876 = vpop.f32.mrf.mxu0
    %v4877 = vadd.f32 %v4807, %v4876
    %v4878 = vpop.f32.mrf.mxu0
    %4879 = vdwg.mxu0
    %4880 = vmatprep.subr.mxu0 0.0
    %4881 = vmatpush1.msra.mxu0 %v1118
    %4882 = vmatprep.subr.mxu0 0.0
    %4883 = vmatpush1.msra.mxu0 %v1117
    %4884 = vmatprep.subr.mxu0 0.0
    %4885 = vmatpush1.msra.mxu0 %v1116
    %4886 = vmatprep.subr.mxu0 0.0
    %4887 = vmatpush1.msra.mxu0 %v1115
    %4888 = vmatprep.subr.mxu0 0.0
    %4889 = vmatpush1.msra.mxu0 %v1114
    %4890 = vmatprep.subr.mxu0 0.0
    %4891 = vmatpush1.msra.mxu0 %v1113
    %4892 = vmatprep.subr.mxu0 0.0
    %4893 = vmatpush1.msra.mxu0 %v1112
    %4894 = vmatprep.subr.mxu0 0.0
    %4895 = vmatpush1.msra.mxu0 %v1111
    %4896 = vmatprep.subr.mxu0 0.0
    %4897 = vmatpush1.msra.mxu0 %v1110
    %4898 = vmatprep.subr.mxu0 0.0
    %4899 = vmatpush1.msra.mxu0 %v1109
    %4900 = vmatprep.subr.mxu0 0.0
    %4901 = vmatpush1.msra.mxu0 %v1108
    %4902 = vmatprep.subr.mxu0 0.0
    %4903 = vmatpush1.msra.mxu0 %v1107
    %4904 = vmatprep.subr.mxu0 0.0
    %4905 = vmatpush1.msra.mxu0 %v1106
    %4906 = vmatprep.subr.mxu0 0.0
    %4907 = vmatpush1.msra.mxu0 %v1105
    %4908 = vmatprep.subr.mxu0 0.0
    %4909 = vmatpush1.msra.mxu0 %v1104
    %4910 = vmatprep.subr.mxu0 0.0
    %4911 = vmatpush1.msra.mxu0 %v1103
    %4912 = vmatprep.subr.mxu0 0.0
    %4913 = vmatpush2.msra.mxu0 %v1134
    %4914 = vmatprep.subr.mxu0 0.0
    %4915 = vmatpush2.msra.mxu0 %v1133
    %4916 = vmatprep.subr.mxu0 0.0
    %4917 = vmatpush2.msra.mxu0 %v1132
    %4918 = vmatprep.subr.mxu0 0.0
    %4919 = vmatpush2.msra.mxu0 %v1131
    %4920 = vmatprep.subr.mxu0 0.0
    %4921 = vmatpush2.msra.mxu0 %v1130
    %4922 = vmatprep.subr.mxu0 0.0
    %4923 = vmatpush2.msra.mxu0 %v1129
    %4924 = vmatprep.subr.mxu0 0.0
    %4925 = vmatpush2.msra.mxu0 %v1128
    %4926 = vmatprep.subr.mxu0 0.0
    %4927 = vmatpush2.msra.mxu0 %v1127
    %4928 = vmatprep.subr.mxu0 0.0
    %4929 = vmatpush2.msra.mxu0 %v1126
    %4930 = vmatprep.subr.mxu0 0.0
    %4931 = vmatpush2.msra.mxu0 %v1125
    %4932 = vmatprep.subr.mxu0 0.0
    %4933 = vmatpush2.msra.mxu0 %v1124
    %4934 = vmatprep.subr.mxu0 0.0
    %4935 = vmatpush2.msra.mxu0 %v1123
    %4936 = vmatprep.subr.mxu0 0.0
    %4937 = vmatpush2.msra.mxu0 %v1122
    %4938 = vmatprep.subr.mxu0 0.0
    %4939 = vmatpush2.msra.mxu0 %v1121
    %4940 = vmatprep.subr.mxu0 0.0
    %4941 = vmatpush2.msra.mxu0 %v1120
    %4942 = vmatprep.subr.mxu0 0.0
    %4943 = vmatpush2.msra.mxu0 %v1119
    %4944 = vmatprep.mubr.f32.mxu0 %v2325
    %4945 = vmatmul.mubr.f32.gmra.mxu0 %v2324
    %v4946 = vpop.f32.mrf.mxu0
    %v4947 = vadd.f32 %v4877, %v4946
    %v4948 = vpop.f32.mrf.mxu0
    %4949 = vdwg.mxu0
    %4950 = vmatprep.subr.mxu0 0.0
    %4951 = vmatpush1.msra.mxu0 %v1150
    %4952 = vmatprep.subr.mxu0 0.0
    %4953 = vmatpush1.msra.mxu0 %v1149
    %4954 = vmatprep.subr.mxu0 0.0
    %4955 = vmatpush1.msra.mxu0 %v1148
    %4956 = vmatprep.subr.mxu0 0.0
    %4957 = vmatpush1.msra.mxu0 %v1147
    %4958 = vmatprep.subr.mxu0 0.0
    %4959 = vmatpush1.msra.mxu0 %v1146
    %4960 = vmatprep.subr.mxu0 0.0
    %4961 = vmatpush1.msra.mxu0 %v1145
    %4962 = vmatprep.subr.mxu0 0.0
    %4963 = vmatpush1.msra.mxu0 %v1144
    %4964 = vmatprep.subr.mxu0 0.0
    %4965 = vmatpush1.msra.mxu0 %v1143
    %4966 = vmatprep.subr.mxu0 0.0
    %4967 = vmatpush1.msra.mxu0 %v1142
    %4968 = vmatprep.subr.mxu0 0.0
    %4969 = vmatpush1.msra.mxu0 %v1141
    %4970 = vmatprep.subr.mxu0 0.0
    %4971 = vmatpush1.msra.mxu0 %v1140
    %4972 = vmatprep.subr.mxu0 0.0
    %4973 = vmatpush1.msra.mxu0 %v1139
    %4974 = vmatprep.subr.mxu0 0.0
    %4975 = vmatpush1.msra.mxu0 %v1138
    %4976 = vmatprep.subr.mxu0 0.0
    %4977 = vmatpush1.msra.mxu0 %v1137
    %4978 = vmatprep.subr.mxu0 0.0
    %4979 = vmatpush1.msra.mxu0 %v1136
    %4980 = vmatprep.subr.mxu0 0.0
    %4981 = vmatpush1.msra.mxu0 %v1135
    %4982 = vmatprep.subr.mxu0 0.0
    %4983 = vmatpush2.msra.mxu0 %v1166
    %4984 = vmatprep.subr.mxu0 0.0
    %4985 = vmatpush2.msra.mxu0 %v1165
    %4986 = vmatprep.subr.mxu0 0.0
    %4987 = vmatpush2.msra.mxu0 %v1164
    %4988 = vmatprep.subr.mxu0 0.0
    %4989 = vmatpush2.msra.mxu0 %v1163
    %4990 = vmatprep.subr.mxu0 0.0
    %4991 = vmatpush2.msra.mxu0 %v1162
    %4992 = vmatprep.subr.mxu0 0.0
    %4993 = vmatpush2.msra.mxu0 %v1161
    %4994 = vmatprep.subr.mxu0 0.0
    %4995 = vmatpush2.msra.mxu0 %v1160
    %4996 = vmatprep.subr.mxu0 0.0
    %4997 = vmatpush2.msra.mxu0 %v1159
    %4998 = vmatprep.subr.mxu0 0.0
    %4999 = vmatpush2.msra.mxu0 %v1158
    %5000 = vmatprep.subr.mxu0 0.0
    %5001 = vmatpush2.msra.mxu0 %v1157
    %5002 = vmatprep.subr.mxu0 0.0
    %5003 = vmatpush2.msra.mxu0 %v1156
    %5004 = vmatprep.subr.mxu0 0.0
    %5005 = vmatpush2.msra.mxu0 %v1155
    %5006 = vmatprep.subr.mxu0 0.0
    %5007 = vmatpush2.msra.mxu0 %v1154
    %5008 = vmatprep.subr.mxu0 0.0
    %5009 = vmatpush2.msra.mxu0 %v1153
    %5010 = vmatprep.subr.mxu0 0.0
    %5011 = vmatpush2.msra.mxu0 %v1152
    %5012 = vmatprep.subr.mxu0 0.0
    %5013 = vmatpush2.msra.mxu0 %v1151
    %5014 = vmatprep.mubr.f32.mxu0 %v2359
    %5015 = vmatmul.mubr.f32.gmra.mxu0 %v2358
    %v5016 = vpop.f32.mrf.mxu0
    %v5017 = vadd.f32 %v4947, %v5016
    %v5018 = vpop.f32.mrf.mxu0
    %5019 = vdwg.mxu0
    %5020 = vmatprep.subr.mxu0 0.0
    %5021 = vmatpush1.msra.mxu0 %v1182
    %5022 = vmatprep.subr.mxu0 0.0
    %5023 = vmatpush1.msra.mxu0 %v1181
    %5024 = vmatprep.subr.mxu0 0.0
    %5025 = vmatpush1.msra.mxu0 %v1180
    %5026 = vmatprep.subr.mxu0 0.0
    %5027 = vmatpush1.msra.mxu0 %v1179
    %5028 = vmatprep.subr.mxu0 0.0
    %5029 = vmatpush1.msra.mxu0 %v1178
    %5030 = vmatprep.subr.mxu0 0.0
    %5031 = vmatpush1.msra.mxu0 %v1177
    %5032 = vmatprep.subr.mxu0 0.0
    %5033 = vmatpush1.msra.mxu0 %v1176
    %5034 = vmatprep.subr.mxu0 0.0
    %5035 = vmatpush1.msra.mxu0 %v1175
    %5036 = vmatprep.subr.mxu0 0.0
    %5037 = vmatpush1.msra.mxu0 %v1174
    %5038 = vmatprep.subr.mxu0 0.0
    %5039 = vmatpush1.msra.mxu0 %v1173
    %5040 = vmatprep.subr.mxu0 0.0
    %5041 = vmatpush1.msra.mxu0 %v1172
    %5042 = vmatprep.subr.mxu0 0.0
    %5043 = vmatpush1.msra.mxu0 %v1171
    %5044 = vmatprep.subr.mxu0 0.0
    %5045 = vmatpush1.msra.mxu0 %v1170
    %5046 = vmatprep.subr.mxu0 0.0
    %5047 = vmatpush1.msra.mxu0 %v1169
    %5048 = vmatprep.subr.mxu0 0.0
    %5049 = vmatpush1.msra.mxu0 %v1168
    %5050 = vmatprep.subr.mxu0 0.0
    %5051 = vmatpush1.msra.mxu0 %v1167
    %5052 = vmatprep.subr.mxu0 0.0
    %5053 = vmatpush2.msra.mxu0 %v1198
    %5054 = vmatprep.subr.mxu0 0.0
    %5055 = vmatpush2.msra.mxu0 %v1197
    %5056 = vmatprep.subr.mxu0 0.0
    %5057 = vmatpush2.msra.mxu0 %v1196
    %5058 = vmatprep.subr.mxu0 0.0
    %5059 = vmatpush2.msra.mxu0 %v1195
    %5060 = vmatprep.subr.mxu0 0.0
    %5061 = vmatpush2.msra.mxu0 %v1194
    %5062 = vmatprep.subr.mxu0 0.0
    %5063 = vmatpush2.msra.mxu0 %v1193
    %5064 = vmatprep.subr.mxu0 0.0
    %5065 = vmatpush2.msra.mxu0 %v1192
    %5066 = vmatprep.subr.mxu0 0.0
    %5067 = vmatpush2.msra.mxu0 %v1191
    %5068 = vmatprep.subr.mxu0 0.0
    %5069 = vmatpush2.msra.mxu0 %v1190
    %5070 = vmatprep.subr.mxu0 0.0
    %5071 = vmatpush2.msra.mxu0 %v1189
    %5072 = vmatprep.subr.mxu0 0.0
    %5073 = vmatpush2.msra.mxu0 %v1188
    %5074 = vmatprep.subr.mxu0 0.0
    %5075 = vmatpush2.msra.mxu0 %v1187
    %5076 = vmatprep.subr.mxu0 0.0
    %5077 = vmatpush2.msra.mxu0 %v1186
    %5078 = vmatprep.subr.mxu0 0.0
    %5079 = vmatpush2.msra.mxu0 %v1185
    %5080 = vmatprep.subr.mxu0 0.0
    %5081 = vmatpush2.msra.mxu0 %v1184
    %5082 = vmatprep.subr.mxu0 0.0
    %5083 = vmatpush2.msra.mxu0 %v1183
    %5084 = vmatprep.mubr.f32.mxu0 %v2361
    %5085 = vmatmul.mubr.f32.gmra.mxu0 %v2360
    %v5086 = vpop.f32.mrf.mxu0
    %v5087 = vadd.f32 %v5017, %v5086
    %v5088 = vpop.f32.mrf.mxu0
    %5089 = vdwg.mxu0
    %5090 = vmatprep.subr.mxu0 0.0
    %5091 = vmatpush1.msra.mxu0 %v1214
    %5092 = vmatprep.subr.mxu0 0.0
    %5093 = vmatpush1.msra.mxu0 %v1213
    %5094 = vmatprep.subr.mxu0 0.0
    %5095 = vmatpush1.msra.mxu0 %v1212
    %5096 = vmatprep.subr.mxu0 0.0
    %5097 = vmatpush1.msra.mxu0 %v1211
    %5098 = vmatprep.subr.mxu0 0.0
    %5099 = vmatpush1.msra.mxu0 %v1210
    %5100 = vmatprep.subr.mxu0 0.0
    %5101 = vmatpush1.msra.mxu0 %v1209
    %5102 = vmatprep.subr.mxu0 0.0
    %5103 = vmatpush1.msra.mxu0 %v1208
    %5104 = vmatprep.subr.mxu0 0.0
    %5105 = vmatpush1.msra.mxu0 %v1207
    %5106 = vmatprep.subr.mxu0 0.0
    %5107 = vmatpush1.msra.mxu0 %v1206
    %5108 = vmatprep.subr.mxu0 0.0
    %5109 = vmatpush1.msra.mxu0 %v1205
    %5110 = vmatprep.subr.mxu0 0.0
    %5111 = vmatpush1.msra.mxu0 %v1204
    %5112 = vmatprep.subr.mxu0 0.0
    %5113 = vmatpush1.msra.mxu0 %v1203
    %5114 = vmatprep.subr.mxu0 0.0
    %5115 = vmatpush1.msra.mxu0 %v1202
    %5116 = vmatprep.subr.mxu0 0.0
    %5117 = vmatpush1.msra.mxu0 %v1201
    %5118 = vmatprep.subr.mxu0 0.0
    %5119 = vmatpush1.msra.mxu0 %v1200
    %5120 = vmatprep.subr.mxu0 0.0
    %5121 = vmatpush1.msra.mxu0 %v1199
    %5122 = vmatprep.subr.mxu0 0.0
    %5123 = vmatpush2.msra.mxu0 %v1230
    %5124 = vmatprep.subr.mxu0 0.0
    %5125 = vmatpush2.msra.mxu0 %v1229
    %5126 = vmatprep.subr.mxu0 0.0
    %5127 = vmatpush2.msra.mxu0 %v1228
    %5128 = vmatprep.subr.mxu0 0.0
    %5129 = vmatpush2.msra.mxu0 %v1227
    %5130 = vmatprep.subr.mxu0 0.0
    %5131 = vmatpush2.msra.mxu0 %v1226
    %5132 = vmatprep.subr.mxu0 0.0
    %5133 = vmatpush2.msra.mxu0 %v1225
    %5134 = vmatprep.subr.mxu0 0.0
    %5135 = vmatpush2.msra.mxu0 %v1224
    %5136 = vmatprep.subr.mxu0 0.0
    %5137 = vmatpush2.msra.mxu0 %v1223
    %5138 = vmatprep.subr.mxu0 0.0
    %5139 = vmatpush2.msra.mxu0 %v1222
    %5140 = vmatprep.subr.mxu0 0.0
    %5141 = vmatpush2.msra.mxu0 %v1221
    %5142 = vmatprep.subr.mxu0 0.0
    %5143 = vmatpush2.msra.mxu0 %v1220
    %5144 = vmatprep.subr.mxu0 0.0
    %5145 = vmatpush2.msra.mxu0 %v1219
    %5146 = vmatprep.subr.mxu0 0.0
    %5147 = vmatpush2.msra.mxu0 %v1218
    %5148 = vmatprep.subr.mxu0 0.0
    %5149 = vmatpush2.msra.mxu0 %v1217
    %5150 = vmatprep.subr.mxu0 0.0
    %5151 = vmatpush2.msra.mxu0 %v1216
    %5152 = vmatprep.subr.mxu0 0.0
    %5153 = vmatpush2.msra.mxu0 %v1215
    %5154 = vmatprep.mubr.f32.mxu0 %v2395
    %5155 = vmatmul.mubr.f32.gmra.mxu0 %v2394
    %v5156 = vpop.f32.mrf.mxu0
    %v5157 = vadd.f32 %v5087, %v5156
    %v5158 = vpop.f32.mrf.mxu0
    %5159 = vdwg.mxu0
    %5160 = vmatprep.subr.mxu0 0.0
    %5161 = vmatpush1.msra.mxu0 %v1246
    %5162 = vmatprep.subr.mxu0 0.0
    %5163 = vmatpush1.msra.mxu0 %v1245
    %5164 = vmatprep.subr.mxu0 0.0
    %5165 = vmatpush1.msra.mxu0 %v1244
    %5166 = vmatprep.subr.mxu0 0.0
    %5167 = vmatpush1.msra.mxu0 %v1243
    %5168 = vmatprep.subr.mxu0 0.0
    %5169 = vmatpush1.msra.mxu0 %v1242
    %5170 = vmatprep.subr.mxu0 0.0
    %5171 = vmatpush1.msra.mxu0 %v1241
    %5172 = vmatprep.subr.mxu0 0.0
    %5173 = vmatpush1.msra.mxu0 %v1240
    %5174 = vmatprep.subr.mxu0 0.0
    %5175 = vmatpush1.msra.mxu0 %v1239
    %5176 = vmatprep.subr.mxu0 0.0
    %5177 = vmatpush1.msra.mxu0 %v1238
    %5178 = vmatprep.subr.mxu0 0.0
    %5179 = vmatpush1.msra.mxu0 %v1237
    %5180 = vmatprep.subr.mxu0 0.0
    %5181 = vmatpush1.msra.mxu0 %v1236
    %5182 = vmatprep.subr.mxu0 0.0
    %5183 = vmatpush1.msra.mxu0 %v1235
    %5184 = vmatprep.subr.mxu0 0.0
    %5185 = vmatpush1.msra.mxu0 %v1234
    %5186 = vmatprep.subr.mxu0 0.0
    %5187 = vmatpush1.msra.mxu0 %v1233
    %5188 = vmatprep.subr.mxu0 0.0
    %5189 = vmatpush1.msra.mxu0 %v1232
    %5190 = vmatprep.subr.mxu0 0.0
    %5191 = vmatpush1.msra.mxu0 %v1231
    %5192 = vmatprep.subr.mxu0 0.0
    %5193 = vmatpush2.msra.mxu0 %v1262
    %5194 = vmatprep.subr.mxu0 0.0
    %5195 = vmatpush2.msra.mxu0 %v1261
    %5196 = vmatprep.subr.mxu0 0.0
    %5197 = vmatpush2.msra.mxu0 %v1260
    %5198 = vmatprep.subr.mxu0 0.0
    %5199 = vmatpush2.msra.mxu0 %v1259
    %5200 = vmatprep.subr.mxu0 0.0
    %5201 = vmatpush2.msra.mxu0 %v1258
    %5202 = vmatprep.subr.mxu0 0.0
    %5203 = vmatpush2.msra.mxu0 %v1257
    %5204 = vmatprep.subr.mxu0 0.0
    %5205 = vmatpush2.msra.mxu0 %v1256
    %5206 = vmatprep.subr.mxu0 0.0
    %5207 = vmatpush2.msra.mxu0 %v1255
    %5208 = vmatprep.subr.mxu0 0.0
    %5209 = vmatpush2.msra.mxu0 %v1254
    %5210 = vmatprep.subr.mxu0 0.0
    %5211 = vmatpush2.msra.mxu0 %v1253
    %5212 = vmatprep.subr.mxu0 0.0
    %5213 = vmatpush2.msra.mxu0 %v1252
    %5214 = vmatprep.subr.mxu0 0.0
    %5215 = vmatpush2.msra.mxu0 %v1251
    %5216 = vmatprep.subr.mxu0 0.0
    %5217 = vmatpush2.msra.mxu0 %v1250
    %5218 = vmatprep.subr.mxu0 0.0
    %5219 = vmatpush2.msra.mxu0 %v1249
    %5220 = vmatprep.subr.mxu0 0.0
    %5221 = vmatpush2.msra.mxu0 %v1248
    %5222 = vmatprep.subr.mxu0 0.0
    %5223 = vmatpush2.msra.mxu0 %v1247
    %5224 = vmatprep.mubr.f32.mxu0 %v2397
    %5225 = vmatmul.mubr.f32.gmra.mxu0 %v2396
    %v5226 = vpop.f32.mrf.mxu0
    %v5227 = vadd.f32 %v5157, %v5226
    %v5228 = vpop.f32.mrf.mxu0
    %5229 = vdwg.mxu0
    %5230 = vmatprep.subr.mxu0 0.0
    %5231 = vmatpush1.msra.mxu0 %v1278
    %5232 = vmatprep.subr.mxu0 0.0
    %5233 = vmatpush1.msra.mxu0 %v1277
    %5234 = vmatprep.subr.mxu0 0.0
    %5235 = vmatpush1.msra.mxu0 %v1276
    %5236 = vmatprep.subr.mxu0 0.0
    %5237 = vmatpush1.msra.mxu0 %v1275
    %5238 = vmatprep.subr.mxu0 0.0
    %5239 = vmatpush1.msra.mxu0 %v1274
    %5240 = vmatprep.subr.mxu0 0.0
    %5241 = vmatpush1.msra.mxu0 %v1273
    %5242 = vmatprep.subr.mxu0 0.0
    %5243 = vmatpush1.msra.mxu0 %v1272
    %5244 = vmatprep.subr.mxu0 0.0
    %5245 = vmatpush1.msra.mxu0 %v1271
    %5246 = vmatprep.subr.mxu0 0.0
    %5247 = vmatpush1.msra.mxu0 %v1270
    %5248 = vmatprep.subr.mxu0 0.0
    %5249 = vmatpush1.msra.mxu0 %v1269
    %5250 = vmatprep.subr.mxu0 0.0
    %5251 = vmatpush1.msra.mxu0 %v1268
    %5252 = vmatprep.subr.mxu0 0.0
    %5253 = vmatpush1.msra.mxu0 %v1267
    %5254 = vmatprep.subr.mxu0 0.0
    %5255 = vmatpush1.msra.mxu0 %v1266
    %5256 = vmatprep.subr.mxu0 0.0
    %5257 = vmatpush1.msra.mxu0 %v1265
    %5258 = vmatprep.subr.mxu0 0.0
    %5259 = vmatpush1.msra.mxu0 %v1264
    %5260 = vmatprep.subr.mxu0 0.0
    %5261 = vmatpush1.msra.mxu0 %v1263
    %5262 = vmatprep.subr.mxu0 0.0
    %5263 = vmatpush2.msra.mxu0 %v1294
    %5264 = vmatprep.subr.mxu0 0.0
    %5265 = vmatpush2.msra.mxu0 %v1293
    %5266 = vmatprep.subr.mxu0 0.0
    %5267 = vmatpush2.msra.mxu0 %v1292
    %5268 = vmatprep.subr.mxu0 0.0
    %5269 = vmatpush2.msra.mxu0 %v1291
    %5270 = vmatprep.subr.mxu0 0.0
    %5271 = vmatpush2.msra.mxu0 %v1290
    %5272 = vmatprep.subr.mxu0 0.0
    %5273 = vmatpush2.msra.mxu0 %v1289
    %5274 = vmatprep.subr.mxu0 0.0
    %5275 = vmatpush2.msra.mxu0 %v1288
    %5276 = vmatprep.subr.mxu0 0.0
    %5277 = vmatpush2.msra.mxu0 %v1287
    %5278 = vmatprep.subr.mxu0 0.0
    %5279 = vmatpush2.msra.mxu0 %v1286
    %5280 = vmatprep.subr.mxu0 0.0
    %5281 = vmatpush2.msra.mxu0 %v1285
    %5282 = vmatprep.subr.mxu0 0.0
    %5283 = vmatpush2.msra.mxu0 %v1284
    %5284 = vmatprep.subr.mxu0 0.0
    %5285 = vmatpush2.msra.mxu0 %v1283
    %5286 = vmatprep.subr.mxu0 0.0
    %5287 = vmatpush2.msra.mxu0 %v1282
    %5288 = vmatprep.subr.mxu0 0.0
    %5289 = vmatpush2.msra.mxu0 %v1281
    %5290 = vmatprep.subr.mxu0 0.0
    %5291 = vmatpush2.msra.mxu0 %v1280
    %5292 = vmatprep.subr.mxu0 0.0
    %5293 = vmatpush2.msra.mxu0 %v1279
    %5294 = vmatprep.mubr.f32.mxu0 %v2431
    %5295 = vmatmul.mubr.f32.gmra.mxu0 %v2430
    %v5296 = vpop.f32.mrf.mxu0
    %v5297 = vadd.f32 %v5227, %v5296
    %v5298 = vpop.f32.mrf.mxu0
    %5299 = vdwg.mxu0
    %5300 = vmatprep.subr.mxu0 0.0
    %5301 = vmatpush1.msra.mxu0 %v1310
    %5302 = vmatprep.subr.mxu0 0.0
    %5303 = vmatpush1.msra.mxu0 %v1309
    %5304 = vmatprep.subr.mxu0 0.0
    %5305 = vmatpush1.msra.mxu0 %v1308
    %5306 = vmatprep.subr.mxu0 0.0
    %5307 = vmatpush1.msra.mxu0 %v1307
    %5308 = vmatprep.subr.mxu0 0.0
    %5309 = vmatpush1.msra.mxu0 %v1306
    %5310 = vmatprep.subr.mxu0 0.0
    %5311 = vmatpush1.msra.mxu0 %v1305
    %5312 = vmatprep.subr.mxu0 0.0
    %5313 = vmatpush1.msra.mxu0 %v1304
    %5314 = vmatprep.subr.mxu0 0.0
    %5315 = vmatpush1.msra.mxu0 %v1303
    %5316 = vmatprep.subr.mxu0 0.0
    %5317 = vmatpush1.msra.mxu0 %v1302
    %5318 = vmatprep.subr.mxu0 0.0
    %5319 = vmatpush1.msra.mxu0 %v1301
    %5320 = vmatprep.subr.mxu0 0.0
    %5321 = vmatpush1.msra.mxu0 %v1300
    %5322 = vmatprep.subr.mxu0 0.0
    %5323 = vmatpush1.msra.mxu0 %v1299
    %5324 = vmatprep.subr.mxu0 0.0
    %5325 = vmatpush1.msra.mxu0 %v1298
    %5326 = vmatprep.subr.mxu0 0.0
    %5327 = vmatpush1.msra.mxu0 %v1297
    %5328 = vmatprep.subr.mxu0 0.0
    %5329 = vmatpush1.msra.mxu0 %v1296
    %5330 = vmatprep.subr.mxu0 0.0
    %5331 = vmatpush1.msra.mxu0 %v1295
    %5332 = vmatprep.subr.mxu0 0.0
    %5333 = vmatpush2.msra.mxu0 %v1326
    %5334 = vmatprep.subr.mxu0 0.0
    %5335 = vmatpush2.msra.mxu0 %v1325
    %5336 = vmatprep.subr.mxu0 0.0
    %5337 = vmatpush2.msra.mxu0 %v1324
    %5338 = vmatprep.subr.mxu0 0.0
    %5339 = vmatpush2.msra.mxu0 %v1323
    %5340 = vmatprep.subr.mxu0 0.0
    %5341 = vmatpush2.msra.mxu0 %v1322
    %5342 = vmatprep.subr.mxu0 0.0
    %5343 = vmatpush2.msra.mxu0 %v1321
    %5344 = vmatprep.subr.mxu0 0.0
    %5345 = vmatpush2.msra.mxu0 %v1320
    %5346 = vmatprep.subr.mxu0 0.0
    %5347 = vmatpush2.msra.mxu0 %v1319
    %5348 = vmatprep.subr.mxu0 0.0
    %5349 = vmatpush2.msra.mxu0 %v1318
    %5350 = vmatprep.subr.mxu0 0.0
    %5351 = vmatpush2.msra.mxu0 %v1317
    %5352 = vmatprep.subr.mxu0 0.0
    %5353 = vmatpush2.msra.mxu0 %v1316
    %5354 = vmatprep.subr.mxu0 0.0
    %5355 = vmatpush2.msra.mxu0 %v1315
    %5356 = vmatprep.subr.mxu0 0.0
    %5357 = vmatpush2.msra.mxu0 %v1314
    %5358 = vmatprep.subr.mxu0 0.0
    %5359 = vmatpush2.msra.mxu0 %v1313
    %5360 = vmatprep.subr.mxu0 0.0
    %5361 = vmatpush2.msra.mxu0 %v1312
    %5362 = vmatprep.subr.mxu0 0.0
    %5363 = vmatpush2.msra.mxu0 %v1311
    %5364 = vmatprep.mubr.f32.mxu0 %v2433
    %5365 = vmatmul.mubr.f32.gmra.mxu0 %v2432
    %v5366 = vpop.f32.mrf.mxu0
    %v5367 = vadd.f32 %v5297, %v5366
    %v5368 = vpop.f32.mrf.mxu0
    %5369 = vdwg.mxu0
    %5370 = vmatprep.subr.mxu0 0.0
    %5371 = vmatpush1.msra.mxu0 %v1342
    %5372 = vmatprep.subr.mxu0 0.0
    %5373 = vmatpush1.msra.mxu0 %v1341
    %5374 = vmatprep.subr.mxu0 0.0
    %5375 = vmatpush1.msra.mxu0 %v1340
    %5376 = vmatprep.subr.mxu0 0.0
    %5377 = vmatpush1.msra.mxu0 %v1339
    %5378 = vmatprep.subr.mxu0 0.0
    %5379 = vmatpush1.msra.mxu0 %v1338
    %5380 = vmatprep.subr.mxu0 0.0
    %5381 = vmatpush1.msra.mxu0 %v1337
    %5382 = vmatprep.subr.mxu0 0.0
    %5383 = vmatpush1.msra.mxu0 %v1336
    %5384 = vmatprep.subr.mxu0 0.0
    %5385 = vmatpush1.msra.mxu0 %v1335
    %5386 = vmatprep.subr.mxu0 0.0
    %5387 = vmatpush1.msra.mxu0 %v1334
    %5388 = vmatprep.subr.mxu0 0.0
    %5389 = vmatpush1.msra.mxu0 %v1333
    %5390 = vmatprep.subr.mxu0 0.0
    %5391 = vmatpush1.msra.mxu0 %v1332
    %5392 = vmatprep.subr.mxu0 0.0
    %5393 = vmatpush1.msra.mxu0 %v1331
    %5394 = vmatprep.subr.mxu0 0.0
    %5395 = vmatpush1.msra.mxu0 %v1330
    %5396 = vmatprep.subr.mxu0 0.0
    %5397 = vmatpush1.msra.mxu0 %v1329
    %5398 = vmatprep.subr.mxu0 0.0
    %5399 = vmatpush1.msra.mxu0 %v1328
    %5400 = vmatprep.subr.mxu0 0.0
    %5401 = vmatpush1.msra.mxu0 %v1327
    %5402 = vmatprep.subr.mxu0 0.0
    %5403 = vmatpush2.msra.mxu0 %v1358
    %5404 = vmatprep.subr.mxu0 0.0
    %5405 = vmatpush2.msra.mxu0 %v1357
    %5406 = vmatprep.subr.mxu0 0.0
    %5407 = vmatpush2.msra.mxu0 %v1356
    %5408 = vmatprep.subr.mxu0 0.0
    %5409 = vmatpush2.msra.mxu0 %v1355
    %5410 = vmatprep.subr.mxu0 0.0
    %5411 = vmatpush2.msra.mxu0 %v1354
    %5412 = vmatprep.subr.mxu0 0.0
    %5413 = vmatpush2.msra.mxu0 %v1353
    %5414 = vmatprep.subr.mxu0 0.0
    %5415 = vmatpush2.msra.mxu0 %v1352
    %5416 = vmatprep.subr.mxu0 0.0
    %5417 = vmatpush2.msra.mxu0 %v1351
    %5418 = vmatprep.subr.mxu0 0.0
    %5419 = vmatpush2.msra.mxu0 %v1350
    %5420 = vmatprep.subr.mxu0 0.0
    %5421 = vmatpush2.msra.mxu0 %v1349
    %5422 = vmatprep.subr.mxu0 0.0
    %5423 = vmatpush2.msra.mxu0 %v1348
    %5424 = vmatprep.subr.mxu0 0.0
    %5425 = vmatpush2.msra.mxu0 %v1347
    %5426 = vmatprep.subr.mxu0 0.0
    %5427 = vmatpush2.msra.mxu0 %v1346
    %5428 = vmatprep.subr.mxu0 0.0
    %5429 = vmatpush2.msra.mxu0 %v1345
    %5430 = vmatprep.subr.mxu0 0.0
    %5431 = vmatpush2.msra.mxu0 %v1344
    %5432 = vmatprep.subr.mxu0 0.0
    %5433 = vmatpush2.msra.mxu0 %v1343
    %5434 = vmatprep.mubr.f32.mxu0 %v2467
    %5435 = vmatmul.mubr.f32.gmra.mxu0 %v2466
    %v5436 = vpop.f32.mrf.mxu0
    %v5437 = vadd.f32 %v5367, %v5436
    %v5438 = vpop.f32.mrf.mxu0
    %5439 = vdwg.mxu0
    %5440 = vmatprep.subr.mxu0 0.0
    %5441 = vmatpush1.msra.mxu0 %v1374
    %5442 = vmatprep.subr.mxu0 0.0
    %5443 = vmatpush1.msra.mxu0 %v1373
    %5444 = vmatprep.subr.mxu0 0.0
    %5445 = vmatpush1.msra.mxu0 %v1372
    %5446 = vmatprep.subr.mxu0 0.0
    %5447 = vmatpush1.msra.mxu0 %v1371
    %5448 = vmatprep.subr.mxu0 0.0
    %5449 = vmatpush1.msra.mxu0 %v1370
    %5450 = vmatprep.subr.mxu0 0.0
    %5451 = vmatpush1.msra.mxu0 %v1369
    %5452 = vmatprep.subr.mxu0 0.0
    %5453 = vmatpush1.msra.mxu0 %v1368
    %5454 = vmatprep.subr.mxu0 0.0
    %5455 = vmatpush1.msra.mxu0 %v1367
    %5456 = vmatprep.subr.mxu0 0.0
    %5457 = vmatpush1.msra.mxu0 %v1366
    %5458 = vmatprep.subr.mxu0 0.0
    %5459 = vmatpush1.msra.mxu0 %v1365
    %5460 = vmatprep.subr.mxu0 0.0
    %5461 = vmatpush1.msra.mxu0 %v1364
    %5462 = vmatprep.subr.mxu0 0.0
    %5463 = vmatpush1.msra.mxu0 %v1363
    %5464 = vmatprep.subr.mxu0 0.0
    %5465 = vmatpush1.msra.mxu0 %v1362
    %5466 = vmatprep.subr.mxu0 0.0
    %5467 = vmatpush1.msra.mxu0 %v1361
    %5468 = vmatprep.subr.mxu0 0.0
    %5469 = vmatpush1.msra.mxu0 %v1360
    %5470 = vmatprep.subr.mxu0 0.0
    %5471 = vmatpush1.msra.mxu0 %v1359
    %5472 = vmatprep.subr.mxu0 0.0
    %5473 = vmatpush2.msra.mxu0 %v1390
    %5474 = vmatprep.subr.mxu0 0.0
    %5475 = vmatpush2.msra.mxu0 %v1389
    %5476 = vmatprep.subr.mxu0 0.0
    %5477 = vmatpush2.msra.mxu0 %v1388
    %5478 = vmatprep.subr.mxu0 0.0
    %5479 = vmatpush2.msra.mxu0 %v1387
    %5480 = vmatprep.subr.mxu0 0.0
    %5481 = vmatpush2.msra.mxu0 %v1386
    %5482 = vmatprep.subr.mxu0 0.0
    %5483 = vmatpush2.msra.mxu0 %v1385
    %5484 = vmatprep.subr.mxu0 0.0
    %5485 = vmatpush2.msra.mxu0 %v1384
    %5486 = vmatprep.subr.mxu0 0.0
    %5487 = vmatpush2.msra.mxu0 %v1383
    %5488 = vmatprep.subr.mxu0 0.0
    %5489 = vmatpush2.msra.mxu0 %v1382
    %5490 = vmatprep.subr.mxu0 0.0
    %5491 = vmatpush2.msra.mxu0 %v1381
    %5492 = vmatprep.subr.mxu0 0.0
    %5493 = vmatpush2.msra.mxu0 %v1380
    %5494 = vmatprep.subr.mxu0 0.0
    %5495 = vmatpush2.msra.mxu0 %v1379
    %5496 = vmatprep.subr.mxu0 0.0
    %5497 = vmatpush2.msra.mxu0 %v1378
    %5498 = vmatprep.subr.mxu0 0.0
    %5499 = vmatpush2.msra.mxu0 %v1377
    %5500 = vmatprep.subr.mxu0 0.0
    %5501 = vmatpush2.msra.mxu0 %v1376
    %5502 = vmatprep.subr.mxu0 0.0
    %5503 = vmatpush2.msra.mxu0 %v1375
    %5504 = vmatprep.mubr.f32.mxu0 %v2469
    %5505 = vmatmul.mubr.f32.gmra.mxu0 %v2468
    %v5506 = vpop.f32.mrf.mxu0
    %v5507 = vadd.f32 %v5437, %v5506
    %v5508 = vpop.f32.mrf.mxu0
    %5509 = vdwg.mxu0
    %5510 = vmatprep.subr.mxu0 0.0
    %5511 = vmatpush1.msra.mxu0 %v1406
    %5512 = vmatprep.subr.mxu0 0.0
    %5513 = vmatpush1.msra.mxu0 %v1405
    %5514 = vmatprep.subr.mxu0 0.0
    %5515 = vmatpush1.msra.mxu0 %v1404
    %5516 = vmatprep.subr.mxu0 0.0
    %5517 = vmatpush1.msra.mxu0 %v1403
    %5518 = vmatprep.subr.mxu0 0.0
    %5519 = vmatpush1.msra.mxu0 %v1402
    %5520 = vmatprep.subr.mxu0 0.0
    %5521 = vmatpush1.msra.mxu0 %v1401
    %5522 = vmatprep.subr.mxu0 0.0
    %5523 = vmatpush1.msra.mxu0 %v1400
    %5524 = vmatprep.subr.mxu0 0.0
    %5525 = vmatpush1.msra.mxu0 %v1399
    %5526 = vmatprep.subr.mxu0 0.0
    %5527 = vmatpush1.msra.mxu0 %v1398
    %5528 = vmatprep.subr.mxu0 0.0
    %5529 = vmatpush1.msra.mxu0 %v1397
    %5530 = vmatprep.subr.mxu0 0.0
    %5531 = vmatpush1.msra.mxu0 %v1396
    %5532 = vmatprep.subr.mxu0 0.0
    %5533 = vmatpush1.msra.mxu0 %v1395
    %5534 = vmatprep.subr.mxu0 0.0
    %5535 = vmatpush1.msra.mxu0 %v1394
    %5536 = vmatprep.subr.mxu0 0.0
    %5537 = vmatpush1.msra.mxu0 %v1393
    %5538 = vmatprep.subr.mxu0 0.0
    %5539 = vmatpush1.msra.mxu0 %v1392
    %5540 = vmatprep.subr.mxu0 0.0
    %5541 = vmatpush1.msra.mxu0 %v1391
    %5542 = vmatprep.subr.mxu0 0.0
    %5543 = vmatpush2.msra.mxu0 %v1422
    %5544 = vmatprep.subr.mxu0 0.0
    %5545 = vmatpush2.msra.mxu0 %v1421
    %5546 = vmatprep.subr.mxu0 0.0
    %5547 = vmatpush2.msra.mxu0 %v1420
    %5548 = vmatprep.subr.mxu0 0.0
    %5549 = vmatpush2.msra.mxu0 %v1419
    %5550 = vmatprep.subr.mxu0 0.0
    %5551 = vmatpush2.msra.mxu0 %v1418
    %5552 = vmatprep.subr.mxu0 0.0
    %5553 = vmatpush2.msra.mxu0 %v1417
    %5554 = vmatprep.subr.mxu0 0.0
    %5555 = vmatpush2.msra.mxu0 %v1416
    %5556 = vmatprep.subr.mxu0 0.0
    %5557 = vmatpush2.msra.mxu0 %v1415
    %5558 = vmatprep.subr.mxu0 0.0
    %5559 = vmatpush2.msra.mxu0 %v1414
    %5560 = vmatprep.subr.mxu0 0.0
    %5561 = vmatpush2.msra.mxu0 %v1413
    %5562 = vmatprep.subr.mxu0 0.0
    %5563 = vmatpush2.msra.mxu0 %v1412
    %5564 = vmatprep.subr.mxu0 0.0
    %5565 = vmatpush2.msra.mxu0 %v1411
    %5566 = vmatprep.subr.mxu0 0.0
    %5567 = vmatpush2.msra.mxu0 %v1410
    %5568 = vmatprep.subr.mxu0 0.0
    %5569 = vmatpush2.msra.mxu0 %v1409
    %5570 = vmatprep.subr.mxu0 0.0
    %5571 = vmatpush2.msra.mxu0 %v1408
    %5572 = vmatprep.subr.mxu0 0.0
    %5573 = vmatpush2.msra.mxu0 %v1407
    %5574 = vmatprep.mubr.f32.mxu0 %v2503
    %5575 = vmatmul.mubr.f32.gmra.mxu0 %v2502
    %v5576 = vpop.f32.mrf.mxu0
    %v5577 = vadd.f32 %v5507, %v5576
    %v5578 = vpop.f32.mrf.mxu0
    %5579 = vdwg.mxu0
    %5580 = vmatprep.subr.mxu0 0.0
    %5581 = vmatpush1.msra.mxu0 %v1438
    %5582 = vmatprep.subr.mxu0 0.0
    %5583 = vmatpush1.msra.mxu0 %v1437
    %5584 = vmatprep.subr.mxu0 0.0
    %5585 = vmatpush1.msra.mxu0 %v1436
    %5586 = vmatprep.subr.mxu0 0.0
    %5587 = vmatpush1.msra.mxu0 %v1435
    %5588 = vmatprep.subr.mxu0 0.0
    %5589 = vmatpush1.msra.mxu0 %v1434
    %5590 = vmatprep.subr.mxu0 0.0
    %5591 = vmatpush1.msra.mxu0 %v1433
    %5592 = vmatprep.subr.mxu0 0.0
    %5593 = vmatpush1.msra.mxu0 %v1432
    %5594 = vmatprep.subr.mxu0 0.0
    %5595 = vmatpush1.msra.mxu0 %v1431
    %5596 = vmatprep.subr.mxu0 0.0
    %5597 = vmatpush1.msra.mxu0 %v1430
    %5598 = vmatprep.subr.mxu0 0.0
    %5599 = vmatpush1.msra.mxu0 %v1429
    %5600 = vmatprep.subr.mxu0 0.0
    %5601 = vmatpush1.msra.mxu0 %v1428
    %5602 = vmatprep.subr.mxu0 0.0
    %5603 = vmatpush1.msra.mxu0 %v1427
    %5604 = vmatprep.subr.mxu0 0.0
    %5605 = vmatpush1.msra.mxu0 %v1426
    %5606 = vmatprep.subr.mxu0 0.0
    %5607 = vmatpush1.msra.mxu0 %v1425
    %5608 = vmatprep.subr.mxu0 0.0
    %5609 = vmatpush1.msra.mxu0 %v1424
    %5610 = vmatprep.subr.mxu0 0.0
    %5611 = vmatpush1.msra.mxu0 %v1423
    %5612 = vmatprep.subr.mxu0 0.0
    %5613 = vmatpush2.msra.mxu0 %v1454
    %5614 = vmatprep.subr.mxu0 0.0
    %5615 = vmatpush2.msra.mxu0 %v1453
    %5616 = vmatprep.subr.mxu0 0.0
    %5617 = vmatpush2.msra.mxu0 %v1452
    %5618 = vmatprep.subr.mxu0 0.0
    %5619 = vmatpush2.msra.mxu0 %v1451
    %5620 = vmatprep.subr.mxu0 0.0
    %5621 = vmatpush2.msra.mxu0 %v1450
    %5622 = vmatprep.subr.mxu0 0.0
    %5623 = vmatpush2.msra.mxu0 %v1449
    %5624 = vmatprep.subr.mxu0 0.0
    %5625 = vmatpush2.msra.mxu0 %v1448
    %5626 = vmatprep.subr.mxu0 0.0
    %5627 = vmatpush2.msra.mxu0 %v1447
    %5628 = vmatprep.subr.mxu0 0.0
    %5629 = vmatpush2.msra.mxu0 %v1446
    %5630 = vmatprep.subr.mxu0 0.0
    %5631 = vmatpush2.msra.mxu0 %v1445
    %5632 = vmatprep.subr.mxu0 0.0
    %5633 = vmatpush2.msra.mxu0 %v1444
    %5634 = vmatprep.subr.mxu0 0.0
    %5635 = vmatpush2.msra.mxu0 %v1443
    %5636 = vmatprep.subr.mxu0 0.0
    %5637 = vmatpush2.msra.mxu0 %v1442
    %5638 = vmatprep.subr.mxu0 0.0
    %5639 = vmatpush2.msra.mxu0 %v1441
    %5640 = vmatprep.subr.mxu0 0.0
    %5641 = vmatpush2.msra.mxu0 %v1440
    %5642 = vmatprep.subr.mxu0 0.0
    %5643 = vmatpush2.msra.mxu0 %v1439
    %5644 = vmatprep.mubr.f32.mxu0 %v2505
    %5645 = vmatmul.mubr.f32.gmra.mxu0 %v2504
    %v5646 = vpop.f32.mrf.mxu0
    %v5647 = vadd.f32 %v5577, %v5646
    %v5648 = vpop.f32.mrf.mxu0
    %5649 = vdwg.mxu0
    %5650 = vmatprep.subr.mxu0 0.0
    %5651 = vmatpush1.msra.mxu0 %v1470
    %5652 = vmatprep.subr.mxu0 0.0
    %5653 = vmatpush1.msra.mxu0 %v1469
    %5654 = vmatprep.subr.mxu0 0.0
    %5655 = vmatpush1.msra.mxu0 %v1468
    %5656 = vmatprep.subr.mxu0 0.0
    %5657 = vmatpush1.msra.mxu0 %v1467
    %5658 = vmatprep.subr.mxu0 0.0
    %5659 = vmatpush1.msra.mxu0 %v1466
    %5660 = vmatprep.subr.mxu0 0.0
    %5661 = vmatpush1.msra.mxu0 %v1465
    %5662 = vmatprep.subr.mxu0 0.0
    %5663 = vmatpush1.msra.mxu0 %v1464
    %5664 = vmatprep.subr.mxu0 0.0
    %5665 = vmatpush1.msra.mxu0 %v1463
    %5666 = vmatprep.subr.mxu0 0.0
    %5667 = vmatpush1.msra.mxu0 %v1462
    %5668 = vmatprep.subr.mxu0 0.0
    %5669 = vmatpush1.msra.mxu0 %v1461
    %5670 = vmatprep.subr.mxu0 0.0
    %5671 = vmatpush1.msra.mxu0 %v1460
    %5672 = vmatprep.subr.mxu0 0.0
    %5673 = vmatpush1.msra.mxu0 %v1459
    %5674 = vmatprep.subr.mxu0 0.0
    %5675 = vmatpush1.msra.mxu0 %v1458
    %5676 = vmatprep.subr.mxu0 0.0
    %5677 = vmatpush1.msra.mxu0 %v1457
    %5678 = vmatprep.subr.mxu0 0.0
    %5679 = vmatpush1.msra.mxu0 %v1456
    %5680 = vmatprep.subr.mxu0 0.0
    %5681 = vmatpush1.msra.mxu0 %v1455
    %5682 = vmatprep.subr.mxu0 0.0
    %5683 = vmatpush2.msra.mxu0 %v1486
    %5684 = vmatprep.subr.mxu0 0.0
    %5685 = vmatpush2.msra.mxu0 %v1485
    %5686 = vmatprep.subr.mxu0 0.0
    %5687 = vmatpush2.msra.mxu0 %v1484
    %5688 = vmatprep.subr.mxu0 0.0
    %5689 = vmatpush2.msra.mxu0 %v1483
    %5690 = vmatprep.subr.mxu0 0.0
    %5691 = vmatpush2.msra.mxu0 %v1482
    %5692 = vmatprep.subr.mxu0 0.0
    %5693 = vmatpush2.msra.mxu0 %v1481
    %5694 = vmatprep.subr.mxu0 0.0
    %5695 = vmatpush2.msra.mxu0 %v1480
    %5696 = vmatprep.subr.mxu0 0.0
    %5697 = vmatpush2.msra.mxu0 %v1479
    %5698 = vmatprep.subr.mxu0 0.0
    %5699 = vmatpush2.msra.mxu0 %v1478
    %5700 = vmatprep.subr.mxu0 0.0
    %5701 = vmatpush2.msra.mxu0 %v1477
    %5702 = vmatprep.subr.mxu0 0.0
    %5703 = vmatpush2.msra.mxu0 %v1476
    %5704 = vmatprep.subr.mxu0 0.0
    %5705 = vmatpush2.msra.mxu0 %v1475
    %5706 = vmatprep.subr.mxu0 0.0
    %5707 = vmatpush2.msra.mxu0 %v1474
    %5708 = vmatprep.subr.mxu0 0.0
    %5709 = vmatpush2.msra.mxu0 %v1473
    %5710 = vmatprep.subr.mxu0 0.0
    %5711 = vmatpush2.msra.mxu0 %v1472
    %5712 = vmatprep.subr.mxu0 0.0
    %5713 = vmatpush2.msra.mxu0 %v1471
    %5714 = vmatprep.mubr.f32.mxu0 %v2539
    %5715 = vmatmul.mubr.f32.gmra.mxu0 %v2538
    %v5716 = vpop.f32.mrf.mxu0
    %v5717 = vadd.f32 %v5647, %v5716
    %v5718 = vpop.f32.mrf.mxu0
    %5719 = vdwg.mxu0
    %5720 = vmatprep.subr.mxu0 0.0
    %5721 = vmatpush1.msra.mxu0 %v1502
    %5722 = vmatprep.subr.mxu0 0.0
    %5723 = vmatpush1.msra.mxu0 %v1501
    %5724 = vmatprep.subr.mxu0 0.0
    %5725 = vmatpush1.msra.mxu0 %v1500
    %5726 = vmatprep.subr.mxu0 0.0
    %5727 = vmatpush1.msra.mxu0 %v1499
    %5728 = vmatprep.subr.mxu0 0.0
    %5729 = vmatpush1.msra.mxu0 %v1498
    %5730 = vmatprep.subr.mxu0 0.0
    %5731 = vmatpush1.msra.mxu0 %v1497
    %5732 = vmatprep.subr.mxu0 0.0
    %5733 = vmatpush1.msra.mxu0 %v1496
    %5734 = vmatprep.subr.mxu0 0.0
    %5735 = vmatpush1.msra.mxu0 %v1495
    %5736 = vmatprep.subr.mxu0 0.0
    %5737 = vmatpush1.msra.mxu0 %v1494
    %5738 = vmatprep.subr.mxu0 0.0
    %5739 = vmatpush1.msra.mxu0 %v1493
    %5740 = vmatprep.subr.mxu0 0.0
    %5741 = vmatpush1.msra.mxu0 %v1492
    %5742 = vmatprep.subr.mxu0 0.0
    %5743 = vmatpush1.msra.mxu0 %v1491
    %5744 = vmatprep.subr.mxu0 0.0
    %5745 = vmatpush1.msra.mxu0 %v1490
    %5746 = vmatprep.subr.mxu0 0.0
    %5747 = vmatpush1.msra.mxu0 %v1489
    %5748 = vmatprep.subr.mxu0 0.0
    %5749 = vmatpush1.msra.mxu0 %v1488
    %5750 = vmatprep.subr.mxu0 0.0
    %5751 = vmatpush1.msra.mxu0 %v1487
    %5752 = vmatprep.subr.mxu0 0.0
    %5753 = vmatpush2.msra.mxu0 %v1518
    %5754 = vmatprep.subr.mxu0 0.0
    %5755 = vmatpush2.msra.mxu0 %v1517
    %5756 = vmatprep.subr.mxu0 0.0
    %5757 = vmatpush2.msra.mxu0 %v1516
    %5758 = vmatprep.subr.mxu0 0.0
    %5759 = vmatpush2.msra.mxu0 %v1515
    %5760 = vmatprep.subr.mxu0 0.0
    %5761 = vmatpush2.msra.mxu0 %v1514
    %5762 = vmatprep.subr.mxu0 0.0
    %5763 = vmatpush2.msra.mxu0 %v1513
    %5764 = vmatprep.subr.mxu0 0.0
    %5765 = vmatpush2.msra.mxu0 %v1512
    %5766 = vmatprep.subr.mxu0 0.0
    %5767 = vmatpush2.msra.mxu0 %v1511
    %5768 = vmatprep.subr.mxu0 0.0
    %5769 = vmatpush2.msra.mxu0 %v1510
    %5770 = vmatprep.subr.mxu0 0.0
    %5771 = vmatpush2.msra.mxu0 %v1509
    %5772 = vmatprep.subr.mxu0 0.0
    %5773 = vmatpush2.msra.mxu0 %v1508
    %5774 = vmatprep.subr.mxu0 0.0
    %5775 = vmatpush2.msra.mxu0 %v1507
    %5776 = vmatprep.subr.mxu0 0.0
    %5777 = vmatpush2.msra.mxu0 %v1506
    %5778 = vmatprep.subr.mxu0 0.0
    %5779 = vmatpush2.msra.mxu0 %v1505
    %5780 = vmatprep.subr.mxu0 0.0
    %5781 = vmatpush2.msra.mxu0 %v1504
    %5782 = vmatprep.subr.mxu0 0.0
    %5783 = vmatpush2.msra.mxu0 %v1503
    %5784 = vmatprep.mubr.f32.mxu0 %v2541
    %5785 = vmatmul.mubr.f32.gmra.mxu0 %v2540
    %v5786 = vpop.f32.mrf.mxu0
    %v5787 = vadd.f32 %v5717, %v5786
    %v5788 = vpop.f32.mrf.mxu0
    %5789 = vdwg.mxu0
    %5790 = vmatprep.subr.mxu0 0.0
    %5791 = vmatpush1.msra.mxu0 %v1534
    %5792 = vmatprep.subr.mxu0 0.0
    %5793 = vmatpush1.msra.mxu0 %v1533
    %5794 = vmatprep.subr.mxu0 0.0
    %5795 = vmatpush1.msra.mxu0 %v1532
    %5796 = vmatprep.subr.mxu0 0.0
    %5797 = vmatpush1.msra.mxu0 %v1531
    %5798 = vmatprep.subr.mxu0 0.0
    %5799 = vmatpush1.msra.mxu0 %v1530
    %5800 = vmatprep.subr.mxu0 0.0
    %5801 = vmatpush1.msra.mxu0 %v1529
    %5802 = vmatprep.subr.mxu0 0.0
    %5803 = vmatpush1.msra.mxu0 %v1528
    %5804 = vmatprep.subr.mxu0 0.0
    %5805 = vmatpush1.msra.mxu0 %v1527
    %5806 = vmatprep.subr.mxu0 0.0
    %5807 = vmatpush1.msra.mxu0 %v1526
    %5808 = vmatprep.subr.mxu0 0.0
    %5809 = vmatpush1.msra.mxu0 %v1525
    %5810 = vmatprep.subr.mxu0 0.0
    %5811 = vmatpush1.msra.mxu0 %v1524
    %5812 = vmatprep.subr.mxu0 0.0
    %5813 = vmatpush1.msra.mxu0 %v1523
    %5814 = vmatprep.subr.mxu0 0.0
    %5815 = vmatpush1.msra.mxu0 %v1522
    %5816 = vmatprep.subr.mxu0 0.0
    %5817 = vmatpush1.msra.mxu0 %v1521
    %5818 = vmatprep.subr.mxu0 0.0
    %5819 = vmatpush1.msra.mxu0 %v1520
    %5820 = vmatprep.subr.mxu0 0.0
    %5821 = vmatpush1.msra.mxu0 %v1519
    %5822 = vmatprep.subr.mxu0 0.0
    %5823 = vmatpush2.msra.mxu0 %v1550
    %5824 = vmatprep.subr.mxu0 0.0
    %5825 = vmatpush2.msra.mxu0 %v1549
    %5826 = vmatprep.subr.mxu0 0.0
    %5827 = vmatpush2.msra.mxu0 %v1548
    %5828 = vmatprep.subr.mxu0 0.0
    %5829 = vmatpush2.msra.mxu0 %v1547
    %5830 = vmatprep.subr.mxu0 0.0
    %5831 = vmatpush2.msra.mxu0 %v1546
    %5832 = vmatprep.subr.mxu0 0.0
    %5833 = vmatpush2.msra.mxu0 %v1545
    %5834 = vmatprep.subr.mxu0 0.0
    %5835 = vmatpush2.msra.mxu0 %v1544
    %5836 = vmatprep.subr.mxu0 0.0
    %5837 = vmatpush2.msra.mxu0 %v1543
    %5838 = vmatprep.subr.mxu0 0.0
    %5839 = vmatpush2.msra.mxu0 %v1542
    %5840 = vmatprep.subr.mxu0 0.0
    %5841 = vmatpush2.msra.mxu0 %v1541
    %5842 = vmatprep.subr.mxu0 0.0
    %5843 = vmatpush2.msra.mxu0 %v1540
    %5844 = vmatprep.subr.mxu0 0.0
    %5845 = vmatpush2.msra.mxu0 %v1539
    %5846 = vmatprep.subr.mxu0 0.0
    %5847 = vmatpush2.msra.mxu0 %v1538
    %5848 = vmatprep.subr.mxu0 0.0
    %5849 = vmatpush2.msra.mxu0 %v1537
    %5850 = vmatprep.subr.mxu0 0.0
    %5851 = vmatpush2.msra.mxu0 %v1536
    %5852 = vmatprep.subr.mxu0 0.0
    %5853 = vmatpush2.msra.mxu0 %v1535
    %5854 = vmatprep.mubr.f32.mxu0 %v2575
    %5855 = vmatmul.mubr.f32.gmra.mxu0 %v2574
    %v5856 = vpop.f32.mrf.mxu0
    %v5857 = vadd.f32 %v5787, %v5856
    %v5858 = vpop.f32.mrf.mxu0
    %5859 = vdwg.mxu0
    %5860 = vmatprep.subr.mxu0 0.0
    %5861 = vmatpush1.msra.mxu0 %v1566
    %5862 = vmatprep.subr.mxu0 0.0
    %5863 = vmatpush1.msra.mxu0 %v1565
    %5864 = vmatprep.subr.mxu0 0.0
    %5865 = vmatpush1.msra.mxu0 %v1564
    %5866 = vmatprep.subr.mxu0 0.0
    %5867 = vmatpush1.msra.mxu0 %v1563
    %5868 = vmatprep.subr.mxu0 0.0
    %5869 = vmatpush1.msra.mxu0 %v1562
    %5870 = vmatprep.subr.mxu0 0.0
    %5871 = vmatpush1.msra.mxu0 %v1561
    %5872 = vmatprep.subr.mxu0 0.0
    %5873 = vmatpush1.msra.mxu0 %v1560
    %5874 = vmatprep.subr.mxu0 0.0
    %5875 = vmatpush1.msra.mxu0 %v1559
    %5876 = vmatprep.subr.mxu0 0.0
    %5877 = vmatpush1.msra.mxu0 %v1558
    %5878 = vmatprep.subr.mxu0 0.0
    %5879 = vmatpush1.msra.mxu0 %v1557
    %5880 = vmatprep.subr.mxu0 0.0
    %5881 = vmatpush1.msra.mxu0 %v1556
    %5882 = vmatprep.subr.mxu0 0.0
    %5883 = vmatpush1.msra.mxu0 %v1555
    %5884 = vmatprep.subr.mxu0 0.0
    %5885 = vmatpush1.msra.mxu0 %v1554
    %5886 = vmatprep.subr.mxu0 0.0
    %5887 = vmatpush1.msra.mxu0 %v1553
    %5888 = vmatprep.subr.mxu0 0.0
    %5889 = vmatpush1.msra.mxu0 %v1552
    %5890 = vmatprep.subr.mxu0 0.0
    %5891 = vmatpush1.msra.mxu0 %v1551
    %5892 = vmatprep.subr.mxu0 0.0
    %5893 = vmatpush2.msra.mxu0 %v1582
    %5894 = vmatprep.subr.mxu0 0.0
    %5895 = vmatpush2.msra.mxu0 %v1581
    %5896 = vmatprep.subr.mxu0 0.0
    %5897 = vmatpush2.msra.mxu0 %v1580
    %5898 = vmatprep.subr.mxu0 0.0
    %5899 = vmatpush2.msra.mxu0 %v1579
    %5900 = vmatprep.subr.mxu0 0.0
    %5901 = vmatpush2.msra.mxu0 %v1578
    %5902 = vmatprep.subr.mxu0 0.0
    %5903 = vmatpush2.msra.mxu0 %v1577
    %5904 = vmatprep.subr.mxu0 0.0
    %5905 = vmatpush2.msra.mxu0 %v1576
    %5906 = vmatprep.subr.mxu0 0.0
    %5907 = vmatpush2.msra.mxu0 %v1575
    %5908 = vmatprep.subr.mxu0 0.0
    %5909 = vmatpush2.msra.mxu0 %v1574
    %5910 = vmatprep.subr.mxu0 0.0
    %5911 = vmatpush2.msra.mxu0 %v1573
    %5912 = vmatprep.subr.mxu0 0.0
    %5913 = vmatpush2.msra.mxu0 %v1572
    %5914 = vmatprep.subr.mxu0 0.0
    %5915 = vmatpush2.msra.mxu0 %v1571
    %5916 = vmatprep.subr.mxu0 0.0
    %5917 = vmatpush2.msra.mxu0 %v1570
    %5918 = vmatprep.subr.mxu0 0.0
    %5919 = vmatpush2.msra.mxu0 %v1569
    %5920 = vmatprep.subr.mxu0 0.0
    %5921 = vmatpush2.msra.mxu0 %v1568
    %5922 = vmatprep.subr.mxu0 0.0
    %5923 = vmatpush2.msra.mxu0 %v1567
    %5924 = vmatprep.mubr.f32.mxu0 %v2577
    %5925 = vmatmul.mubr.f32.gmra.mxu0 %v2576
    %v5926 = vpop.f32.mrf.mxu0
    %v5927 = vadd.f32 %v5857, %v5926
    %v5928 = vpop.f32.mrf.mxu0
    %5929 = vdwg.mxu0
    %5930 = vmatprep.subr.mxu0 0.0
    %5931 = vmatpush1.msra.mxu0 %v1598
    %5932 = vmatprep.subr.mxu0 0.0
    %5933 = vmatpush1.msra.mxu0 %v1597
    %5934 = vmatprep.subr.mxu0 0.0
    %5935 = vmatpush1.msra.mxu0 %v1596
    %5936 = vmatprep.subr.mxu0 0.0
    %5937 = vmatpush1.msra.mxu0 %v1595
    %5938 = vmatprep.subr.mxu0 0.0
    %5939 = vmatpush1.msra.mxu0 %v1594
    %5940 = vmatprep.subr.mxu0 0.0
    %5941 = vmatpush1.msra.mxu0 %v1593
    %5942 = vmatprep.subr.mxu0 0.0
    %5943 = vmatpush1.msra.mxu0 %v1592
    %5944 = vmatprep.subr.mxu0 0.0
    %5945 = vmatpush1.msra.mxu0 %v1591
    %5946 = vmatprep.subr.mxu0 0.0
    %5947 = vmatpush1.msra.mxu0 %v1590
    %5948 = vmatprep.subr.mxu0 0.0
    %5949 = vmatpush1.msra.mxu0 %v1589
    %5950 = vmatprep.subr.mxu0 0.0
    %5951 = vmatpush1.msra.mxu0 %v1588
    %5952 = vmatprep.subr.mxu0 0.0
    %5953 = vmatpush1.msra.mxu0 %v1587
    %5954 = vmatprep.subr.mxu0 0.0
    %5955 = vmatpush1.msra.mxu0 %v1586
    %5956 = vmatprep.subr.mxu0 0.0
    %5957 = vmatpush1.msra.mxu0 %v1585
    %5958 = vmatprep.subr.mxu0 0.0
    %5959 = vmatpush1.msra.mxu0 %v1584
    %5960 = vmatprep.subr.mxu0 0.0
    %5961 = vmatpush1.msra.mxu0 %v1583
    %5962 = vmatprep.subr.mxu0 0.0
    %5963 = vmatpush2.msra.mxu0 %v1614
    %5964 = vmatprep.subr.mxu0 0.0
    %5965 = vmatpush2.msra.mxu0 %v1613
    %5966 = vmatprep.subr.mxu0 0.0
    %5967 = vmatpush2.msra.mxu0 %v1612
    %5968 = vmatprep.subr.mxu0 0.0
    %5969 = vmatpush2.msra.mxu0 %v1611
    %5970 = vmatprep.subr.mxu0 0.0
    %5971 = vmatpush2.msra.mxu0 %v1610
    %5972 = vmatprep.subr.mxu0 0.0
    %5973 = vmatpush2.msra.mxu0 %v1609
    %5974 = vmatprep.subr.mxu0 0.0
    %5975 = vmatpush2.msra.mxu0 %v1608
    %5976 = vmatprep.subr.mxu0 0.0
    %5977 = vmatpush2.msra.mxu0 %v1607
    %5978 = vmatprep.subr.mxu0 0.0
    %5979 = vmatpush2.msra.mxu0 %v1606
    %5980 = vmatprep.subr.mxu0 0.0
    %5981 = vmatpush2.msra.mxu0 %v1605
    %5982 = vmatprep.subr.mxu0 0.0
    %5983 = vmatpush2.msra.mxu0 %v1604
    %5984 = vmatprep.subr.mxu0 0.0
    %5985 = vmatpush2.msra.mxu0 %v1603
    %5986 = vmatprep.subr.mxu0 0.0
    %5987 = vmatpush2.msra.mxu0 %v1602
    %5988 = vmatprep.subr.mxu0 0.0
    %5989 = vmatpush2.msra.mxu0 %v1601
    %5990 = vmatprep.subr.mxu0 0.0
    %5991 = vmatpush2.msra.mxu0 %v1600
    %5992 = vmatprep.subr.mxu0 0.0
    %5993 = vmatpush2.msra.mxu0 %v1599
    %5994 = vmatprep.mubr.f32.mxu0 %v2611
    %5995 = vmatmul.mubr.f32.gmra.mxu0 %v2610
    %v5996 = vpop.f32.mrf.mxu0
    %v5997 = vadd.f32 %v5927, %v5996
    %v5998 = vpop.f32.mrf.mxu0
    %5999 = vdwg.mxu0
    %6000 = vmatprep.subr.mxu0 0.0
    %6001 = vmatpush1.msra.mxu0 %v1630
    %6002 = vmatprep.subr.mxu0 0.0
    %6003 = vmatpush1.msra.mxu0 %v1629
    %6004 = vmatprep.subr.mxu0 0.0
    %6005 = vmatpush1.msra.mxu0 %v1628
    %6006 = vmatprep.subr.mxu0 0.0
    %6007 = vmatpush1.msra.mxu0 %v1627
    %6008 = vmatprep.subr.mxu0 0.0
    %6009 = vmatpush1.msra.mxu0 %v1626
    %6010 = vmatprep.subr.mxu0 0.0
    %6011 = vmatpush1.msra.mxu0 %v1625
    %6012 = vmatprep.subr.mxu0 0.0
    %6013 = vmatpush1.msra.mxu0 %v1624
    %6014 = vmatprep.subr.mxu0 0.0
    %6015 = vmatpush1.msra.mxu0 %v1623
    %6016 = vmatprep.subr.mxu0 0.0
    %6017 = vmatpush1.msra.mxu0 %v1622
    %6018 = vmatprep.subr.mxu0 0.0
    %6019 = vmatpush1.msra.mxu0 %v1621
    %6020 = vmatprep.subr.mxu0 0.0
    %6021 = vmatpush1.msra.mxu0 %v1620
    %6022 = vmatprep.subr.mxu0 0.0
    %6023 = vmatpush1.msra.mxu0 %v1619
    %6024 = vmatprep.subr.mxu0 0.0
    %6025 = vmatpush1.msra.mxu0 %v1618
    %6026 = vmatprep.subr.mxu0 0.0
    %6027 = vmatpush1.msra.mxu0 %v1617
    %6028 = vmatprep.subr.mxu0 0.0
    %6029 = vmatpush1.msra.mxu0 %v1616
    %6030 = vmatprep.subr.mxu0 0.0
    %6031 = vmatpush1.msra.mxu0 %v1615
    %6032 = vmatprep.subr.mxu0 0.0
    %6033 = vmatpush2.msra.mxu0 %v1646
    %6034 = vmatprep.subr.mxu0 0.0
    %6035 = vmatpush2.msra.mxu0 %v1645
    %6036 = vmatprep.subr.mxu0 0.0
    %6037 = vmatpush2.msra.mxu0 %v1644
    %6038 = vmatprep.subr.mxu0 0.0
    %6039 = vmatpush2.msra.mxu0 %v1643
    %6040 = vmatprep.subr.mxu0 0.0
    %6041 = vmatpush2.msra.mxu0 %v1642
    %6042 = vmatprep.subr.mxu0 0.0
    %6043 = vmatpush2.msra.mxu0 %v1641
    %6044 = vmatprep.subr.mxu0 0.0
    %6045 = vmatpush2.msra.mxu0 %v1640
    %6046 = vmatprep.subr.mxu0 0.0
    %6047 = vmatpush2.msra.mxu0 %v1639
    %6048 = vmatprep.subr.mxu0 0.0
    %6049 = vmatpush2.msra.mxu0 %v1638
    %6050 = vmatprep.subr.mxu0 0.0
    %6051 = vmatpush2.msra.mxu0 %v1637
    %6052 = vmatprep.subr.mxu0 0.0
    %6053 = vmatpush2.msra.mxu0 %v1636
    %6054 = vmatprep.subr.mxu0 0.0
    %6055 = vmatpush2.msra.mxu0 %v1635
    %6056 = vmatprep.subr.mxu0 0.0
    %6057 = vmatpush2.msra.mxu0 %v1634
    %6058 = vmatprep.subr.mxu0 0.0
    %6059 = vmatpush2.msra.mxu0 %v1633
    %6060 = vmatprep.subr.mxu0 0.0
    %6061 = vmatpush2.msra.mxu0 %v1632
    %6062 = vmatprep.subr.mxu0 0.0
    %6063 = vmatpush2.msra.mxu0 %v1631
    %6064 = vmatprep.mubr.f32.mxu0 %v2613
    %6065 = vmatmul.mubr.f32.gmra.mxu0 %v2612
    %v6066 = vpop.f32.mrf.mxu0
    %v6067 = vadd.f32 %v5997, %v6066
    %v6068 = vpop.f32.mrf.mxu0
    %6069 = vdwg.mxu0
    %vm6070 = vcmask 523264
    %6071 = vst.msk [vmem:[#allocation2] sm:$0xff] %vm6070, %v6067
    // Predicated region
    $region14: #{tpu_custom_call.1} parent=1 // pred_check
      _
    $region15: #{tpu_custom_call.1} parent=1 // pred_check_branch
      %6073 = sbr.rel (0) target = $region17
    $region16: #{tpu_custom_call.1} parent=1 // pred_region
      %s6075 = ssub.s32 128, 32
      %6076 = vsyncadd [#allocation3], %s6075
      %s6077 = sshll.u32 [#allocation2], 4
      %s6078 = int_to_ptr.vmem [resolvable:$true] %s6077
      %6083 = dma.vmem_to_hbm [thread:$0]  %s6078, 32, %s3, [#allocation3], 32, 32, 2
    $region17: #{tpu_custom_call.1} parent=1 // pred_fallthru
      _
    // Predicated region
    $region18: #{tpu_custom_call.1} parent=1 // pred_check
      _
    $region19: #{tpu_custom_call.1} parent=1 // pred_check_branch
      %6085 = sbr.rel (0) target = $region21
    $region20: #{tpu_custom_call.1} parent=1 // pred_region
      %6086 = dma.done [#allocation3], 128
    $region21: #{tpu_custom_call.1} parent=1 // pred_fallthru
      _
    %6087 = vsyncpa [#allocation3], 1

</llo_original>
